<compile_context>
chip_gen: v6e
topology: v6e:2x2x1
jax: 0.10.0
libtpu: 0.0.40
codegen_flags: <defaults>
</compile_context>

<pallas_src>
import functools
import math

import jax
import jax.numpy as jnp
import numpy as np
from jax.experimental import pallas as pl

MATMUL_DTYPE = jnp.float32   # set to jnp.bfloat16 on v6e/v7x for bf16 MXU operands


def _rel_attn_kernel(x_ref, wqkv_ref, bqkv_ref, bias_ref, wproj_ref, bproj_ref,
                     o_ref, *, num_heads, scale):
    rows, D = x_ref.shape            # rows = B_ * N, all resident in VMEM
    H = num_heads
    hd = D // H

    # ---- fused QKV projection, one MXU pass over every row ----
    x = x_ref[...].astype(MATMUL_DTYPE)
    qkv = jnp.dot(x, wqkv_ref[...].astype(MATMUL_DTYPE),
                  preferred_element_type=jnp.float32) + bqkv_ref[...]
    q = qkv[:, 0 * D:1 * D] * scale                      # (rows, D)
    k = qkv[:, 1 * D:2 * D]
    v = qkv[:, 2 * D:3 * D]
    wproj = wproj_ref[...].astype(MATMUL_DTYPE)

    # output accumulator, proj bias broadcast once (hoisted out of the head loop)
    y = jnp.zeros((rows, D), jnp.float32) + bproj_ref[...]

    for h in range(H):               # static unroll; each op covers ALL rows at once
        qh = q[:, h * hd:(h + 1) * hd].astype(MATMUL_DTYPE)
        kh = k[:, h * hd:(h + 1) * hd].astype(MATMUL_DTYPE)
        vh = v[:, h * hd:(h + 1) * hd].astype(MATMUL_DTYPE)

        # scores for every (row, row) pair; off-block entries are killed by the
        # -1e30 additive mask folded into bias_ref, so softmax stays per-sequence.
        s = jax.lax.dot_general(qh, kh, (((1,), (1,)), ((), ())),
                                preferred_element_type=jnp.float32)   # (rows, rows)
        s = s + bias_ref[h]
        s = s - jnp.max(s, axis=-1, keepdims=True)
        e = jnp.exp(s)
        p = e * pl.reciprocal(jnp.sum(e, axis=-1, keepdims=True), approx=True)

        oh = jnp.dot(p.astype(MATMUL_DTYPE), vh,
                     preferred_element_type=jnp.float32)              # (rows, hd)
        # distributed projection: concat_h(o_h) @ Wp == sum_h o_h @ Wp[h*hd:(h+1)*hd]
        y = y + jnp.dot(oh.astype(MATMUL_DTYPE), wproj[h * hd:(h + 1) * hd, :],
                        preferred_element_type=jnp.float32)

    o_ref[...] = y


def relative_attention(x, wqkv, bqkv, rel_pos, wproj, bproj, *, num_heads,
                       qk_scale=None):
    """Pallas forward of ReltiveAttention. x: [B_, N, D] -> [B_, N, D]."""
    B_, N, D = x.shape
    H = num_heads
    assert D % H == 0 and rel_pos.shape == (H, N, N)
    scale = qk_scale if qk_scale is not None else (D // H) ** (-0.5)
    rows = B_ * N

    # Host/XLA-side prep (cheap, outside the kernel): fold the learned
    # relative-position bias and the block-diagonal sequence mask into one
    # additive (H, rows, rows) tensor.
    blk = jnp.arange(rows, dtype=jnp.int32) // N
    on_block = blk[:, None] == blk[None, :]                     # (rows, rows)
    bias = jnp.where(on_block[None, :, :],
                     jnp.tile(rel_pos.astype(jnp.float32), (1, B_, B_)),
                     jnp.float32(-1e30))                        # (H, rows, rows)

    kernel = functools.partial(_rel_attn_kernel, num_heads=H, scale=scale)
    out = pl.pallas_call(
        kernel,
        out_shape=jax.ShapeDtypeStruct((rows, D), jnp.float32),
    )(x.reshape(rows, D).astype(jnp.float32), wqkv, bqkv, bias, wproj, bproj)
    return out.reshape(B_, N, D)


# ---------------- pure-JAX reference (mirrors the PyTorch forward) -------------
def reference_forward(x, wqkv, bqkv, rel_pos, wproj, bproj, *, num_heads,
                      qk_scale=None):
    B_, N, C = x.shape
    H = num_heads
    hd = C // H
    scale = qk_scale if qk_scale is not None else hd ** (-0.5)
    qkv = (x @ wqkv + bqkv).reshape(B_, N, 3, H, hd)
    qkv = jnp.transpose(qkv, (2, 0, 3, 1, 4))
    q, k, v = qkv[0] * scale, qkv[1], qkv[2]
    attn = jnp.einsum('bhqd,bhkd->bhqk', q, k) + rel_pos[None]
    attn = jax.nn.softmax(attn, axis=-1)
    o = jnp.einsum('bhqk,bhkd->bhqd', attn, v)
    o = jnp.transpose(o, (0, 2, 1, 3)).reshape(B_, N, C)
    return o @ wproj + bproj


if __name__ == "__main__":
    # ReltiveAttention(dim=32, num_view=4, num_heads=8); x: [B*J, N, C] = [16, 4, 32]
    batch, num_joint, num_view = 2, 8, 4
    dim, num_heads = 32, 8
    B_ = batch * num_joint

    key = jax.random.PRNGKey(0)
    ks = jax.random.split(key, 6)
    x = jax.random.normal(ks[0], (B_, num_view, dim), jnp.float32)
    wqkv = jax.random.normal(ks[1], (dim, 3 * dim), jnp.float32) / math.sqrt(dim)
    bqkv = 0.02 * jax.random.normal(ks[2], (1, 3 * dim), jnp.float32)
    rel_pos = 0.1 * jax.random.normal(ks[3], (num_heads, num_view, num_view),
                                      jnp.float32)
    wproj = jax.random.normal(ks[4], (dim, dim), jnp.float32) / math.sqrt(dim)
    bproj = 0.02 * jax.random.normal(ks[5], (1, dim), jnp.float32)

    out = relative_attention(x, wqkv, bqkv, rel_pos, wproj, bproj,
                             num_heads=num_heads)
    out = jax.block_until_ready(out)
    assert out.shape == (B_, num_view, dim), out.shape
    assert bool(jnp.all(jnp.isfinite(out)))

    ref = jax.block_until_ready(
        reference_forward(x, wqkv, bqkv, rel_pos, wproj, bproj,
                          num_heads=num_heads))
    np.testing.assert_allclose(np.asarray(out), np.asarray(ref),
                               rtol=2e-2, atol=2e-2)
    print("KERNEL_OK")
</pallas_src>

<mosaic_0001>
module attributes {stable_mosaic.version = 11 : i64} {
  func.func @_rel_attn_kernel(%arg0: memref<64x32xf32, #tpu.memory_space<vmem>>, %arg1: memref<32x96xf32, #tpu.memory_space<vmem>>, %arg2: memref<1x96xf32, #tpu.memory_space<vmem>>, %arg3: memref<8x64x64xf32, #tpu.memory_space<vmem>>, %arg4: memref<32x32xf32, #tpu.memory_space<vmem>>, %arg5: memref<1x32xf32, #tpu.memory_space<vmem>>, %arg6: memref<64x32xf32, #tpu.memory_space<vmem>>) attributes {dimension_semantics = [], scalar_prefetch = 0 : i64, scratch_operands = 0 : i64, tpu.core_type = #tpu.core_type<tc>} {
    %c0 = arith.constant 0 : index
    %c0_0 = arith.constant 0 : index
    %0 = vector.load %arg0[%c0, %c0_0] : memref<64x32xf32, #tpu.memory_space<vmem>>, vector<64x32xf32>
    %c0_1 = arith.constant 0 : index
    %c0_2 = arith.constant 0 : index
    %1 = vector.load %arg1[%c0_1, %c0_2] : memref<32x96xf32, #tpu.memory_space<vmem>>, vector<32x96xf32>
    %cst = arith.constant dense<0.000000e+00> : vector<64x96xf32>
    %2 = tpu.matmul %0, %1, %cst {dimension_numbers = #tpu.dot_dimension_numbers<[1], [0], [0], [1], [0, 0, 1, 1], [], []>} : vector<64x32xf32>, vector<32x96xf32>, vector<64x96xf32> -> vector<64x96xf32>
    %c0_3 = arith.constant 0 : index
    %c0_4 = arith.constant 0 : index
    %3 = vector.load %arg2[%c0_3, %c0_4] : memref<1x96xf32, #tpu.memory_space<vmem>>, vector<1x96xf32>
    %4 = vector.broadcast %3 : vector<1x96xf32> to vector<64x96xf32>
    %5 = arith.addf %2, %4 : vector<64x96xf32>
    %6 = vector.extract_strided_slice %5 {offsets = [0, 0], sizes = [64, 32], strides = [1, 1]} : vector<64x96xf32> to vector<64x32xf32>
    %cst_5 = arith.constant 5.000000e-01 : f32
    %7 = vector.broadcast %cst_5 : f32 to vector<64x32xf32>
    %8 = arith.mulf %6, %7 : vector<64x32xf32>
    %9 = vector.extract_strided_slice %5 {offsets = [0, 32], sizes = [64, 32], strides = [1, 1]} : vector<64x96xf32> to vector<64x32xf32>
    %10 = vector.extract_strided_slice %5 {offsets = [0, 64], sizes = [64, 32], strides = [1, 1]} : vector<64x96xf32> to vector<64x32xf32>
    %c0_6 = arith.constant 0 : index
    %c0_7 = arith.constant 0 : index
    %11 = vector.load %arg4[%c0_6, %c0_7] : memref<32x32xf32, #tpu.memory_space<vmem>>, vector<32x32xf32>
    %cst_8 = arith.constant 0.000000e+00 : f32
    %12 = vector.broadcast %cst_8 : f32 to vector<64x32xf32>
    %c0_9 = arith.constant 0 : index
    %c0_10 = arith.constant 0 : index
    %13 = vector.load %arg5[%c0_9, %c0_10] : memref<1x32xf32, #tpu.memory_space<vmem>>, vector<1x32xf32>
    %14 = vector.broadcast %13 : vector<1x32xf32> to vector<64x32xf32>
    %15 = arith.addf %12, %14 : vector<64x32xf32>
    %16 = vector.extract_strided_slice %8 {offsets = [0, 0], sizes = [64, 4], strides = [1, 1]} : vector<64x32xf32> to vector<64x4xf32>
    %17 = vector.extract_strided_slice %9 {offsets = [0, 0], sizes = [64, 4], strides = [1, 1]} : vector<64x32xf32> to vector<64x4xf32>
    %18 = vector.extract_strided_slice %10 {offsets = [0, 0], sizes = [64, 4], strides = [1, 1]} : vector<64x32xf32> to vector<64x4xf32>
    %cst_11 = arith.constant dense<0.000000e+00> : vector<64x64xf32>
    %19 = tpu.matmul %16, %17, %cst_11 {dimension_numbers = #tpu.dot_dimension_numbers<[1], [1], [0], [0], [0, 0, 1, 0], [], []>} : vector<64x4xf32>, vector<64x4xf32>, vector<64x64xf32> -> vector<64x64xf32>
    %c0_12 = arith.constant 0 : index
    %c0_13 = arith.constant 0 : index
    %c0_14 = arith.constant 0 : index
    %20 = vector.load %arg3[%c0_12, %c0_13, %c0_14] : memref<8x64x64xf32, #tpu.memory_space<vmem>>, vector<1x64x64xf32>
    %21 = vector.shape_cast %20 : vector<1x64x64xf32> to vector<64x64xf32>
    %22 = arith.addf %19, %21 : vector<64x64xf32>
    %cst_15 = arith.constant dense<0xFF800000> : vector<64xf32>
    %23 = vector.multi_reduction <maximumf>, %22, %cst_15 [1] : vector<64x64xf32> to vector<64xf32>
    %24 = vector.shape_cast %23 : vector<64xf32> to vector<64x1xf32>
    %25 = vector.broadcast %24 : vector<64x1xf32> to vector<64x64xf32>
    %26 = arith.subf %22, %25 : vector<64x64xf32>
    %27 = math.exp %26 : vector<64x64xf32>
    %cst_16 = arith.constant dense<0.000000e+00> : vector<64xf32>
    %28 = vector.multi_reduction <add>, %27, %cst_16 [1] : vector<64x64xf32> to vector<64xf32>
    %29 = vector.shape_cast %28 : vector<64xf32> to vector<64x1xf32>
    %30 = tpu.reciprocal %29 {approx = true} : vector<64x1xf32> -> vector<64x1xf32>
    %31 = vector.broadcast %30 : vector<64x1xf32> to vector<64x64xf32>
    %32 = arith.mulf %27, %31 : vector<64x64xf32>
    %cst_17 = arith.constant dense<0.000000e+00> : vector<64x4xf32>
    %33 = tpu.matmul %32, %18, %cst_17 {dimension_numbers = #tpu.dot_dimension_numbers<[1], [0], [0], [1], [0, 0, 1, 1], [], []>} : vector<64x64xf32>, vector<64x4xf32>, vector<64x4xf32> -> vector<64x4xf32>
    %34 = vector.extract_strided_slice %11 {offsets = [0, 0], sizes = [4, 32], strides = [1, 1]} : vector<32x32xf32> to vector<4x32xf32>
    %cst_18 = arith.constant dense<0.000000e+00> : vector<64x32xf32>
    %35 = tpu.matmul %33, %34, %cst_18 {dimension_numbers = #tpu.dot_dimension_numbers<[1], [0], [0], [1], [0, 0, 1, 1], [], []>} : vector<64x4xf32>, vector<4x32xf32>, vector<64x32xf32> -> vector<64x32xf32>
    %36 = arith.addf %15, %35 : vector<64x32xf32>
    %37 = vector.extract_strided_slice %8 {offsets = [0, 4], sizes = [64, 4], strides = [1, 1]} : vector<64x32xf32> to vector<64x4xf32>
    %38 = vector.extract_strided_slice %9 {offsets = [0, 4], sizes = [64, 4], strides = [1, 1]} : vector<64x32xf32> to vector<64x4xf32>
    %39 = vector.extract_strided_slice %10 {offsets = [0, 4], sizes = [64, 4], strides = [1, 1]} : vector<64x32xf32> to vector<64x4xf32>
    %cst_19 = arith.constant dense<0.000000e+00> : vector<64x64xf32>
    %40 = tpu.matmul %37, %38, %cst_19 {dimension_numbers = #tpu.dot_dimension_numbers<[1], [1], [0], [0], [0, 0, 1, 0], [], []>} : vector<64x4xf32>, vector<64x4xf32>, vector<64x64xf32> -> vector<64x64xf32>
    %c1 = arith.constant 1 : index
    %c0_20 = arith.constant 0 : index
    %c0_21 = arith.constant 0 : index
    %41 = vector.load %arg3[%c1, %c0_20, %c0_21] : memref<8x64x64xf32, #tpu.memory_space<vmem>>, vector<1x64x64xf32>
    %42 = vector.shape_cast %41 : vector<1x64x64xf32> to vector<64x64xf32>
    %43 = arith.addf %40, %42 : vector<64x64xf32>
    %cst_22 = arith.constant dense<0xFF800000> : vector<64xf32>
    %44 = vector.multi_reduction <maximumf>, %43, %cst_22 [1] : vector<64x64xf32> to vector<64xf32>
    %45 = vector.shape_cast %44 : vector<64xf32> to vector<64x1xf32>
    %46 = vector.broadcast %45 : vector<64x1xf32> to vector<64x64xf32>
    %47 = arith.subf %43, %46 : vector<64x64xf32>
    %48 = math.exp %47 : vector<64x64xf32>
    %cst_23 = arith.constant dense<0.000000e+00> : vector<64xf32>
    %49 = vector.multi_reduction <add>, %48, %cst_23 [1] : vector<64x64xf32> to vector<64xf32>
    %50 = vector.shape_cast %49 : vector<64xf32> to vector<64x1xf32>
    %51 = tpu.reciprocal %50 {approx = true} : vector<64x1xf32> -> vector<64x1xf32>
    %52 = vector.broadcast %51 : vector<64x1xf32> to vector<64x64xf32>
    %53 = arith.mulf %48, %52 : vector<64x64xf32>
    %cst_24 = arith.constant dense<0.000000e+00> : vector<64x4xf32>
    %54 = tpu.matmul %53, %39, %cst_24 {dimension_numbers = #tpu.dot_dimension_numbers<[1], [0], [0], [1], [0, 0, 1, 1], [], []>} : vector<64x64xf32>, vector<64x4xf32>, vector<64x4xf32> -> vector<64x4xf32>
    %55 = vector.extract_strided_slice %11 {offsets = [4, 0], sizes = [4, 32], strides = [1, 1]} : vector<32x32xf32> to vector<4x32xf32>
    %cst_25 = arith.constant dense<0.000000e+00> : vector<64x32xf32>
    %56 = tpu.matmul %54, %55, %cst_25 {dimension_numbers = #tpu.dot_dimension_numbers<[1], [0], [0], [1], [0, 0, 1, 1], [], []>} : vector<64x4xf32>, vector<4x32xf32>, vector<64x32xf32> -> vector<64x32xf32>
    %57 = arith.addf %36, %56 : vector<64x32xf32>
    %58 = vector.extract_strided_slice %8 {offsets = [0, 8], sizes = [64, 4], strides = [1, 1]} : vector<64x32xf32> to vector<64x4xf32>
    %59 = vector.extract_strided_slice %9 {offsets = [0, 8], sizes = [64, 4], strides = [1, 1]} : vector<64x32xf32> to vector<64x4xf32>
    %60 = vector.extract_strided_slice %10 {offsets = [0, 8], sizes = [64, 4], strides = [1, 1]} : vector<64x32xf32> to vector<64x4xf32>
    %cst_26 = arith.constant dense<0.000000e+00> : vector<64x64xf32>
    %61 = tpu.matmul %58, %59, %cst_26 {dimension_numbers = #tpu.dot_dimension_numbers<[1], [1], [0], [0], [0, 0, 1, 0], [], []>} : vector<64x4xf32>, vector<64x4xf32>, vector<64x64xf32> -> vector<64x64xf32>
    %c2 = arith.constant 2 : index
    %c0_27 = arith.constant 0 : index
    %c0_28 = arith.constant 0 : index
    %62 = vector.load %arg3[%c2, %c0_27, %c0_28] : memref<8x64x64xf32, #tpu.memory_space<vmem>>, vector<1x64x64xf32>
    %63 = vector.shape_cast %62 : vector<1x64x64xf32> to vector<64x64xf32>
    %64 = arith.addf %61, %63 : vector<64x64xf32>
    %cst_29 = arith.constant dense<0xFF800000> : vector<64xf32>
    %65 = vector.multi_reduction <maximumf>, %64, %cst_29 [1] : vector<64x64xf32> to vector<64xf32>
    %66 = vector.shape_cast %65 : vector<64xf32> to vector<64x1xf32>
    %67 = vector.broadcast %66 : vector<64x1xf32> to vector<64x64xf32>
    %68 = arith.subf %64, %67 : vector<64x64xf32>
    %69 = math.exp %68 : vector<64x64xf32>
    %cst_30 = arith.constant dense<0.000000e+00> : vector<64xf32>
    %70 = vector.multi_reduction <add>, %69, %cst_30 [1] : vector<64x64xf32> to vector<64xf32>
    %71 = vector.shape_cast %70 : vector<64xf32> to vector<64x1xf32>
    %72 = tpu.reciprocal %71 {approx = true} : vector<64x1xf32> -> vector<64x1xf32>
    %73 = vector.broadcast %72 : vector<64x1xf32> to vector<64x64xf32>
    %74 = arith.mulf %69, %73 : vector<64x64xf32>
    %cst_31 = arith.constant dense<0.000000e+00> : vector<64x4xf32>
    %75 = tpu.matmul %74, %60, %cst_31 {dimension_numbers = #tpu.dot_dimension_numbers<[1], [0], [0], [1], [0, 0, 1, 1], [], []>} : vector<64x64xf32>, vector<64x4xf32>, vector<64x4xf32> -> vector<64x4xf32>
    %76 = vector.extract_strided_slice %11 {offsets = [8, 0], sizes = [4, 32], strides = [1, 1]} : vector<32x32xf32> to vector<4x32xf32>
    %cst_32 = arith.constant dense<0.000000e+00> : vector<64x32xf32>
    %77 = tpu.matmul %75, %76, %cst_32 {dimension_numbers = #tpu.dot_dimension_numbers<[1], [0], [0], [1], [0, 0, 1, 1], [], []>} : vector<64x4xf32>, vector<4x32xf32>, vector<64x32xf32> -> vector<64x32xf32>
    %78 = arith.addf %57, %77 : vector<64x32xf32>
    %79 = vector.extract_strided_slice %8 {offsets = [0, 12], sizes = [64, 4], strides = [1, 1]} : vector<64x32xf32> to vector<64x4xf32>
    %80 = vector.extract_strided_slice %9 {offsets = [0, 12], sizes = [64, 4], strides = [1, 1]} : vector<64x32xf32> to vector<64x4xf32>
    %81 = vector.extract_strided_slice %10 {offsets = [0, 12], sizes = [64, 4], strides = [1, 1]} : vector<64x32xf32> to vector<64x4xf32>
    %cst_33 = arith.constant dense<0.000000e+00> : vector<64x64xf32>
    %82 = tpu.matmul %79, %80, %cst_33 {dimension_numbers = #tpu.dot_dimension_numbers<[1], [1], [0], [0], [0, 0, 1, 0], [], []>} : vector<64x4xf32>, vector<64x4xf32>, vector<64x64xf32> -> vector<64x64xf32>
    %c3 = arith.constant 3 : index
    %c0_34 = arith.constant 0 : index
    %c0_35 = arith.constant 0 : index
    %83 = vector.load %arg3[%c3, %c0_34, %c0_35] : memref<8x64x64xf32, #tpu.memory_space<vmem>>, vector<1x64x64xf32>
    %84 = vector.shape_cast %83 : vector<1x64x64xf32> to vector<64x64xf32>
    %85 = arith.addf %82, %84 : vector<64x64xf32>
    %cst_36 = arith.constant dense<0xFF800000> : vector<64xf32>
    %86 = vector.multi_reduction <maximumf>, %85, %cst_36 [1] : vector<64x64xf32> to vector<64xf32>
    %87 = vector.shape_cast %86 : vector<64xf32> to vector<64x1xf32>
    %88 = vector.broadcast %87 : vector<64x1xf32> to vector<64x64xf32>
    %89 = arith.subf %85, %88 : vector<64x64xf32>
    %90 = math.exp %89 : vector<64x64xf32>
    %cst_37 = arith.constant dense<0.000000e+00> : vector<64xf32>
    %91 = vector.multi_reduction <add>, %90, %cst_37 [1] : vector<64x64xf32> to vector<64xf32>
    %92 = vector.shape_cast %91 : vector<64xf32> to vector<64x1xf32>
    %93 = tpu.reciprocal %92 {approx = true} : vector<64x1xf32> -> vector<64x1xf32>
    %94 = vector.broadcast %93 : vector<64x1xf32> to vector<64x64xf32>
    %95 = arith.mulf %90, %94 : vector<64x64xf32>
    %cst_38 = arith.constant dense<0.000000e+00> : vector<64x4xf32>
    %96 = tpu.matmul %95, %81, %cst_38 {dimension_numbers = #tpu.dot_dimension_numbers<[1], [0], [0], [1], [0, 0, 1, 1], [], []>} : vector<64x64xf32>, vector<64x4xf32>, vector<64x4xf32> -> vector<64x4xf32>
    %97 = vector.extract_strided_slice %11 {offsets = [12, 0], sizes = [4, 32], strides = [1, 1]} : vector<32x32xf32> to vector<4x32xf32>
    %cst_39 = arith.constant dense<0.000000e+00> : vector<64x32xf32>
    %98 = tpu.matmul %96, %97, %cst_39 {dimension_numbers = #tpu.dot_dimension_numbers<[1], [0], [0], [1], [0, 0, 1, 1], [], []>} : vector<64x4xf32>, vector<4x32xf32>, vector<64x32xf32> -> vector<64x32xf32>
    %99 = arith.addf %78, %98 : vector<64x32xf32>
    %100 = vector.extract_strided_slice %8 {offsets = [0, 16], sizes = [64, 4], strides = [1, 1]} : vector<64x32xf32> to vector<64x4xf32>
    %101 = vector.extract_strided_slice %9 {offsets = [0, 16], sizes = [64, 4], strides = [1, 1]} : vector<64x32xf32> to vector<64x4xf32>
    %102 = vector.extract_strided_slice %10 {offsets = [0, 16], sizes = [64, 4], strides = [1, 1]} : vector<64x32xf32> to vector<64x4xf32>
    %cst_40 = arith.constant dense<0.000000e+00> : vector<64x64xf32>
    %103 = tpu.matmul %100, %101, %cst_40 {dimension_numbers = #tpu.dot_dimension_numbers<[1], [1], [0], [0], [0, 0, 1, 0], [], []>} : vector<64x4xf32>, vector<64x4xf32>, vector<64x64xf32> -> vector<64x64xf32>
    %c4 = arith.constant 4 : index
    %c0_41 = arith.constant 0 : index
    %c0_42 = arith.constant 0 : index
    %104 = vector.load %arg3[%c4, %c0_41, %c0_42] : memref<8x64x64xf32, #tpu.memory_space<vmem>>, vector<1x64x64xf32>
    %105 = vector.shape_cast %104 : vector<1x64x64xf32> to vector<64x64xf32>
    %106 = arith.addf %103, %105 : vector<64x64xf32>
    %cst_43 = arith.constant dense<0xFF800000> : vector<64xf32>
    %107 = vector.multi_reduction <maximumf>, %106, %cst_43 [1] : vector<64x64xf32> to vector<64xf32>
    %108 = vector.shape_cast %107 : vector<64xf32> to vector<64x1xf32>
    %109 = vector.broadcast %108 : vector<64x1xf32> to vector<64x64xf32>
    %110 = arith.subf %106, %109 : vector<64x64xf32>
    %111 = math.exp %110 : vector<64x64xf32>
    %cst_44 = arith.constant dense<0.000000e+00> : vector<64xf32>
    %112 = vector.multi_reduction <add>, %111, %cst_44 [1] : vector<64x64xf32> to vector<64xf32>
    %113 = vector.shape_cast %112 : vector<64xf32> to vector<64x1xf32>
    %114 = tpu.reciprocal %113 {approx = true} : vector<64x1xf32> -> vector<64x1xf32>
    %115 = vector.broadcast %114 : vector<64x1xf32> to vector<64x64xf32>
    %116 = arith.mulf %111, %115 : vector<64x64xf32>
    %cst_45 = arith.constant dense<0.000000e+00> : vector<64x4xf32>
    %117 = tpu.matmul %116, %102, %cst_45 {dimension_numbers = #tpu.dot_dimension_numbers<[1], [0], [0], [1], [0, 0, 1, 1], [], []>} : vector<64x64xf32>, vector<64x4xf32>, vector<64x4xf32> -> vector<64x4xf32>
    %118 = vector.extract_strided_slice %11 {offsets = [16, 0], sizes = [4, 32], strides = [1, 1]} : vector<32x32xf32> to vector<4x32xf32>
    %cst_46 = arith.constant dense<0.000000e+00> : vector<64x32xf32>
    %119 = tpu.matmul %117, %118, %cst_46 {dimension_numbers = #tpu.dot_dimension_numbers<[1], [0], [0], [1], [0, 0, 1, 1], [], []>} : vector<64x4xf32>, vector<4x32xf32>, vector<64x32xf32> -> vector<64x32xf32>
    %120 = arith.addf %99, %119 : vector<64x32xf32>
    %121 = vector.extract_strided_slice %8 {offsets = [0, 20], sizes = [64, 4], strides = [1, 1]} : vector<64x32xf32> to vector<64x4xf32>
    %122 = vector.extract_strided_slice %9 {offsets = [0, 20], sizes = [64, 4], strides = [1, 1]} : vector<64x32xf32> to vector<64x4xf32>
    %123 = vector.extract_strided_slice %10 {offsets = [0, 20], sizes = [64, 4], strides = [1, 1]} : vector<64x32xf32> to vector<64x4xf32>
    %cst_47 = arith.constant dense<0.000000e+00> : vector<64x64xf32>
    %124 = tpu.matmul %121, %122, %cst_47 {dimension_numbers = #tpu.dot_dimension_numbers<[1], [1], [0], [0], [0, 0, 1, 0], [], []>} : vector<64x4xf32>, vector<64x4xf32>, vector<64x64xf32> -> vector<64x64xf32>
    %c5 = arith.constant 5 : index
    %c0_48 = arith.constant 0 : index
    %c0_49 = arith.constant 0 : index
    %125 = vector.load %arg3[%c5, %c0_48, %c0_49] : memref<8x64x64xf32, #tpu.memory_space<vmem>>, vector<1x64x64xf32>
    %126 = vector.shape_cast %125 : vector<1x64x64xf32> to vector<64x64xf32>
    %127 = arith.addf %124, %126 : vector<64x64xf32>
    %cst_50 = arith.constant dense<0xFF800000> : vector<64xf32>
    %128 = vector.multi_reduction <maximumf>, %127, %cst_50 [1] : vector<64x64xf32> to vector<64xf32>
    %129 = vector.shape_cast %128 : vector<64xf32> to vector<64x1xf32>
    %130 = vector.broadcast %129 : vector<64x1xf32> to vector<64x64xf32>
    %131 = arith.subf %127, %130 : vector<64x64xf32>
    %132 = math.exp %131 : vector<64x64xf32>
    %cst_51 = arith.constant dense<0.000000e+00> : vector<64xf32>
    %133 = vector.multi_reduction <add>, %132, %cst_51 [1] : vector<64x64xf32> to vector<64xf32>
    %134 = vector.shape_cast %133 : vector<64xf32> to vector<64x1xf32>
    %135 = tpu.reciprocal %134 {approx = true} : vector<64x1xf32> -> vector<64x1xf32>
    %136 = vector.broadcast %135 : vector<64x1xf32> to vector<64x64xf32>
    %137 = arith.mulf %132, %136 : vector<64x64xf32>
    %cst_52 = arith.constant dense<0.000000e+00> : vector<64x4xf32>
    %138 = tpu.matmul %137, %123, %cst_52 {dimension_numbers = #tpu.dot_dimension_numbers<[1], [0], [0], [1], [0, 0, 1, 1], [], []>} : vector<64x64xf32>, vector<64x4xf32>, vector<64x4xf32> -> vector<64x4xf32>
    %139 = vector.extract_strided_slice %11 {offsets = [20, 0], sizes = [4, 32], strides = [1, 1]} : vector<32x32xf32> to vector<4x32xf32>
    %cst_53 = arith.constant dense<0.000000e+00> : vector<64x32xf32>
    %140 = tpu.matmul %138, %139, %cst_53 {dimension_numbers = #tpu.dot_dimension_numbers<[1], [0], [0], [1], [0, 0, 1, 1], [], []>} : vector<64x4xf32>, vector<4x32xf32>, vector<64x32xf32> -> vector<64x32xf32>
    %141 = arith.addf %120, %140 : vector<64x32xf32>
    %142 = vector.extract_strided_slice %8 {offsets = [0, 24], sizes = [64, 4], strides = [1, 1]} : vector<64x32xf32> to vector<64x4xf32>
    %143 = vector.extract_strided_slice %9 {offsets = [0, 24], sizes = [64, 4], strides = [1, 1]} : vector<64x32xf32> to vector<64x4xf32>
    %144 = vector.extract_strided_slice %10 {offsets = [0, 24], sizes = [64, 4], strides = [1, 1]} : vector<64x32xf32> to vector<64x4xf32>
    %cst_54 = arith.constant dense<0.000000e+00> : vector<64x64xf32>
    %145 = tpu.matmul %142, %143, %cst_54 {dimension_numbers = #tpu.dot_dimension_numbers<[1], [1], [0], [0], [0, 0, 1, 0], [], []>} : vector<64x4xf32>, vector<64x4xf32>, vector<64x64xf32> -> vector<64x64xf32>
    %c6 = arith.constant 6 : index
    %c0_55 = arith.constant 0 : index
    %c0_56 = arith.constant 0 : index
    %146 = vector.load %arg3[%c6, %c0_55, %c0_56] : memref<8x64x64xf32, #tpu.memory_space<vmem>>, vector<1x64x64xf32>
    %147 = vector.shape_cast %146 : vector<1x64x64xf32> to vector<64x64xf32>
    %148 = arith.addf %145, %147 : vector<64x64xf32>
    %cst_57 = arith.constant dense<0xFF800000> : vector<64xf32>
    %149 = vector.multi_reduction <maximumf>, %148, %cst_57 [1] : vector<64x64xf32> to vector<64xf32>
    %150 = vector.shape_cast %149 : vector<64xf32> to vector<64x1xf32>
    %151 = vector.broadcast %150 : vector<64x1xf32> to vector<64x64xf32>
    %152 = arith.subf %148, %151 : vector<64x64xf32>
    %153 = math.exp %152 : vector<64x64xf32>
    %cst_58 = arith.constant dense<0.000000e+00> : vector<64xf32>
    %154 = vector.multi_reduction <add>, %153, %cst_58 [1] : vector<64x64xf32> to vector<64xf32>
    %155 = vector.shape_cast %154 : vector<64xf32> to vector<64x1xf32>
    %156 = tpu.reciprocal %155 {approx = true} : vector<64x1xf32> -> vector<64x1xf32>
    %157 = vector.broadcast %156 : vector<64x1xf32> to vector<64x64xf32>
    %158 = arith.mulf %153, %157 : vector<64x64xf32>
    %cst_59 = arith.constant dense<0.000000e+00> : vector<64x4xf32>
    %159 = tpu.matmul %158, %144, %cst_59 {dimension_numbers = #tpu.dot_dimension_numbers<[1], [0], [0], [1], [0, 0, 1, 1], [], []>} : vector<64x64xf32>, vector<64x4xf32>, vector<64x4xf32> -> vector<64x4xf32>
    %160 = vector.extract_strided_slice %11 {offsets = [24, 0], sizes = [4, 32], strides = [1, 1]} : vector<32x32xf32> to vector<4x32xf32>
    %cst_60 = arith.constant dense<0.000000e+00> : vector<64x32xf32>
    %161 = tpu.matmul %159, %160, %cst_60 {dimension_numbers = #tpu.dot_dimension_numbers<[1], [0], [0], [1], [0, 0, 1, 1], [], []>} : vector<64x4xf32>, vector<4x32xf32>, vector<64x32xf32> -> vector<64x32xf32>
    %162 = arith.addf %141, %161 : vector<64x32xf32>
    %163 = vector.extract_strided_slice %8 {offsets = [0, 28], sizes = [64, 4], strides = [1, 1]} : vector<64x32xf32> to vector<64x4xf32>
    %164 = vector.extract_strided_slice %9 {offsets = [0, 28], sizes = [64, 4], strides = [1, 1]} : vector<64x32xf32> to vector<64x4xf32>
    %165 = vector.extract_strided_slice %10 {offsets = [0, 28], sizes = [64, 4], strides = [1, 1]} : vector<64x32xf32> to vector<64x4xf32>
    %cst_61 = arith.constant dense<0.000000e+00> : vector<64x64xf32>
    %166 = tpu.matmul %163, %164, %cst_61 {dimension_numbers = #tpu.dot_dimension_numbers<[1], [1], [0], [0], [0, 0, 1, 0], [], []>} : vector<64x4xf32>, vector<64x4xf32>, vector<64x64xf32> -> vector<64x64xf32>
    %c7 = arith.constant 7 : index
    %c0_62 = arith.constant 0 : index
    %c0_63 = arith.constant 0 : index
    %167 = vector.load %arg3[%c7, %c0_62, %c0_63] : memref<8x64x64xf32, #tpu.memory_space<vmem>>, vector<1x64x64xf32>
    %168 = vector.shape_cast %167 : vector<1x64x64xf32> to vector<64x64xf32>
    %169 = arith.addf %166, %168 : vector<64x64xf32>
    %cst_64 = arith.constant dense<0xFF800000> : vector<64xf32>
    %170 = vector.multi_reduction <maximumf>, %169, %cst_64 [1] : vector<64x64xf32> to vector<64xf32>
    %171 = vector.shape_cast %170 : vector<64xf32> to vector<64x1xf32>
    %172 = vector.broadcast %171 : vector<64x1xf32> to vector<64x64xf32>
    %173 = arith.subf %169, %172 : vector<64x64xf32>
    %174 = math.exp %173 : vector<64x64xf32>
    %cst_65 = arith.constant dense<0.000000e+00> : vector<64xf32>
    %175 = vector.multi_reduction <add>, %174, %cst_65 [1] : vector<64x64xf32> to vector<64xf32>
    %176 = vector.shape_cast %175 : vector<64xf32> to vector<64x1xf32>
    %177 = tpu.reciprocal %176 {approx = true} : vector<64x1xf32> -> vector<64x1xf32>
    %178 = vector.broadcast %177 : vector<64x1xf32> to vector<64x64xf32>
    %179 = arith.mulf %174, %178 : vector<64x64xf32>
    %cst_66 = arith.constant dense<0.000000e+00> : vector<64x4xf32>
    %180 = tpu.matmul %179, %165, %cst_66 {dimension_numbers = #tpu.dot_dimension_numbers<[1], [0], [0], [1], [0, 0, 1, 1], [], []>} : vector<64x64xf32>, vector<64x4xf32>, vector<64x4xf32> -> vector<64x4xf32>
    %181 = vector.extract_strided_slice %11 {offsets = [28, 0], sizes = [4, 32], strides = [1, 1]} : vector<32x32xf32> to vector<4x32xf32>
    %cst_67 = arith.constant dense<0.000000e+00> : vector<64x32xf32>
    %182 = tpu.matmul %180, %181, %cst_67 {dimension_numbers = #tpu.dot_dimension_numbers<[1], [0], [0], [1], [0, 0, 1, 1], [], []>} : vector<64x4xf32>, vector<4x32xf32>, vector<64x32xf32> -> vector<64x32xf32>
    %183 = arith.addf %162, %182 : vector<64x32xf32>
    %c0_68 = arith.constant 0 : index
    %c0_69 = arith.constant 0 : index
    %184 = vector.load %arg6[%c0_68, %c0_69] : memref<64x32xf32, #tpu.memory_space<vmem>>, vector<64x32xf32>
    tpu.vector_store %arg6[%c0_68, %c0_69], %183 {strides = array<i32>} : memref<64x32xf32, #tpu.memory_space<vmem>>, vector<64x32xf32>,
    return
  }
}

</mosaic_0001>

<llo_original>
// kernel: tpu_custom_call.1
$region0: #{tpu_custom_call.1}
  #allocation0 [shape = 'u32[]', space=smem, size = 0x4, offset = 0x4, fixed_abs, tag = 'smem constant byte address 0x4 - core index']
  #allocation1 [shape = 'u32[144,128]{1,0:T(1,128)}', space=vmem, size = 0x12000, scoped, tag = 'internal scratch']
  %s0 = inlined_call_operand.vmem [shape: f32[64,32], index: 0, kind: input, shape index: {}]
  %s1 = inlined_call_operand.vmem [shape: f32[32,96], index: 1, kind: input, shape index: {}]
  %s2 = inlined_call_operand.vmem [shape: f32[1,96], index: 2, kind: input, shape index: {}]
  %s3 = inlined_call_operand.hbm [shape: f32[8,64,64], index: 3, kind: input, shape index: {}]
  %s4 = inlined_call_operand.vmem [shape: f32[32,32], index: 4, kind: input, shape index: {}]
  %s5 = inlined_call_operand.vmem [shape: f32[1,32], index: 5, kind: input, shape index: {}]
  %s6 = inlined_call_operand.vmem [shape: f32[64,32], index: 6, kind: output, shape index: {}]
  %s7 = sld [smem:[#allocation0]]
  $region38: #{tpu_custom_call.1} parent=0
    _
  %s9 = ssub.s32 1, %s7
  %s10 = scalar_select 0, %s9, %s7
  $region1: #{tpu_custom_call.1} parent=0
    #allocation2 [shape = 'u8[262144]{0}', space=vmem, size = 0x40000, scoped, tag = 'input window, operand 3, single buffered']
    #allocation3 [shape = 's32[1]{0}', space=sflag, size = 0x4, scoped, tag = 'scoped memory for tpu_custom_call.1']
    %11 = vsyncpa [#allocation3], 0
    // Predicated region
    $region2: #{tpu_custom_call.1} parent=1 // pred_check
      _
    $region3: #{tpu_custom_call.1} parent=1 // pred_check_branch
      %13 = sbr.rel (0) target = $region5
    $region4: #{tpu_custom_call.1} parent=1 // pred_region
      _
    $region5: #{tpu_custom_call.1} parent=1 // pred_fallthru
      _
    // Predicated region
    $region6: #{tpu_custom_call.1} parent=1 // pred_check
      _
    $region7: #{tpu_custom_call.1} parent=1 // pred_check_branch
      %15 = sbr.rel (0) target = $region9
    $region8: #{tpu_custom_call.1} parent=1 // pred_region
      _
    $region9: #{tpu_custom_call.1} parent=1 // pred_fallthru
      _
    // Predicated region
    $region10: #{tpu_custom_call.1} parent=1 // pred_check
      _
    $region11: #{tpu_custom_call.1} parent=1 // pred_check_branch
      %17 = sbr.rel (0) target = $region13
    $region12: #{tpu_custom_call.1} parent=1 // pred_region
      _
    $region13: #{tpu_custom_call.1} parent=1 // pred_fallthru
      _
    // Predicated region
    $region14: #{tpu_custom_call.1} parent=1 // pred_check
      _
    $region15: #{tpu_custom_call.1} parent=1 // pred_check_branch
      %19 = sbr.rel (0) target = $region17
    $region16: #{tpu_custom_call.1} parent=1 // pred_region
      %s21 = ssub.s32 8192, 8192
      %22 = vsyncadd [#allocation3], %s21
      %s23 = sshll.u32 [#allocation2], 4
      %s24 = int_to_ptr.vmem [resolvable:$true] %s23
      %29 = dma.hbm_to_vmem [thread:$0]  %s3, 8192, %s24, [#allocation3], 128, 128, 8
    $region17: #{tpu_custom_call.1} parent=1 // pred_fallthru
      _
    // Predicated region
    $region18: #{tpu_custom_call.1} parent=1 // pred_check
      _
    $region19: #{tpu_custom_call.1} parent=1 // pred_check_branch
      %31 = sbr.rel (0) target = $region21
    $region20: #{tpu_custom_call.1} parent=1 // pred_region
      _
    $region21: #{tpu_custom_call.1} parent=1 // pred_fallthru
      _
    // Predicated region
    $region22: #{tpu_custom_call.1} parent=1 // pred_check
      _
    $region23: #{tpu_custom_call.1} parent=1 // pred_check_branch
      %33 = sbr.rel (0) target = $region25
    $region24: #{tpu_custom_call.1} parent=1 // pred_region
      _
    $region25: #{tpu_custom_call.1} parent=1 // pred_fallthru
      _
    // Predicated region
    $region26: #{tpu_custom_call.1} parent=1 // pred_check
      _
    $region27: #{tpu_custom_call.1} parent=1 // pred_check_branch
      %35 = sbr.rel (0) target = $region29
    $region28: #{tpu_custom_call.1} parent=1 // pred_region
      %36 = dma.done [#allocation3], 8192
    $region29: #{tpu_custom_call.1} parent=1 // pred_fallthru
      _
    %v37 = vld [vmem:[%s0] sm:$0xff]
    %v38 = vld [vmem:[%s0 + $0x8] sm:$0xff]
    %v39 = vld [vmem:[%s0 + $0x10] sm:$0xff]
    %v40 = vld [vmem:[%s0 + $0x18] sm:$0xff]
    %v41 = vld [vmem:[%s0 + $0x20] sm:$0xff]
    %v42 = vld [vmem:[%s0 + $0x28] sm:$0xff]
    %v43 = vld [vmem:[%s0 + $0x30] sm:$0xff]
    %v44 = vld [vmem:[%s0 + $0x38] sm:$0xff]
    %v45 = vld [vmem:[%s1] sm:$0xff]
    %v46 = vld [vmem:[%s1 + $0x8] sm:$0xff]
    %v47 = vld [vmem:[%s1 + $0x10] sm:$0xff]
    %v48 = vld [vmem:[%s1 + $0x18] sm:$0xff]
    %v49 = vld [vmem:[%s2] sm:$0x1]
    %v51 = vlaneseq
    %v52 = vshrl.u32 %v51, 7
    %v53 = vsub.s32 0, %v52
    %v54 = vrot.slane %v49, %v53
    %vm56 = vcmask 261120
    %v58 = vsel %vm56, %v37, 0
    %v61 = vsel %vm56, %v38, 0
    %v64 = vsel %vm56, %v39, 0
    %v67 = vsel %vm56, %v40, 0
    %v70 = vsel %vm56, %v41, 0
    %v73 = vsel %vm56, %v42, 0
    %v76 = vsel %vm56, %v43, 0
    %v79 = vsel %vm56, %v44, 0
    %81 = vmatprep.subr.mxu0 0.0
    %82 = vmatpush1.msra.mxu0 0.0
    %83 = vmatprep.subr.mxu0 0.0
    %84 = vmatpush1.msra.mxu0 0.0
    %85 = vmatprep.subr.mxu0 0.0
    %86 = vmatpush1.msra.mxu0 0.0
    %87 = vmatprep.subr.mxu0 0.0
    %88 = vmatpush1.msra.mxu0 0.0
    %89 = vmatprep.subr.mxu0 0.0
    %90 = vmatpush1.msra.mxu0 0.0
    %91 = vmatprep.subr.mxu0 0.0
    %92 = vmatpush1.msra.mxu0 0.0
    %93 = vmatprep.subr.mxu0 0.0
    %94 = vmatpush1.msra.mxu0 0.0
    %95 = vmatprep.subr.mxu0 0.0
    %96 = vmatpush1.msra.mxu0 0.0
    %97 = vmatprep.subr.mxu0 0.0
    %98 = vmatpush1.msra.mxu0 0.0
    %99 = vmatprep.subr.mxu0 0.0
    %100 = vmatpush1.msra.mxu0 0.0
    %101 = vmatprep.subr.mxu0 0.0
    %102 = vmatpush1.msra.mxu0 0.0
    %103 = vmatprep.subr.mxu0 0.0
    %104 = vmatpush1.msra.mxu0 0.0
    %105 = vmatprep.subr.mxu0 0.0
    %106 = vmatpush1.msra.mxu0 %v48
    %107 = vmatprep.subr.mxu0 0.0
    %108 = vmatpush1.msra.mxu0 %v47
    %109 = vmatprep.subr.mxu0 0.0
    %110 = vmatpush1.msra.mxu0 %v46
    %111 = vmatprep.subr.mxu0 0.0
    %112 = vmatpush1.msra.mxu0 %v45
    %113 = vmatprep.subr.mxu0 0.0
    %114 = vmatpush2.msra.mxu0 0.0
    %115 = vmatprep.subr.mxu0 0.0
    %116 = vmatpush2.msra.mxu0 0.0
    %117 = vmatprep.subr.mxu0 0.0
    %118 = vmatpush2.msra.mxu0 0.0
    %119 = vmatprep.subr.mxu0 0.0
    %120 = vmatpush2.msra.mxu0 0.0
    %121 = vmatprep.subr.mxu0 0.0
    %122 = vmatpush2.msra.mxu0 0.0
    %123 = vmatprep.subr.mxu0 0.0
    %124 = vmatpush2.msra.mxu0 0.0
    %125 = vmatprep.subr.mxu0 0.0
    %126 = vmatpush2.msra.mxu0 0.0
    %127 = vmatprep.subr.mxu0 0.0
    %128 = vmatpush2.msra.mxu0 0.0
    %129 = vmatprep.subr.mxu0 0.0
    %130 = vmatpush2.msra.mxu0 0.0
    %131 = vmatprep.subr.mxu0 0.0
    %132 = vmatpush2.msra.mxu0 0.0
    %133 = vmatprep.subr.mxu0 0.0
    %134 = vmatpush2.msra.mxu0 0.0
    %135 = vmatprep.subr.mxu0 0.0
    %136 = vmatpush2.msra.mxu0 0.0
    %137 = vmatprep.subr.mxu0 0.0
    %138 = vmatpush2.msra.mxu0 0.0
    %139 = vmatprep.subr.mxu0 0.0
    %140 = vmatpush2.msra.mxu0 0.0
    %141 = vmatprep.subr.mxu0 0.0
    %142 = vmatpush2.msra.mxu0 0.0
    %143 = vmatprep.subr.mxu0 0.0
    %144 = vmatpush2.msra.mxu0 0.0
    %145 = vmatprep.mubr.f32.mxu0 0.0
    %146 = vmatmul.mubr.f32.gmra.mxu0 %v58
    %v147 = vpop.f32.mrf.mxu0
    %v148 = vadd.f32 %v54, %v147
    %v149 = vpop.f32.mrf.mxu0
    %150 = vmatprep.mubr.f32.mxu0 0.0
    %151 = vmatmul.mubr.f32.gmra.mxu0 %v61
    %v152 = vpop.f32.mrf.mxu0
    %v153 = vadd.f32 %v54, %v152
    %v154 = vpop.f32.mrf.mxu0
    %155 = vmatprep.mubr.f32.mxu0 0.0
    %156 = vmatmul.mubr.f32.gmra.mxu0 %v64
    %v157 = vpop.f32.mrf.mxu0
    %v158 = vadd.f32 %v54, %v157
    %v159 = vpop.f32.mrf.mxu0
    %160 = vmatprep.mubr.f32.mxu0 0.0
    %161 = vmatmul.mubr.f32.gmra.mxu0 %v67
    %v162 = vpop.f32.mrf.mxu0
    %v163 = vadd.f32 %v54, %v162
    %v164 = vpop.f32.mrf.mxu0
    %165 = vmatprep.mubr.f32.mxu0 0.0
    %166 = vmatmul.mubr.f32.gmra.mxu0 %v70
    %v167 = vpop.f32.mrf.mxu0
    %v168 = vadd.f32 %v54, %v167
    %v169 = vpop.f32.mrf.mxu0
    %170 = vmatprep.mubr.f32.mxu0 0.0
    %171 = vmatmul.mubr.f32.gmra.mxu0 %v73
    %v172 = vpop.f32.mrf.mxu0
    %v173 = vadd.f32 %v54, %v172
    %v174 = vpop.f32.mrf.mxu0
    %175 = vmatprep.mubr.f32.mxu0 0.0
    %176 = vmatmul.mubr.f32.gmra.mxu0 %v76
    %v177 = vpop.f32.mrf.mxu0
    %v178 = vadd.f32 %v54, %v177
    %v179 = vpop.f32.mrf.mxu0
    %180 = vmatprep.mubr.f32.mxu0 0.0
    %181 = vmatmul.mubr.f32.gmra.mxu0 %v79
    %v182 = vpop.f32.mrf.mxu0
    %v183 = vadd.f32 %v54, %v182
    %v184 = vpop.f32.mrf.mxu0
    %185 = vdwg.mxu0
    %v186 = vmul.f32 %v148, 0.5
    %v187 = vmul.f32 %v153, 0.5
    %v188 = vmul.f32 %v158, 0.5
    %v189 = vmul.f32 %v163, 0.5
    %v190 = vmul.f32 %v168, 0.5
    %v191 = vmul.f32 %v173, 0.5
    %v192 = vmul.f32 %v178, 0.5
    %v193 = vmul.f32 %v183, 0.5
    %v194 = vld [vmem:[%s4] sm:$0xff]
    %v195 = vld [vmem:[%s4 + $0x8] sm:$0xff]
    %v196 = vld [vmem:[%s4 + $0x10] sm:$0xff]
    %v197 = vld [vmem:[%s4 + $0x18] sm:$0xff]
    %v198 = vld [vmem:[%s5] sm:$0x1]
    %v200 = vlaneseq
    %v201 = vshrl.u32 %v200, 7
    %v202 = vsub.s32 0, %v201
    %v203 = vrot.slane %v198, %v202
    %v205 = vadd.f32 %v203, 0.0
    %v206 = vld [vmem:[#allocation2] sm:$0xff]
    %v207 = vld [vmem:[#allocation2 + $0x8] sm:$0xff]
    %v208 = vld [vmem:[#allocation2 + $0x10] sm:$0xff]
    %v209 = vld [vmem:[#allocation2 + $0x18] sm:$0xff]
    %v210 = vld [vmem:[#allocation2 + $0x20] sm:$0xff]
    %v211 = vld [vmem:[#allocation2 + $0x28] sm:$0xff]
    %v212 = vld [vmem:[#allocation2 + $0x30] sm:$0xff]
    %v213 = vld [vmem:[#allocation2 + $0x38] sm:$0xff]
    %222 = vrot.lane.b32.xlu0 %v148, 96
    %v223 = vpop.permute.xlu0 %222
    %224 = vrot.lane.b32.xlu0 %v153, 96
    %v225 = vpop.permute.xlu0 %224
    %226 = vrot.lane.b32.xlu0 %v158, 96
    %v227 = vpop.permute.xlu0 %226
    %228 = vrot.lane.b32.xlu0 %v163, 96
    %v229 = vpop.permute.xlu0 %228
    %230 = vrot.lane.b32.xlu0 %v168, 96
    %v231 = vpop.permute.xlu0 %230
    %232 = vrot.lane.b32.xlu0 %v173, 96
    %v233 = vpop.permute.xlu0 %232
    %234 = vrot.lane.b32.xlu0 %v178, 96
    %v235 = vpop.permute.xlu0 %234
    %236 = vrot.lane.b32.xlu0 %v183, 96
    %v237 = vpop.permute.xlu0 %236
    %vm238 = vcmask 31744
    %v240 = vsel %vm238, %v186, 0
    %v243 = vsel %vm238, %v187, 0
    %v246 = vsel %vm238, %v188, 0
    %v249 = vsel %vm238, %v189, 0
    %v252 = vsel %vm238, %v190, 0
    %v255 = vsel %vm238, %v191, 0
    %v258 = vsel %vm238, %v192, 0
    %v261 = vsel %vm238, %v193, 0
    %v263 = vsel %vm238, %v223, 0
    %v265 = vsel %vm238, %v225, 0
    %v267 = vsel %vm238, %v227, 0
    %v269 = vsel %vm238, %v229, 0
    %v271 = vsel %vm238, %v231, 0
    %v273 = vsel %vm238, %v233, 0
    %v275 = vsel %vm238, %v235, 0
    %v277 = vsel %vm238, %v237, 0
    %279 = vmatprep.subr.mxu0 0.0
    %280 = vmatpush1.xpose.msra.mxu0 0.0
    %281 = vmatprep.subr.mxu0 0.0
    %282 = vmatpush1.xpose.msra.mxu0 0.0
    %283 = vmatprep.subr.mxu0 0.0
    %284 = vmatpush1.xpose.msra.mxu0 0.0
    %285 = vmatprep.subr.mxu0 0.0
    %286 = vmatpush1.xpose.msra.mxu0 0.0
    %287 = vmatprep.subr.mxu0 0.0
    %288 = vmatpush1.xpose.msra.mxu0 0.0
    %289 = vmatprep.subr.mxu0 0.0
    %290 = vmatpush1.xpose.msra.mxu0 0.0
    %291 = vmatprep.subr.mxu0 0.0
    %292 = vmatpush1.xpose.msra.mxu0 0.0
    %293 = vmatprep.subr.mxu0 0.0
    %294 = vmatpush1.xpose.msra.mxu0 0.0
    %295 = vmatprep.subr.mxu0 0.0
    %296 = vmatpush1.xpose.msra.mxu0 %v277
    %297 = vmatprep.subr.mxu0 0.0
    %298 = vmatpush1.xpose.msra.mxu0 %v275
    %299 = vmatprep.subr.mxu0 0.0
    %300 = vmatpush1.xpose.msra.mxu0 %v273
    %301 = vmatprep.subr.mxu0 0.0
    %302 = vmatpush1.xpose.msra.mxu0 %v271
    %303 = vmatprep.subr.mxu0 0.0
    %304 = vmatpush1.xpose.msra.mxu0 %v269
    %305 = vmatprep.subr.mxu0 0.0
    %306 = vmatpush1.xpose.msra.mxu0 %v267
    %307 = vmatprep.subr.mxu0 0.0
    %308 = vmatpush1.xpose.msra.mxu0 %v265
    %309 = vmatprep.subr.mxu0 0.0
    %310 = vmatpush1.xpose.msra.mxu0 %v263
    %311 = vmatprep.subr.mxu0 0.0
    %312 = vmatpush2.xpose.msra.mxu0 0.0
    %313 = vmatprep.subr.mxu0 0.0
    %314 = vmatpush2.xpose.msra.mxu0 0.0
    %315 = vmatprep.subr.mxu0 0.0
    %316 = vmatpush2.xpose.msra.mxu0 0.0
    %317 = vmatprep.subr.mxu0 0.0
    %318 = vmatpush2.xpose.msra.mxu0 0.0
    %319 = vmatprep.subr.mxu0 0.0
    %320 = vmatpush2.xpose.msra.mxu0 0.0
    %321 = vmatprep.subr.mxu0 0.0
    %322 = vmatpush2.xpose.msra.mxu0 0.0
    %323 = vmatprep.subr.mxu0 0.0
    %324 = vmatpush2.xpose.msra.mxu0 0.0
    %325 = vmatprep.subr.mxu0 0.0
    %326 = vmatpush2.xpose.msra.mxu0 0.0
    %327 = vmatprep.subr.mxu0 0.0
    %328 = vmatpush2.xpose.msra.mxu0 0.0
    %329 = vmatprep.subr.mxu0 0.0
    %330 = vmatpush2.xpose.msra.mxu0 0.0
    %331 = vmatprep.subr.mxu0 0.0
    %332 = vmatpush2.xpose.msra.mxu0 0.0
    %333 = vmatprep.subr.mxu0 0.0
    %334 = vmatpush2.xpose.msra.mxu0 0.0
    %335 = vmatprep.subr.mxu0 0.0
    %336 = vmatpush2.xpose.msra.mxu0 0.0
    %337 = vmatprep.subr.mxu0 0.0
    %338 = vmatpush2.xpose.msra.mxu0 0.0
    %339 = vmatprep.subr.mxu0 0.0
    %340 = vmatpush2.xpose.msra.mxu0 0.0
    %341 = vmatprep.subr.mxu0 0.0
    %342 = vmatpush2.xpose.msra.mxu0 0.0
    %343 = vmatprep.mubr.f32.mxu0 0.0
    %344 = vmatmul.mubr.f32.gmra.mxu0 %v240
    %v345 = vpop.f32.mrf.mxu0
    %v346 = vadd.f32 %v206, %v345
    %v347 = vpop.f32.mrf.mxu0
    %348 = vmatprep.mubr.f32.mxu0 0.0
    %349 = vmatmul.mubr.f32.gmra.mxu0 %v243
    %v350 = vpop.f32.mrf.mxu0
    %v351 = vadd.f32 %v207, %v350
    %v352 = vpop.f32.mrf.mxu0
    %353 = vmatprep.mubr.f32.mxu0 0.0
    %354 = vmatmul.mubr.f32.gmra.mxu0 %v246
    %v355 = vpop.f32.mrf.mxu0
    %v356 = vadd.f32 %v208, %v355
    %v357 = vpop.f32.mrf.mxu0
    %358 = vmatprep.mubr.f32.mxu0 0.0
    %359 = vmatmul.mubr.f32.gmra.mxu0 %v249
    %v360 = vpop.f32.mrf.mxu0
    %v361 = vadd.f32 %v209, %v360
    %v362 = vpop.f32.mrf.mxu0
    %363 = vmatprep.mubr.f32.mxu0 0.0
    %364 = vmatmul.mubr.f32.gmra.mxu0 %v252
    %v365 = vpop.f32.mrf.mxu0
    %v366 = vadd.f32 %v210, %v365
    %v367 = vpop.f32.mrf.mxu0
    %368 = vmatprep.mubr.f32.mxu0 0.0
    %369 = vmatmul.mubr.f32.gmra.mxu0 %v255
    %v370 = vpop.f32.mrf.mxu0
    %v371 = vadd.f32 %v211, %v370
    %v372 = vpop.f32.mrf.mxu0
    %373 = vmatprep.mubr.f32.mxu0 0.0
    %374 = vmatmul.mubr.f32.gmra.mxu0 %v258
    %v375 = vpop.f32.mrf.mxu0
    %v376 = vadd.f32 %v212, %v375
    %v377 = vpop.f32.mrf.mxu0
    %378 = vmatprep.mubr.f32.mxu0 0.0
    %379 = vmatmul.mubr.f32.gmra.mxu0 %v261
    %v380 = vpop.f32.mrf.mxu0
    %v381 = vadd.f32 %v213, %v380
    %v382 = vpop.f32.mrf.mxu0
    %383 = vdwg.mxu0
    %vm384 = vcmask 523264
    %v385 = vsel %vm384, %v346, -inf
    %386 = vmax.xlane.f32.xlu0 %v385
    %v387 = vpop.xlane.xlu0 %386
    %v388 = vsel %vm384, %v351, -inf
    %389 = vmax.xlane.f32.xlu0 %v388
    %v390 = vpop.xlane.xlu0 %389
    %v391 = vsel %vm384, %v356, -inf
    %392 = vmax.xlane.f32.xlu0 %v391
    %v393 = vpop.xlane.xlu0 %392
    %v394 = vsel %vm384, %v361, -inf
    %395 = vmax.xlane.f32.xlu0 %v394
    %v396 = vpop.xlane.xlu0 %395
    %v397 = vsel %vm384, %v366, -inf
    %398 = vmax.xlane.f32.xlu0 %v397
    %v399 = vpop.xlane.xlu0 %398
    %v400 = vsel %vm384, %v371, -inf
    %401 = vmax.xlane.f32.xlu0 %v400
    %v402 = vpop.xlane.xlu0 %401
    %v403 = vsel %vm384, %v376, -inf
    %404 = vmax.xlane.f32.xlu0 %v403
    %v405 = vpop.xlane.xlu0 %404
    %v406 = vsel %vm384, %v381, -inf
    %407 = vmax.xlane.f32.xlu0 %v406
    %v408 = vpop.xlane.xlu0 %407
    %v409 = vsub.f32 %v346, %v387
    %v410 = vsub.f32 %v351, %v390
    %v411 = vsub.f32 %v356, %v393
    %v412 = vsub.f32 %v361, %v396
    %v413 = vsub.f32 %v366, %v399
    %v414 = vsub.f32 %v371, %v402
    %v415 = vsub.f32 %v376, %v405
    %v416 = vsub.f32 %v381, %v408
    %v417 = vmul.f32 %v409, 1.442695
    %v418 = vpow.pop %v417
    %v419 = vmul.f32 %v410, 1.442695
    %v420 = vpow.pop %v419
    %v421 = vmul.f32 %v411, 1.442695
    %v422 = vpow.pop %v421
    %v423 = vmul.f32 %v412, 1.442695
    %v424 = vpow.pop %v423
    %v425 = vmul.f32 %v413, 1.442695
    %v426 = vpow.pop %v425
    %v427 = vmul.f32 %v414, 1.442695
    %v428 = vpow.pop %v427
    %v429 = vmul.f32 %v415, 1.442695
    %v430 = vpow.pop %v429
    %v431 = vmul.f32 %v416, 1.442695
    %v432 = vpow.pop %v431
    %v433 = vsel %vm384, %v418, 0.0
    %434 = vadd.xlane.f32.xlu0 %v433
    %v435 = vpop.xlane.xlu0 %434
    %v436 = vsel %vm384, %v420, 0.0
    %437 = vadd.xlane.f32.xlu0 %v436
    %v438 = vpop.xlane.xlu0 %437
    %v439 = vsel %vm384, %v422, 0.0
    %440 = vadd.xlane.f32.xlu0 %v439
    %v441 = vpop.xlane.xlu0 %440
    %v442 = vsel %vm384, %v424, 0.0
    %443 = vadd.xlane.f32.xlu0 %v442
    %v444 = vpop.xlane.xlu0 %443
    %v445 = vsel %vm384, %v426, 0.0
    %446 = vadd.xlane.f32.xlu0 %v445
    %v447 = vpop.xlane.xlu0 %446
    %v448 = vsel %vm384, %v428, 0.0
    %449 = vadd.xlane.f32.xlu0 %v448
    %v450 = vpop.xlane.xlu0 %449
    %v451 = vsel %vm384, %v430, 0.0
    %452 = vadd.xlane.f32.xlu0 %v451
    %v453 = vpop.xlane.xlu0 %452
    %v454 = vsel %vm384, %v432, 0.0
    %455 = vadd.xlane.f32.xlu0 %v454
    %v456 = vpop.xlane.xlu0 %455
    %v457 = vrcp.pop %v435
    %v458 = vrcp.pop %v438
    %v459 = vrcp.pop %v441
    %v460 = vrcp.pop %v444
    %v461 = vrcp.pop %v447
    %v462 = vrcp.pop %v450
    %v463 = vrcp.pop %v453
    %v464 = vrcp.pop %v456
    %v465 = vmul.f32 %v418, %v457
    %v466 = vmul.f32 %v420, %v458
    %v467 = vmul.f32 %v422, %v459
    %v468 = vmul.f32 %v424, %v460
    %v469 = vmul.f32 %v426, %v461
    %v470 = vmul.f32 %v428, %v462
    %v471 = vmul.f32 %v430, %v463
    %v472 = vmul.f32 %v432, %v464
    %473 = vrot.lane.b32.xlu0 %v148, 64
    %v474 = vpop.permute.xlu0 %473
    %475 = vrot.lane.b32.xlu0 %v153, 64
    %v476 = vpop.permute.xlu0 %475
    %477 = vrot.lane.b32.xlu0 %v158, 64
    %v478 = vpop.permute.xlu0 %477
    %479 = vrot.lane.b32.xlu0 %v163, 64
    %v480 = vpop.permute.xlu0 %479
    %481 = vrot.lane.b32.xlu0 %v168, 64
    %v482 = vpop.permute.xlu0 %481
    %483 = vrot.lane.b32.xlu0 %v173, 64
    %v484 = vpop.permute.xlu0 %483
    %485 = vrot.lane.b32.xlu0 %v178, 64
    %v486 = vpop.permute.xlu0 %485
    %487 = vrot.lane.b32.xlu0 %v183, 64
    %v488 = vpop.permute.xlu0 %487
    %v498 = vsel %vm384, %v465, 0
    %v501 = vsel %vm384, %v466, 0
    %v504 = vsel %vm384, %v467, 0
    %v507 = vsel %vm384, %v468, 0
    %v510 = vsel %vm384, %v469, 0
    %v513 = vsel %vm384, %v470, 0
    %v516 = vsel %vm384, %v471, 0
    %v519 = vsel %vm384, %v472, 0
    %521 = vmatprep.subr.mxu0 0.0
    %522 = vmatpush1.msra.mxu0 0.0
    %523 = vmatprep.subr.mxu0 0.0
    %524 = vmatpush1.msra.mxu0 0.0
    %525 = vmatprep.subr.mxu0 0.0
    %526 = vmatpush1.msra.mxu0 0.0
    %527 = vmatprep.subr.mxu0 0.0
    %528 = vmatpush1.msra.mxu0 0.0
    %529 = vmatprep.subr.mxu0 0.0
    %530 = vmatpush1.msra.mxu0 0.0
    %531 = vmatprep.subr.mxu0 0.0
    %532 = vmatpush1.msra.mxu0 0.0
    %533 = vmatprep.subr.mxu0 0.0
    %534 = vmatpush1.msra.mxu0 0.0
    %535 = vmatprep.subr.mxu0 0.0
    %536 = vmatpush1.msra.mxu0 0.0
    %537 = vmatprep.subr.mxu0 0.0
    %538 = vmatpush1.msra.mxu0 %v488
    %539 = vmatprep.subr.mxu0 0.0
    %540 = vmatpush1.msra.mxu0 %v486
    %541 = vmatprep.subr.mxu0 0.0
    %542 = vmatpush1.msra.mxu0 %v484
    %543 = vmatprep.subr.mxu0 0.0
    %544 = vmatpush1.msra.mxu0 %v482
    %545 = vmatprep.subr.mxu0 0.0
    %546 = vmatpush1.msra.mxu0 %v480
    %547 = vmatprep.subr.mxu0 0.0
    %548 = vmatpush1.msra.mxu0 %v478
    %549 = vmatprep.subr.mxu0 0.0
    %550 = vmatpush1.msra.mxu0 %v476
    %551 = vmatprep.subr.mxu0 0.0
    %552 = vmatpush1.msra.mxu0 %v474
    %553 = vmatprep.subr.mxu0 0.0
    %554 = vmatpush2.msra.mxu0 0.0
    %555 = vmatprep.subr.mxu0 0.0
    %556 = vmatpush2.msra.mxu0 0.0
    %557 = vmatprep.subr.mxu0 0.0
    %558 = vmatpush2.msra.mxu0 0.0
    %559 = vmatprep.subr.mxu0 0.0
    %560 = vmatpush2.msra.mxu0 0.0
    %561 = vmatprep.subr.mxu0 0.0
    %562 = vmatpush2.msra.mxu0 0.0
    %563 = vmatprep.subr.mxu0 0.0
    %564 = vmatpush2.msra.mxu0 0.0
    %565 = vmatprep.subr.mxu0 0.0
    %566 = vmatpush2.msra.mxu0 0.0
    %567 = vmatprep.subr.mxu0 0.0
    %568 = vmatpush2.msra.mxu0 0.0
    %569 = vmatprep.subr.mxu0 0.0
    %570 = vmatpush2.msra.mxu0 0.0
    %571 = vmatprep.subr.mxu0 0.0
    %572 = vmatpush2.msra.mxu0 0.0
    %573 = vmatprep.subr.mxu0 0.0
    %574 = vmatpush2.msra.mxu0 0.0
    %575 = vmatprep.subr.mxu0 0.0
    %576 = vmatpush2.msra.mxu0 0.0
    %577 = vmatprep.subr.mxu0 0.0
    %578 = vmatpush2.msra.mxu0 0.0
    %579 = vmatprep.subr.mxu0 0.0
    %580 = vmatpush2.msra.mxu0 0.0
    %581 = vmatprep.subr.mxu0 0.0
    %582 = vmatpush2.msra.mxu0 0.0
    %583 = vmatprep.subr.mxu0 0.0
    %584 = vmatpush2.msra.mxu0 0.0
    %585 = vmatprep.mubr.f32.mxu0 0.0
    %586 = vmatmul.mubr.f32.gmra.mxu0 %v498
    %v587 = vpop.f32.mrf.mxu0
    %v588 = vadd.f32 0.0, %v587
    %v589 = vpop.f32.mrf.mxu0
    %590 = vmatprep.mubr.f32.mxu0 0.0
    %591 = vmatmul.mubr.f32.gmra.mxu0 %v501
    %v592 = vpop.f32.mrf.mxu0
    %v593 = vadd.f32 0.0, %v592
    %v594 = vpop.f32.mrf.mxu0
    %595 = vmatprep.mubr.f32.mxu0 0.0
    %596 = vmatmul.mubr.f32.gmra.mxu0 %v504
    %v597 = vpop.f32.mrf.mxu0
    %v598 = vadd.f32 0.0, %v597
    %v599 = vpop.f32.mrf.mxu0
    %600 = vmatprep.mubr.f32.mxu0 0.0
    %601 = vmatmul.mubr.f32.gmra.mxu0 %v507
    %v602 = vpop.f32.mrf.mxu0
    %v603 = vadd.f32 0.0, %v602
    %v604 = vpop.f32.mrf.mxu0
    %605 = vmatprep.mubr.f32.mxu0 0.0
    %606 = vmatmul.mubr.f32.gmra.mxu0 %v510
    %v607 = vpop.f32.mrf.mxu0
    %v608 = vadd.f32 0.0, %v607
    %v609 = vpop.f32.mrf.mxu0
    %610 = vmatprep.mubr.f32.mxu0 0.0
    %611 = vmatmul.mubr.f32.gmra.mxu0 %v513
    %v612 = vpop.f32.mrf.mxu0
    %v613 = vadd.f32 0.0, %v612
    %v614 = vpop.f32.mrf.mxu0
    %615 = vmatprep.mubr.f32.mxu0 0.0
    %616 = vmatmul.mubr.f32.gmra.mxu0 %v516
    %v617 = vpop.f32.mrf.mxu0
    %v618 = vadd.f32 0.0, %v617
    %v619 = vpop.f32.mrf.mxu0
    %620 = vmatprep.mubr.f32.mxu0 0.0
    %621 = vmatmul.mubr.f32.gmra.mxu0 %v519
    %v622 = vpop.f32.mrf.mxu0
    %v623 = vadd.f32 0.0, %v622
    %v624 = vpop.f32.mrf.mxu0
    %625 = vdwg.mxu0
    %v627 = vsel %vm238, %v588, 0
    %v630 = vsel %vm238, %v593, 0
    %v633 = vsel %vm238, %v598, 0
    %v636 = vsel %vm238, %v603, 0
    %v639 = vsel %vm238, %v608, 0
    %v642 = vsel %vm238, %v613, 0
    %v645 = vsel %vm238, %v618, 0
    %v648 = vsel %vm238, %v623, 0
    %vm650 = vcmask 1043456
    %v652 = vsel %vm650, %v194, 0
    %654 = vmatprep.subr.mxu0 0.0
    %655 = vmatpush1.msra.mxu0 0.0
    %656 = vmatprep.subr.mxu0 0.0
    %657 = vmatpush1.msra.mxu0 0.0
    %658 = vmatprep.subr.mxu0 0.0
    %659 = vmatpush1.msra.mxu0 0.0
    %660 = vmatprep.subr.mxu0 0.0
    %661 = vmatpush1.msra.mxu0 0.0
    %662 = vmatprep.subr.mxu0 0.0
    %663 = vmatpush1.msra.mxu0 0.0
    %664 = vmatprep.subr.mxu0 0.0
    %665 = vmatpush1.msra.mxu0 0.0
    %666 = vmatprep.subr.mxu0 0.0
    %667 = vmatpush1.msra.mxu0 0.0
    %668 = vmatprep.subr.mxu0 0.0
    %669 = vmatpush1.msra.mxu0 0.0
    %670 = vmatprep.subr.mxu0 0.0
    %671 = vmatpush1.msra.mxu0 0.0
    %672 = vmatprep.subr.mxu0 0.0
    %673 = vmatpush1.msra.mxu0 0.0
    %674 = vmatprep.subr.mxu0 0.0
    %675 = vmatpush1.msra.mxu0 0.0
    %676 = vmatprep.subr.mxu0 0.0
    %677 = vmatpush1.msra.mxu0 0.0
    %678 = vmatprep.subr.mxu0 0.0
    %679 = vmatpush1.msra.mxu0 0.0
    %680 = vmatprep.subr.mxu0 0.0
    %681 = vmatpush1.msra.mxu0 0.0
    %682 = vmatprep.subr.mxu0 0.0
    %683 = vmatpush1.msra.mxu0 0.0
    %684 = vmatprep.subr.mxu0 0.0
    %685 = vmatpush1.msra.mxu0 %v652
    %686 = vmatprep.subr.mxu0 0.0
    %687 = vmatpush2.msra.mxu0 0.0
    %688 = vmatprep.subr.mxu0 0.0
    %689 = vmatpush2.msra.mxu0 0.0
    %690 = vmatprep.subr.mxu0 0.0
    %691 = vmatpush2.msra.mxu0 0.0
    %692 = vmatprep.subr.mxu0 0.0
    %693 = vmatpush2.msra.mxu0 0.0
    %694 = vmatprep.subr.mxu0 0.0
    %695 = vmatpush2.msra.mxu0 0.0
    %696 = vmatprep.subr.mxu0 0.0
    %697 = vmatpush2.msra.mxu0 0.0
    %698 = vmatprep.subr.mxu0 0.0
    %699 = vmatpush2.msra.mxu0 0.0
    %700 = vmatprep.subr.mxu0 0.0
    %701 = vmatpush2.msra.mxu0 0.0
    %702 = vmatprep.subr.mxu0 0.0
    %703 = vmatpush2.msra.mxu0 0.0
    %704 = vmatprep.subr.mxu0 0.0
    %705 = vmatpush2.msra.mxu0 0.0
    %706 = vmatprep.subr.mxu0 0.0
    %707 = vmatpush2.msra.mxu0 0.0
    %708 = vmatprep.subr.mxu0 0.0
    %709 = vmatpush2.msra.mxu0 0.0
    %710 = vmatprep.subr.mxu0 0.0
    %711 = vmatpush2.msra.mxu0 0.0
    %712 = vmatprep.subr.mxu0 0.0
    %713 = vmatpush2.msra.mxu0 0.0
    %714 = vmatprep.subr.mxu0 0.0
    %715 = vmatpush2.msra.mxu0 0.0
    %716 = vmatprep.subr.mxu0 0.0
    %717 = vmatpush2.msra.mxu0 0.0
    %718 = vmatprep.mubr.f32.mxu0 0.0
    %719 = vmatmul.mubr.f32.gmra.mxu0 %v627
    %v720 = vpop.f32.mrf.mxu0
    %v721 = vadd.f32 0.0, %v720
    %v722 = vpop.f32.mrf.mxu0
    %723 = vmatprep.mubr.f32.mxu0 0.0
    %724 = vmatmul.mubr.f32.gmra.mxu0 %v630
    %v725 = vpop.f32.mrf.mxu0
    %v726 = vadd.f32 0.0, %v725
    %v727 = vpop.f32.mrf.mxu0
    %728 = vmatprep.mubr.f32.mxu0 0.0
    %729 = vmatmul.mubr.f32.gmra.mxu0 %v633
    %v730 = vpop.f32.mrf.mxu0
    %v731 = vadd.f32 0.0, %v730
    %v732 = vpop.f32.mrf.mxu0
    %733 = vmatprep.mubr.f32.mxu0 0.0
    %734 = vmatmul.mubr.f32.gmra.mxu0 %v636
    %v735 = vpop.f32.mrf.mxu0
    %v736 = vadd.f32 0.0, %v735
    %v737 = vpop.f32.mrf.mxu0
    %738 = vmatprep.mubr.f32.mxu0 0.0
    %739 = vmatmul.mubr.f32.gmra.mxu0 %v639
    %v740 = vpop.f32.mrf.mxu0
    %v741 = vadd.f32 0.0, %v740
    %v742 = vpop.f32.mrf.mxu0
    %743 = vmatprep.mubr.f32.mxu0 0.0
    %744 = vmatmul.mubr.f32.gmra.mxu0 %v642
    %v745 = vpop.f32.mrf.mxu0
    %v746 = vadd.f32 0.0, %v745
    %v747 = vpop.f32.mrf.mxu0
    %748 = vmatprep.mubr.f32.mxu0 0.0
    %749 = vmatmul.mubr.f32.gmra.mxu0 %v645
    %v750 = vpop.f32.mrf.mxu0
    %v751 = vadd.f32 0.0, %v750
    %v752 = vpop.f32.mrf.mxu0
    %753 = vmatprep.mubr.f32.mxu0 0.0
    %754 = vmatmul.mubr.f32.gmra.mxu0 %v648
    %v755 = vpop.f32.mrf.mxu0
    %v756 = vadd.f32 0.0, %v755
    %v757 = vpop.f32.mrf.mxu0
    %758 = vdwg.mxu0
    %v759 = vadd.f32 %v205, %v721
    %v760 = vadd.f32 %v205, %v726
    %v761 = vadd.f32 %v205, %v731
    %v762 = vadd.f32 %v205, %v736
    %v763 = vadd.f32 %v205, %v741
    %v764 = vadd.f32 %v205, %v746
    %v765 = vadd.f32 %v205, %v751
    %v766 = vadd.f32 %v205, %v756
    %s767 = scalar_lea.vmem [#allocation2], 64
    %v768 = vld [vmem:[%s767] sm:$0xff]
    %v769 = vld [vmem:[%s767 + $0x8] sm:$0xff]
    %v770 = vld [vmem:[%s767 + $0x10] sm:$0xff]
    %v771 = vld [vmem:[%s767 + $0x18] sm:$0xff]
    %v772 = vld [vmem:[%s767 + $0x20] sm:$0xff]
    %v773 = vld [vmem:[%s767 + $0x28] sm:$0xff]
    %v774 = vld [vmem:[%s767 + $0x30] sm:$0xff]
    %v775 = vld [vmem:[%s767 + $0x38] sm:$0xff]
    %776 = vrot.lane.b32.xlu0 %v186, 124
    %v777 = vpop.permute.xlu0 %776
    %778 = vrot.lane.b32.xlu0 %v187, 124
    %v779 = vpop.permute.xlu0 %778
    %780 = vrot.lane.b32.xlu0 %v188, 124
    %v781 = vpop.permute.xlu0 %780
    %782 = vrot.lane.b32.xlu0 %v189, 124
    %v783 = vpop.permute.xlu0 %782
    %784 = vrot.lane.b32.xlu0 %v190, 124
    %v785 = vpop.permute.xlu0 %784
    %786 = vrot.lane.b32.xlu0 %v191, 124
    %v787 = vpop.permute.xlu0 %786
    %788 = vrot.lane.b32.xlu0 %v192, 124
    %v789 = vpop.permute.xlu0 %788
    %790 = vrot.lane.b32.xlu0 %v193, 124
    %v791 = vpop.permute.xlu0 %790
    %792 = vrot.lane.b32.xlu0 %v148, 92
    %v793 = vpop.permute.xlu0 %792
    %794 = vrot.lane.b32.xlu0 %v153, 92
    %v795 = vpop.permute.xlu0 %794
    %796 = vrot.lane.b32.xlu0 %v158, 92
    %v797 = vpop.permute.xlu0 %796
    %798 = vrot.lane.b32.xlu0 %v163, 92
    %v799 = vpop.permute.xlu0 %798
    %800 = vrot.lane.b32.xlu0 %v168, 92
    %v801 = vpop.permute.xlu0 %800
    %802 = vrot.lane.b32.xlu0 %v173, 92
    %v803 = vpop.permute.xlu0 %802
    %804 = vrot.lane.b32.xlu0 %v178, 92
    %v805 = vpop.permute.xlu0 %804
    %806 = vrot.lane.b32.xlu0 %v183, 92
    %v807 = vpop.permute.xlu0 %806
    %v808 = vsel %vm238, %v777, 0
    %v810 = vsel %vm238, %v779, 0
    %v812 = vsel %vm238, %v781, 0
    %v814 = vsel %vm238, %v783, 0
    %v816 = vsel %vm238, %v785, 0
    %v818 = vsel %vm238, %v787, 0
    %v820 = vsel %vm238, %v789, 0
    %v822 = vsel %vm238, %v791, 0
    %v824 = vsel %vm238, %v793, 0
    %v826 = vsel %vm238, %v795, 0
    %v828 = vsel %vm238, %v797, 0
    %v830 = vsel %vm238, %v799, 0
    %v832 = vsel %vm238, %v801, 0
    %v834 = vsel %vm238, %v803, 0
    %v836 = vsel %vm238, %v805, 0
    %v838 = vsel %vm238, %v807, 0
    %840 = vmatprep.subr.mxu0 0.0
    %841 = vmatpush1.xpose.msra.mxu0 0.0
    %842 = vmatprep.subr.mxu0 0.0
    %843 = vmatpush1.xpose.msra.mxu0 0.0
    %844 = vmatprep.subr.mxu0 0.0
    %845 = vmatpush1.xpose.msra.mxu0 0.0
    %846 = vmatprep.subr.mxu0 0.0
    %847 = vmatpush1.xpose.msra.mxu0 0.0
    %848 = vmatprep.subr.mxu0 0.0
    %849 = vmatpush1.xpose.msra.mxu0 0.0
    %850 = vmatprep.subr.mxu0 0.0
    %851 = vmatpush1.xpose.msra.mxu0 0.0
    %852 = vmatprep.subr.mxu0 0.0
    %853 = vmatpush1.xpose.msra.mxu0 0.0
    %854 = vmatprep.subr.mxu0 0.0
    %855 = vmatpush1.xpose.msra.mxu0 0.0
    %856 = vmatprep.subr.mxu0 0.0
    %857 = vmatpush1.xpose.msra.mxu0 %v838
    %858 = vmatprep.subr.mxu0 0.0
    %859 = vmatpush1.xpose.msra.mxu0 %v836
    %860 = vmatprep.subr.mxu0 0.0
    %861 = vmatpush1.xpose.msra.mxu0 %v834
    %862 = vmatprep.subr.mxu0 0.0
    %863 = vmatpush1.xpose.msra.mxu0 %v832
    %864 = vmatprep.subr.mxu0 0.0
    %865 = vmatpush1.xpose.msra.mxu0 %v830
    %866 = vmatprep.subr.mxu0 0.0
    %867 = vmatpush1.xpose.msra.mxu0 %v828
    %868 = vmatprep.subr.mxu0 0.0
    %869 = vmatpush1.xpose.msra.mxu0 %v826
    %870 = vmatprep.subr.mxu0 0.0
    %871 = vmatpush1.xpose.msra.mxu0 %v824
    %872 = vmatprep.subr.mxu0 0.0
    %873 = vmatpush2.xpose.msra.mxu0 0.0
    %874 = vmatprep.subr.mxu0 0.0
    %875 = vmatpush2.xpose.msra.mxu0 0.0
    %876 = vmatprep.subr.mxu0 0.0
    %877 = vmatpush2.xpose.msra.mxu0 0.0
    %878 = vmatprep.subr.mxu0 0.0
    %879 = vmatpush2.xpose.msra.mxu0 0.0
    %880 = vmatprep.subr.mxu0 0.0
    %881 = vmatpush2.xpose.msra.mxu0 0.0
    %882 = vmatprep.subr.mxu0 0.0
    %883 = vmatpush2.xpose.msra.mxu0 0.0
    %884 = vmatprep.subr.mxu0 0.0
    %885 = vmatpush2.xpose.msra.mxu0 0.0
    %886 = vmatprep.subr.mxu0 0.0
    %887 = vmatpush2.xpose.msra.mxu0 0.0
    %888 = vmatprep.subr.mxu0 0.0
    %889 = vmatpush2.xpose.msra.mxu0 0.0
    %890 = vmatprep.subr.mxu0 0.0
    %891 = vmatpush2.xpose.msra.mxu0 0.0
    %892 = vmatprep.subr.mxu0 0.0
    %893 = vmatpush2.xpose.msra.mxu0 0.0
    %894 = vmatprep.subr.mxu0 0.0
    %895 = vmatpush2.xpose.msra.mxu0 0.0
    %896 = vmatprep.subr.mxu0 0.0
    %897 = vmatpush2.xpose.msra.mxu0 0.0
    %898 = vmatprep.subr.mxu0 0.0
    %899 = vmatpush2.xpose.msra.mxu0 0.0
    %900 = vmatprep.subr.mxu0 0.0
    %901 = vmatpush2.xpose.msra.mxu0 0.0
    %902 = vmatprep.subr.mxu0 0.0
    %903 = vmatpush2.xpose.msra.mxu0 0.0
    %904 = vmatprep.mubr.f32.mxu0 0.0
    %905 = vmatmul.mubr.f32.gmra.mxu0 %v808
    %v906 = vpop.f32.mrf.mxu0
    %v907 = vadd.f32 %v768, %v906
    %v908 = vpop.f32.mrf.mxu0
    %909 = vmatprep.mubr.f32.mxu0 0.0
    %910 = vmatmul.mubr.f32.gmra.mxu0 %v810
    %v911 = vpop.f32.mrf.mxu0
    %v912 = vadd.f32 %v769, %v911
    %v913 = vpop.f32.mrf.mxu0
    %914 = vmatprep.mubr.f32.mxu0 0.0
    %915 = vmatmul.mubr.f32.gmra.mxu0 %v812
    %v916 = vpop.f32.mrf.mxu0
    %v917 = vadd.f32 %v770, %v916
    %v918 = vpop.f32.mrf.mxu0
    %919 = vmatprep.mubr.f32.mxu0 0.0
    %920 = vmatmul.mubr.f32.gmra.mxu0 %v814
    %v921 = vpop.f32.mrf.mxu0
    %v922 = vadd.f32 %v771, %v921
    %v923 = vpop.f32.mrf.mxu0
    %924 = vmatprep.mubr.f32.mxu0 0.0
    %925 = vmatmul.mubr.f32.gmra.mxu0 %v816
    %v926 = vpop.f32.mrf.mxu0
    %v927 = vadd.f32 %v772, %v926
    %v928 = vpop.f32.mrf.mxu0
    %929 = vmatprep.mubr.f32.mxu0 0.0
    %930 = vmatmul.mubr.f32.gmra.mxu0 %v818
    %v931 = vpop.f32.mrf.mxu0
    %v932 = vadd.f32 %v773, %v931
    %v933 = vpop.f32.mrf.mxu0
    %934 = vmatprep.mubr.f32.mxu0 0.0
    %935 = vmatmul.mubr.f32.gmra.mxu0 %v820
    %v936 = vpop.f32.mrf.mxu0
    %v937 = vadd.f32 %v774, %v936
    %v938 = vpop.f32.mrf.mxu0
    %939 = vmatprep.mubr.f32.mxu0 0.0
    %940 = vmatmul.mubr.f32.gmra.mxu0 %v822
    %v941 = vpop.f32.mrf.mxu0
    %v942 = vadd.f32 %v775, %v941
    %v943 = vpop.f32.mrf.mxu0
    %944 = vdwg.mxu0
    %v945 = vsel %vm384, %v907, -inf
    %946 = vmax.xlane.f32.xlu0 %v945
    %v947 = vpop.xlane.xlu0 %946
    %v948 = vsel %vm384, %v912, -inf
    %949 = vmax.xlane.f32.xlu0 %v948
    %v950 = vpop.xlane.xlu0 %949
    %v951 = vsel %vm384, %v917, -inf
    %952 = vmax.xlane.f32.xlu0 %v951
    %v953 = vpop.xlane.xlu0 %952
    %v954 = vsel %vm384, %v922, -inf
    %955 = vmax.xlane.f32.xlu0 %v954
    %v956 = vpop.xlane.xlu0 %955
    %v957 = vsel %vm384, %v927, -inf
    %958 = vmax.xlane.f32.xlu0 %v957
    %v959 = vpop.xlane.xlu0 %958
    %v960 = vsel %vm384, %v932, -inf
    %961 = vmax.xlane.f32.xlu0 %v960
    %v962 = vpop.xlane.xlu0 %961
    %v963 = vsel %vm384, %v937, -inf
    %964 = vmax.xlane.f32.xlu0 %v963
    %v965 = vpop.xlane.xlu0 %964
    %v966 = vsel %vm384, %v942, -inf
    %967 = vmax.xlane.f32.xlu0 %v966
    %v968 = vpop.xlane.xlu0 %967
    %v969 = vsub.f32 %v907, %v947
    %v970 = vsub.f32 %v912, %v950
    %v971 = vsub.f32 %v917, %v953
    %v972 = vsub.f32 %v922, %v956
    %v973 = vsub.f32 %v927, %v959
    %v974 = vsub.f32 %v932, %v962
    %v975 = vsub.f32 %v937, %v965
    %v976 = vsub.f32 %v942, %v968
    %v977 = vmul.f32 %v969, 1.442695
    %v978 = vpow.pop %v977
    %v979 = vmul.f32 %v970, 1.442695
    %v980 = vpow.pop %v979
    %v981 = vmul.f32 %v971, 1.442695
    %v982 = vpow.pop %v981
    %v983 = vmul.f32 %v972, 1.442695
    %v984 = vpow.pop %v983
    %v985 = vmul.f32 %v973, 1.442695
    %v986 = vpow.pop %v985
    %v987 = vmul.f32 %v974, 1.442695
    %v988 = vpow.pop %v987
    %v989 = vmul.f32 %v975, 1.442695
    %v990 = vpow.pop %v989
    %v991 = vmul.f32 %v976, 1.442695
    %v992 = vpow.pop %v991
    %v993 = vsel %vm384, %v978, 0.0
    %994 = vadd.xlane.f32.xlu0 %v993
    %v995 = vpop.xlane.xlu0 %994
    %v996 = vsel %vm384, %v980, 0.0
    %997 = vadd.xlane.f32.xlu0 %v996
    %v998 = vpop.xlane.xlu0 %997
    %v999 = vsel %vm384, %v982, 0.0
    %1000 = vadd.xlane.f32.xlu0 %v999
    %v1001 = vpop.xlane.xlu0 %1000
    %v1002 = vsel %vm384, %v984, 0.0
    %1003 = vadd.xlane.f32.xlu0 %v1002
    %v1004 = vpop.xlane.xlu0 %1003
    %v1005 = vsel %vm384, %v986, 0.0
    %1006 = vadd.xlane.f32.xlu0 %v1005
    %v1007 = vpop.xlane.xlu0 %1006
    %v1008 = vsel %vm384, %v988, 0.0
    %1009 = vadd.xlane.f32.xlu0 %v1008
    %v1010 = vpop.xlane.xlu0 %1009
    %v1011 = vsel %vm384, %v990, 0.0
    %1012 = vadd.xlane.f32.xlu0 %v1011
    %v1013 = vpop.xlane.xlu0 %1012
    %v1014 = vsel %vm384, %v992, 0.0
    %1015 = vadd.xlane.f32.xlu0 %v1014
    %v1016 = vpop.xlane.xlu0 %1015
    %v1017 = vrcp.pop %v995
    %v1018 = vrcp.pop %v998
    %v1019 = vrcp.pop %v1001
    %v1020 = vrcp.pop %v1004
    %v1021 = vrcp.pop %v1007
    %v1022 = vrcp.pop %v1010
    %v1023 = vrcp.pop %v1013
    %v1024 = vrcp.pop %v1016
    %v1025 = vmul.f32 %v978, %v1017
    %v1026 = vmul.f32 %v980, %v1018
    %v1027 = vmul.f32 %v982, %v1019
    %v1028 = vmul.f32 %v984, %v1020
    %v1029 = vmul.f32 %v986, %v1021
    %v1030 = vmul.f32 %v988, %v1022
    %v1031 = vmul.f32 %v990, %v1023
    %v1032 = vmul.f32 %v992, %v1024
    %1033 = vrot.lane.b32.xlu0 %v148, 60
    %v1034 = vpop.permute.xlu0 %1033
    %1035 = vrot.lane.b32.xlu0 %v153, 60
    %v1036 = vpop.permute.xlu0 %1035
    %1037 = vrot.lane.b32.xlu0 %v158, 60
    %v1038 = vpop.permute.xlu0 %1037
    %1039 = vrot.lane.b32.xlu0 %v163, 60
    %v1040 = vpop.permute.xlu0 %1039
    %1041 = vrot.lane.b32.xlu0 %v168, 60
    %v1042 = vpop.permute.xlu0 %1041
    %1043 = vrot.lane.b32.xlu0 %v173, 60
    %v1044 = vpop.permute.xlu0 %1043
    %1045 = vrot.lane.b32.xlu0 %v178, 60
    %v1046 = vpop.permute.xlu0 %1045
    %1047 = vrot.lane.b32.xlu0 %v183, 60
    %v1048 = vpop.permute.xlu0 %1047
    %v1058 = vsel %vm384, %v1025, 0
    %v1061 = vsel %vm384, %v1026, 0
    %v1064 = vsel %vm384, %v1027, 0
    %v1067 = vsel %vm384, %v1028, 0
    %v1070 = vsel %vm384, %v1029, 0
    %v1073 = vsel %vm384, %v1030, 0
    %v1076 = vsel %vm384, %v1031, 0
    %v1079 = vsel %vm384, %v1032, 0
    %1081 = vmatprep.subr.mxu0 0.0
    %1082 = vmatpush1.msra.mxu0 0.0
    %1083 = vmatprep.subr.mxu0 0.0
    %1084 = vmatpush1.msra.mxu0 0.0
    %1085 = vmatprep.subr.mxu0 0.0
    %1086 = vmatpush1.msra.mxu0 0.0
    %1087 = vmatprep.subr.mxu0 0.0
    %1088 = vmatpush1.msra.mxu0 0.0
    %1089 = vmatprep.subr.mxu0 0.0
    %1090 = vmatpush1.msra.mxu0 0.0
    %1091 = vmatprep.subr.mxu0 0.0
    %1092 = vmatpush1.msra.mxu0 0.0
    %1093 = vmatprep.subr.mxu0 0.0
    %1094 = vmatpush1.msra.mxu0 0.0
    %1095 = vmatprep.subr.mxu0 0.0
    %1096 = vmatpush1.msra.mxu0 0.0
    %1097 = vmatprep.subr.mxu0 0.0
    %1098 = vmatpush1.msra.mxu0 %v1048
    %1099 = vmatprep.subr.mxu0 0.0
    %1100 = vmatpush1.msra.mxu0 %v1046
    %1101 = vmatprep.subr.mxu0 0.0
    %1102 = vmatpush1.msra.mxu0 %v1044
    %1103 = vmatprep.subr.mxu0 0.0
    %1104 = vmatpush1.msra.mxu0 %v1042
    %1105 = vmatprep.subr.mxu0 0.0
    %1106 = vmatpush1.msra.mxu0 %v1040
    %1107 = vmatprep.subr.mxu0 0.0
    %1108 = vmatpush1.msra.mxu0 %v1038
    %1109 = vmatprep.subr.mxu0 0.0
    %1110 = vmatpush1.msra.mxu0 %v1036
    %1111 = vmatprep.subr.mxu0 0.0
    %1112 = vmatpush1.msra.mxu0 %v1034
    %1113 = vmatprep.subr.mxu0 0.0
    %1114 = vmatpush2.msra.mxu0 0.0
    %1115 = vmatprep.subr.mxu0 0.0
    %1116 = vmatpush2.msra.mxu0 0.0
    %1117 = vmatprep.subr.mxu0 0.0
    %1118 = vmatpush2.msra.mxu0 0.0
    %1119 = vmatprep.subr.mxu0 0.0
    %1120 = vmatpush2.msra.mxu0 0.0
    %1121 = vmatprep.subr.mxu0 0.0
    %1122 = vmatpush2.msra.mxu0 0.0
    %1123 = vmatprep.subr.mxu0 0.0
    %1124 = vmatpush2.msra.mxu0 0.0
    %1125 = vmatprep.subr.mxu0 0.0
    %1126 = vmatpush2.msra.mxu0 0.0
    %1127 = vmatprep.subr.mxu0 0.0
    %1128 = vmatpush2.msra.mxu0 0.0
    %1129 = vmatprep.subr.mxu0 0.0
    %1130 = vmatpush2.msra.mxu0 0.0
    %1131 = vmatprep.subr.mxu0 0.0
    %1132 = vmatpush2.msra.mxu0 0.0
    %1133 = vmatprep.subr.mxu0 0.0
    %1134 = vmatpush2.msra.mxu0 0.0
    %1135 = vmatprep.subr.mxu0 0.0
    %1136 = vmatpush2.msra.mxu0 0.0
    %1137 = vmatprep.subr.mxu0 0.0
    %1138 = vmatpush2.msra.mxu0 0.0
    %1139 = vmatprep.subr.mxu0 0.0
    %1140 = vmatpush2.msra.mxu0 0.0
    %1141 = vmatprep.subr.mxu0 0.0
    %1142 = vmatpush2.msra.mxu0 0.0
    %1143 = vmatprep.subr.mxu0 0.0
    %1144 = vmatpush2.msra.mxu0 0.0
    %1145 = vmatprep.mubr.f32.mxu0 0.0
    %1146 = vmatmul.mubr.f32.gmra.mxu0 %v1058
    %v1147 = vpop.f32.mrf.mxu0
    %v1148 = vadd.f32 0.0, %v1147
    %v1149 = vpop.f32.mrf.mxu0
    %1150 = vmatprep.mubr.f32.mxu0 0.0
    %1151 = vmatmul.mubr.f32.gmra.mxu0 %v1061
    %v1152 = vpop.f32.mrf.mxu0
    %v1153 = vadd.f32 0.0, %v1152
    %v1154 = vpop.f32.mrf.mxu0
    %1155 = vmatprep.mubr.f32.mxu0 0.0
    %1156 = vmatmul.mubr.f32.gmra.mxu0 %v1064
    %v1157 = vpop.f32.mrf.mxu0
    %v1158 = vadd.f32 0.0, %v1157
    %v1159 = vpop.f32.mrf.mxu0
    %1160 = vmatprep.mubr.f32.mxu0 0.0
    %1161 = vmatmul.mubr.f32.gmra.mxu0 %v1067
    %v1162 = vpop.f32.mrf.mxu0
    %v1163 = vadd.f32 0.0, %v1162
    %v1164 = vpop.f32.mrf.mxu0
    %1165 = vmatprep.mubr.f32.mxu0 0.0
    %1166 = vmatmul.mubr.f32.gmra.mxu0 %v1070
    %v1167 = vpop.f32.mrf.mxu0
    %v1168 = vadd.f32 0.0, %v1167
    %v1169 = vpop.f32.mrf.mxu0
    %1170 = vmatprep.mubr.f32.mxu0 0.0
    %1171 = vmatmul.mubr.f32.gmra.mxu0 %v1073
    %v1172 = vpop.f32.mrf.mxu0
    %v1173 = vadd.f32 0.0, %v1172
    %v1174 = vpop.f32.mrf.mxu0
    %1175 = vmatprep.mubr.f32.mxu0 0.0
    %1176 = vmatmul.mubr.f32.gmra.mxu0 %v1076
    %v1177 = vpop.f32.mrf.mxu0
    %v1178 = vadd.f32 0.0, %v1177
    %v1179 = vpop.f32.mrf.mxu0
    %1180 = vmatprep.mubr.f32.mxu0 0.0
    %1181 = vmatmul.mubr.f32.gmra.mxu0 %v1079
    %v1182 = vpop.f32.mrf.mxu0
    %v1183 = vadd.f32 0.0, %v1182
    %v1184 = vpop.f32.mrf.mxu0
    %1185 = vdwg.mxu0
    %v1186 = vrot.slane %v194, 4
    %v1188 = vsel %vm238, %v1148, 0
    %v1191 = vsel %vm238, %v1153, 0
    %v1194 = vsel %vm238, %v1158, 0
    %v1197 = vsel %vm238, %v1163, 0
    %v1200 = vsel %vm238, %v1168, 0
    %v1203 = vsel %vm238, %v1173, 0
    %v1206 = vsel %vm238, %v1178, 0
    %v1209 = vsel %vm238, %v1183, 0
    %v1211 = vsel %vm650, %v1186, 0
    %1213 = vmatprep.subr.mxu0 0.0
    %1214 = vmatpush1.msra.mxu0 0.0
    %1215 = vmatprep.subr.mxu0 0.0
    %1216 = vmatpush1.msra.mxu0 0.0
    %1217 = vmatprep.subr.mxu0 0.0
    %1218 = vmatpush1.msra.mxu0 0.0
    %1219 = vmatprep.subr.mxu0 0.0
    %1220 = vmatpush1.msra.mxu0 0.0
    %1221 = vmatprep.subr.mxu0 0.0
    %1222 = vmatpush1.msra.mxu0 0.0
    %1223 = vmatprep.subr.mxu0 0.0
    %1224 = vmatpush1.msra.mxu0 0.0
    %1225 = vmatprep.subr.mxu0 0.0
    %1226 = vmatpush1.msra.mxu0 0.0
    %1227 = vmatprep.subr.mxu0 0.0
    %1228 = vmatpush1.msra.mxu0 0.0
    %1229 = vmatprep.subr.mxu0 0.0
    %1230 = vmatpush1.msra.mxu0 0.0
    %1231 = vmatprep.subr.mxu0 0.0
    %1232 = vmatpush1.msra.mxu0 0.0
    %1233 = vmatprep.subr.mxu0 0.0
    %1234 = vmatpush1.msra.mxu0 0.0
    %1235 = vmatprep.subr.mxu0 0.0
    %1236 = vmatpush1.msra.mxu0 0.0
    %1237 = vmatprep.subr.mxu0 0.0
    %1238 = vmatpush1.msra.mxu0 0.0
    %1239 = vmatprep.subr.mxu0 0.0
    %1240 = vmatpush1.msra.mxu0 0.0
    %1241 = vmatprep.subr.mxu0 0.0
    %1242 = vmatpush1.msra.mxu0 0.0
    %1243 = vmatprep.subr.mxu0 0.0
    %1244 = vmatpush1.msra.mxu0 %v1211
    %1245 = vmatprep.subr.mxu0 0.0
    %1246 = vmatpush2.msra.mxu0 0.0
    %1247 = vmatprep.subr.mxu0 0.0
    %1248 = vmatpush2.msra.mxu0 0.0
    %1249 = vmatprep.subr.mxu0 0.0
    %1250 = vmatpush2.msra.mxu0 0.0
    %1251 = vmatprep.subr.mxu0 0.0
    %1252 = vmatpush2.msra.mxu0 0.0
    %1253 = vmatprep.subr.mxu0 0.0
    %1254 = vmatpush2.msra.mxu0 0.0
    %1255 = vmatprep.subr.mxu0 0.0
    %1256 = vmatpush2.msra.mxu0 0.0
    %1257 = vmatprep.subr.mxu0 0.0
    %1258 = vmatpush2.msra.mxu0 0.0
    %1259 = vmatprep.subr.mxu0 0.0
    %1260 = vmatpush2.msra.mxu0 0.0
    %1261 = vmatprep.subr.mxu0 0.0
    %1262 = vmatpush2.msra.mxu0 0.0
    %1263 = vmatprep.subr.mxu0 0.0
    %1264 = vmatpush2.msra.mxu0 0.0
    %1265 = vmatprep.subr.mxu0 0.0
    %1266 = vmatpush2.msra.mxu0 0.0
    %1267 = vmatprep.subr.mxu0 0.0
    %1268 = vmatpush2.msra.mxu0 0.0
    %1269 = vmatprep.subr.mxu0 0.0
    %1270 = vmatpush2.msra.mxu0 0.0
    %1271 = vmatprep.subr.mxu0 0.0
    %1272 = vmatpush2.msra.mxu0 0.0
    %1273 = vmatprep.subr.mxu0 0.0
    %1274 = vmatpush2.msra.mxu0 0.0
    %1275 = vmatprep.subr.mxu0 0.0
    %1276 = vmatpush2.msra.mxu0 0.0
    %1277 = vmatprep.mubr.f32.mxu0 0.0
    %1278 = vmatmul.mubr.f32.gmra.mxu0 %v1188
    %v1279 = vpop.f32.mrf.mxu0
    %v1280 = vadd.f32 0.0, %v1279
    %v1281 = vpop.f32.mrf.mxu0
    %1282 = vmatprep.mubr.f32.mxu0 0.0
    %1283 = vmatmul.mubr.f32.gmra.mxu0 %v1191
    %v1284 = vpop.f32.mrf.mxu0
    %v1285 = vadd.f32 0.0, %v1284
    %v1286 = vpop.f32.mrf.mxu0
    %1287 = vmatprep.mubr.f32.mxu0 0.0
    %1288 = vmatmul.mubr.f32.gmra.mxu0 %v1194
    %v1289 = vpop.f32.mrf.mxu0
    %v1290 = vadd.f32 0.0, %v1289
    %v1291 = vpop.f32.mrf.mxu0
    %1292 = vmatprep.mubr.f32.mxu0 0.0
    %1293 = vmatmul.mubr.f32.gmra.mxu0 %v1197
    %v1294 = vpop.f32.mrf.mxu0
    %v1295 = vadd.f32 0.0, %v1294
    %v1296 = vpop.f32.mrf.mxu0
    %1297 = vmatprep.mubr.f32.mxu0 0.0
    %1298 = vmatmul.mubr.f32.gmra.mxu0 %v1200
    %v1299 = vpop.f32.mrf.mxu0
    %v1300 = vadd.f32 0.0, %v1299
    %v1301 = vpop.f32.mrf.mxu0
    %1302 = vmatprep.mubr.f32.mxu0 0.0
    %1303 = vmatmul.mubr.f32.gmra.mxu0 %v1203
    %v1304 = vpop.f32.mrf.mxu0
    %v1305 = vadd.f32 0.0, %v1304
    %v1306 = vpop.f32.mrf.mxu0
    %1307 = vmatprep.mubr.f32.mxu0 0.0
    %1308 = vmatmul.mubr.f32.gmra.mxu0 %v1206
    %v1309 = vpop.f32.mrf.mxu0
    %v1310 = vadd.f32 0.0, %v1309
    %v1311 = vpop.f32.mrf.mxu0
    %1312 = vmatprep.mubr.f32.mxu0 0.0
    %1313 = vmatmul.mubr.f32.gmra.mxu0 %v1209
    %v1314 = vpop.f32.mrf.mxu0
    %v1315 = vadd.f32 0.0, %v1314
    %v1316 = vpop.f32.mrf.mxu0
    %1317 = vdwg.mxu0
    %v1318 = vadd.f32 %v759, %v1280
    %v1319 = vadd.f32 %v760, %v1285
    %v1320 = vadd.f32 %v761, %v1290
    %v1321 = vadd.f32 %v762, %v1295
    %v1322 = vadd.f32 %v763, %v1300
    %v1323 = vadd.f32 %v764, %v1305
    %v1324 = vadd.f32 %v765, %v1310
    %v1325 = vadd.f32 %v766, %v1315
    %s1326 = scalar_lea.vmem [#allocation2], 128
    %v1327 = vld [vmem:[%s1326] sm:$0xff]
    %v1328 = vld [vmem:[%s1326 + $0x8] sm:$0xff]
    %v1329 = vld [vmem:[%s1326 + $0x10] sm:$0xff]
    %v1330 = vld [vmem:[%s1326 + $0x18] sm:$0xff]
    %v1331 = vld [vmem:[%s1326 + $0x20] sm:$0xff]
    %v1332 = vld [vmem:[%s1326 + $0x28] sm:$0xff]
    %v1333 = vld [vmem:[%s1326 + $0x30] sm:$0xff]
    %v1334 = vld [vmem:[%s1326 + $0x38] sm:$0xff]
    %1335 = vrot.lane.b32.xlu0 %v186, 120
    %v1336 = vpop.permute.xlu0 %1335
    %1337 = vrot.lane.b32.xlu0 %v187, 120
    %v1338 = vpop.permute.xlu0 %1337
    %1339 = vrot.lane.b32.xlu0 %v188, 120
    %v1340 = vpop.permute.xlu0 %1339
    %1341 = vrot.lane.b32.xlu0 %v189, 120
    %v1342 = vpop.permute.xlu0 %1341
    %1343 = vrot.lane.b32.xlu0 %v190, 120
    %v1344 = vpop.permute.xlu0 %1343
    %1345 = vrot.lane.b32.xlu0 %v191, 120
    %v1346 = vpop.permute.xlu0 %1345
    %1347 = vrot.lane.b32.xlu0 %v192, 120
    %v1348 = vpop.permute.xlu0 %1347
    %1349 = vrot.lane.b32.xlu0 %v193, 120
    %v1350 = vpop.permute.xlu0 %1349
    %1351 = vrot.lane.b32.xlu0 %v148, 88
    %v1352 = vpop.permute.xlu0 %1351
    %1353 = vrot.lane.b32.xlu0 %v153, 88
    %v1354 = vpop.permute.xlu0 %1353
    %1355 = vrot.lane.b32.xlu0 %v158, 88
    %v1356 = vpop.permute.xlu0 %1355
    %1357 = vrot.lane.b32.xlu0 %v163, 88
    %v1358 = vpop.permute.xlu0 %1357
    %1359 = vrot.lane.b32.xlu0 %v168, 88
    %v1360 = vpop.permute.xlu0 %1359
    %1361 = vrot.lane.b32.xlu0 %v173, 88
    %v1362 = vpop.permute.xlu0 %1361
    %1363 = vrot.lane.b32.xlu0 %v178, 88
    %v1364 = vpop.permute.xlu0 %1363
    %1365 = vrot.lane.b32.xlu0 %v183, 88
    %v1366 = vpop.permute.xlu0 %1365
    %v1367 = vsel %vm238, %v1336, 0
    %v1369 = vsel %vm238, %v1338, 0
    %v1371 = vsel %vm238, %v1340, 0
    %v1373 = vsel %vm238, %v1342, 0
    %v1375 = vsel %vm238, %v1344, 0
    %v1377 = vsel %vm238, %v1346, 0
    %v1379 = vsel %vm238, %v1348, 0
    %v1381 = vsel %vm238, %v1350, 0
    %v1383 = vsel %vm238, %v1352, 0
    %v1385 = vsel %vm238, %v1354, 0
    %v1387 = vsel %vm238, %v1356, 0
    %v1389 = vsel %vm238, %v1358, 0
    %v1391 = vsel %vm238, %v1360, 0
    %v1393 = vsel %vm238, %v1362, 0
    %v1395 = vsel %vm238, %v1364, 0
    %v1397 = vsel %vm238, %v1366, 0
    %1399 = vmatprep.subr.mxu0 0.0
    %1400 = vmatpush1.xpose.msra.mxu0 0.0
    %1401 = vmatprep.subr.mxu0 0.0
    %1402 = vmatpush1.xpose.msra.mxu0 0.0
    %1403 = vmatprep.subr.mxu0 0.0
    %1404 = vmatpush1.xpose.msra.mxu0 0.0
    %1405 = vmatprep.subr.mxu0 0.0
    %1406 = vmatpush1.xpose.msra.mxu0 0.0
    %1407 = vmatprep.subr.mxu0 0.0
    %1408 = vmatpush1.xpose.msra.mxu0 0.0
    %1409 = vmatprep.subr.mxu0 0.0
    %1410 = vmatpush1.xpose.msra.mxu0 0.0
    %1411 = vmatprep.subr.mxu0 0.0
    %1412 = vmatpush1.xpose.msra.mxu0 0.0
    %1413 = vmatprep.subr.mxu0 0.0
    %1414 = vmatpush1.xpose.msra.mxu0 0.0
    %1415 = vmatprep.subr.mxu0 0.0
    %1416 = vmatpush1.xpose.msra.mxu0 %v1397
    %1417 = vmatprep.subr.mxu0 0.0
    %1418 = vmatpush1.xpose.msra.mxu0 %v1395
    %1419 = vmatprep.subr.mxu0 0.0
    %1420 = vmatpush1.xpose.msra.mxu0 %v1393
    %1421 = vmatprep.subr.mxu0 0.0
    %1422 = vmatpush1.xpose.msra.mxu0 %v1391
    %1423 = vmatprep.subr.mxu0 0.0
    %1424 = vmatpush1.xpose.msra.mxu0 %v1389
    %1425 = vmatprep.subr.mxu0 0.0
    %1426 = vmatpush1.xpose.msra.mxu0 %v1387
    %1427 = vmatprep.subr.mxu0 0.0
    %1428 = vmatpush1.xpose.msra.mxu0 %v1385
    %1429 = vmatprep.subr.mxu0 0.0
    %1430 = vmatpush1.xpose.msra.mxu0 %v1383
    %1431 = vmatprep.subr.mxu0 0.0
    %1432 = vmatpush2.xpose.msra.mxu0 0.0
    %1433 = vmatprep.subr.mxu0 0.0
    %1434 = vmatpush2.xpose.msra.mxu0 0.0
    %1435 = vmatprep.subr.mxu0 0.0
    %1436 = vmatpush2.xpose.msra.mxu0 0.0
    %1437 = vmatprep.subr.mxu0 0.0
    %1438 = vmatpush2.xpose.msra.mxu0 0.0
    %1439 = vmatprep.subr.mxu0 0.0
    %1440 = vmatpush2.xpose.msra.mxu0 0.0
    %1441 = vmatprep.subr.mxu0 0.0
    %1442 = vmatpush2.xpose.msra.mxu0 0.0
    %1443 = vmatprep.subr.mxu0 0.0
    %1444 = vmatpush2.xpose.msra.mxu0 0.0
    %1445 = vmatprep.subr.mxu0 0.0
    %1446 = vmatpush2.xpose.msra.mxu0 0.0
    %1447 = vmatprep.subr.mxu0 0.0
    %1448 = vmatpush2.xpose.msra.mxu0 0.0
    %1449 = vmatprep.subr.mxu0 0.0
    %1450 = vmatpush2.xpose.msra.mxu0 0.0
    %1451 = vmatprep.subr.mxu0 0.0
    %1452 = vmatpush2.xpose.msra.mxu0 0.0
    %1453 = vmatprep.subr.mxu0 0.0
    %1454 = vmatpush2.xpose.msra.mxu0 0.0
    %1455 = vmatprep.subr.mxu0 0.0
    %1456 = vmatpush2.xpose.msra.mxu0 0.0
    %1457 = vmatprep.subr.mxu0 0.0
    %1458 = vmatpush2.xpose.msra.mxu0 0.0
    %1459 = vmatprep.subr.mxu0 0.0
    %1460 = vmatpush2.xpose.msra.mxu0 0.0
    %1461 = vmatprep.subr.mxu0 0.0
    %1462 = vmatpush2.xpose.msra.mxu0 0.0
    %1463 = vmatprep.mubr.f32.mxu0 0.0
    %1464 = vmatmul.mubr.f32.gmra.mxu0 %v1367
    %v1465 = vpop.f32.mrf.mxu0
    %v1466 = vadd.f32 %v1327, %v1465
    %v1467 = vpop.f32.mrf.mxu0
    %1468 = vmatprep.mubr.f32.mxu0 0.0
    %1469 = vmatmul.mubr.f32.gmra.mxu0 %v1369
    %v1470 = vpop.f32.mrf.mxu0
    %v1471 = vadd.f32 %v1328, %v1470
    %v1472 = vpop.f32.mrf.mxu0
    %1473 = vmatprep.mubr.f32.mxu0 0.0
    %1474 = vmatmul.mubr.f32.gmra.mxu0 %v1371
    %v1475 = vpop.f32.mrf.mxu0
    %v1476 = vadd.f32 %v1329, %v1475
    %v1477 = vpop.f32.mrf.mxu0
    %1478 = vmatprep.mubr.f32.mxu0 0.0
    %1479 = vmatmul.mubr.f32.gmra.mxu0 %v1373
    %v1480 = vpop.f32.mrf.mxu0
    %v1481 = vadd.f32 %v1330, %v1480
    %v1482 = vpop.f32.mrf.mxu0
    %1483 = vmatprep.mubr.f32.mxu0 0.0
    %1484 = vmatmul.mubr.f32.gmra.mxu0 %v1375
    %v1485 = vpop.f32.mrf.mxu0
    %v1486 = vadd.f32 %v1331, %v1485
    %v1487 = vpop.f32.mrf.mxu0
    %1488 = vmatprep.mubr.f32.mxu0 0.0
    %1489 = vmatmul.mubr.f32.gmra.mxu0 %v1377
    %v1490 = vpop.f32.mrf.mxu0
    %v1491 = vadd.f32 %v1332, %v1490
    %v1492 = vpop.f32.mrf.mxu0
    %1493 = vmatprep.mubr.f32.mxu0 0.0
    %1494 = vmatmul.mubr.f32.gmra.mxu0 %v1379
    %v1495 = vpop.f32.mrf.mxu0
    %v1496 = vadd.f32 %v1333, %v1495
    %v1497 = vpop.f32.mrf.mxu0
    %1498 = vmatprep.mubr.f32.mxu0 0.0
    %1499 = vmatmul.mubr.f32.gmra.mxu0 %v1381
    %v1500 = vpop.f32.mrf.mxu0
    %v1501 = vadd.f32 %v1334, %v1500
    %v1502 = vpop.f32.mrf.mxu0
    %1503 = vdwg.mxu0
    %v1504 = vsel %vm384, %v1466, -inf
    %1505 = vmax.xlane.f32.xlu0 %v1504
    %v1506 = vpop.xlane.xlu0 %1505
    %v1507 = vsel %vm384, %v1471, -inf
    %1508 = vmax.xlane.f32.xlu0 %v1507
    %v1509 = vpop.xlane.xlu0 %1508
    %v1510 = vsel %vm384, %v1476, -inf
    %1511 = vmax.xlane.f32.xlu0 %v1510
    %v1512 = vpop.xlane.xlu0 %1511
    %v1513 = vsel %vm384, %v1481, -inf
    %1514 = vmax.xlane.f32.xlu0 %v1513
    %v1515 = vpop.xlane.xlu0 %1514
    %v1516 = vsel %vm384, %v1486, -inf
    %1517 = vmax.xlane.f32.xlu0 %v1516
    %v1518 = vpop.xlane.xlu0 %1517
    %v1519 = vsel %vm384, %v1491, -inf
    %1520 = vmax.xlane.f32.xlu0 %v1519
    %v1521 = vpop.xlane.xlu0 %1520
    %v1522 = vsel %vm384, %v1496, -inf
    %1523 = vmax.xlane.f32.xlu0 %v1522
    %v1524 = vpop.xlane.xlu0 %1523
    %v1525 = vsel %vm384, %v1501, -inf
    %1526 = vmax.xlane.f32.xlu0 %v1525
    %v1527 = vpop.xlane.xlu0 %1526
    %v1528 = vsub.f32 %v1466, %v1506
    %v1529 = vsub.f32 %v1471, %v1509
    %v1530 = vsub.f32 %v1476, %v1512
    %v1531 = vsub.f32 %v1481, %v1515
    %v1532 = vsub.f32 %v1486, %v1518
    %v1533 = vsub.f32 %v1491, %v1521
    %v1534 = vsub.f32 %v1496, %v1524
    %v1535 = vsub.f32 %v1501, %v1527
    %v1536 = vmul.f32 %v1528, 1.442695
    %v1537 = vpow.pop %v1536
    %v1538 = vmul.f32 %v1529, 1.442695
    %v1539 = vpow.pop %v1538
    %v1540 = vmul.f32 %v1530, 1.442695
    %v1541 = vpow.pop %v1540
    %v1542 = vmul.f32 %v1531, 1.442695
    %v1543 = vpow.pop %v1542
    %v1544 = vmul.f32 %v1532, 1.442695
    %v1545 = vpow.pop %v1544
    %v1546 = vmul.f32 %v1533, 1.442695
    %v1547 = vpow.pop %v1546
    %v1548 = vmul.f32 %v1534, 1.442695
    %v1549 = vpow.pop %v1548
    %v1550 = vmul.f32 %v1535, 1.442695
    %v1551 = vpow.pop %v1550
    %v1552 = vsel %vm384, %v1537, 0.0
    %1553 = vadd.xlane.f32.xlu0 %v1552
    %v1554 = vpop.xlane.xlu0 %1553
    %v1555 = vsel %vm384, %v1539, 0.0
    %1556 = vadd.xlane.f32.xlu0 %v1555
    %v1557 = vpop.xlane.xlu0 %1556
    %v1558 = vsel %vm384, %v1541, 0.0
    %1559 = vadd.xlane.f32.xlu0 %v1558
    %v1560 = vpop.xlane.xlu0 %1559
    %v1561 = vsel %vm384, %v1543, 0.0
    %1562 = vadd.xlane.f32.xlu0 %v1561
    %v1563 = vpop.xlane.xlu0 %1562
    %v1564 = vsel %vm384, %v1545, 0.0
    %1565 = vadd.xlane.f32.xlu0 %v1564
    %v1566 = vpop.xlane.xlu0 %1565
    %v1567 = vsel %vm384, %v1547, 0.0
    %1568 = vadd.xlane.f32.xlu0 %v1567
    %v1569 = vpop.xlane.xlu0 %1568
    %v1570 = vsel %vm384, %v1549, 0.0
    %1571 = vadd.xlane.f32.xlu0 %v1570
    %v1572 = vpop.xlane.xlu0 %1571
    %v1573 = vsel %vm384, %v1551, 0.0
    %1574 = vadd.xlane.f32.xlu0 %v1573
    %v1575 = vpop.xlane.xlu0 %1574
    %v1576 = vrcp.pop %v1554
    %v1577 = vrcp.pop %v1557
    %v1578 = vrcp.pop %v1560
    %v1579 = vrcp.pop %v1563
    %v1580 = vrcp.pop %v1566
    %v1581 = vrcp.pop %v1569
    %v1582 = vrcp.pop %v1572
    %v1583 = vrcp.pop %v1575
    %v1584 = vmul.f32 %v1537, %v1576
    %v1585 = vmul.f32 %v1539, %v1577
    %v1586 = vmul.f32 %v1541, %v1578
    %v1587 = vmul.f32 %v1543, %v1579
    %v1588 = vmul.f32 %v1545, %v1580
    %v1589 = vmul.f32 %v1547, %v1581
    %v1590 = vmul.f32 %v1549, %v1582
    %v1591 = vmul.f32 %v1551, %v1583
    %1592 = vrot.lane.b32.xlu0 %v148, 56
    %v1593 = vpop.permute.xlu0 %1592
    %1594 = vrot.lane.b32.xlu0 %v153, 56
    %v1595 = vpop.permute.xlu0 %1594
    %1596 = vrot.lane.b32.xlu0 %v158, 56
    %v1597 = vpop.permute.xlu0 %1596
    %1598 = vrot.lane.b32.xlu0 %v163, 56
    %v1599 = vpop.permute.xlu0 %1598
    %1600 = vrot.lane.b32.xlu0 %v168, 56
    %v1601 = vpop.permute.xlu0 %1600
    %1602 = vrot.lane.b32.xlu0 %v173, 56
    %v1603 = vpop.permute.xlu0 %1602
    %1604 = vrot.lane.b32.xlu0 %v178, 56
    %v1605 = vpop.permute.xlu0 %1604
    %1606 = vrot.lane.b32.xlu0 %v183, 56
    %v1607 = vpop.permute.xlu0 %1606
    %v1617 = vsel %vm384, %v1584, 0
    %v1620 = vsel %vm384, %v1585, 0
    %v1623 = vsel %vm384, %v1586, 0
    %v1626 = vsel %vm384, %v1587, 0
    %v1629 = vsel %vm384, %v1588, 0
    %v1632 = vsel %vm384, %v1589, 0
    %v1635 = vsel %vm384, %v1590, 0
    %v1638 = vsel %vm384, %v1591, 0
    %1640 = vmatprep.subr.mxu0 0.0
    %1641 = vmatpush1.msra.mxu0 0.0
    %1642 = vmatprep.subr.mxu0 0.0
    %1643 = vmatpush1.msra.mxu0 0.0
    %1644 = vmatprep.subr.mxu0 0.0
    %1645 = vmatpush1.msra.mxu0 0.0
    %1646 = vmatprep.subr.mxu0 0.0
    %1647 = vmatpush1.msra.mxu0 0.0
    %1648 = vmatprep.subr.mxu0 0.0
    %1649 = vmatpush1.msra.mxu0 0.0
    %1650 = vmatprep.subr.mxu0 0.0
    %1651 = vmatpush1.msra.mxu0 0.0
    %1652 = vmatprep.subr.mxu0 0.0
    %1653 = vmatpush1.msra.mxu0 0.0
    %1654 = vmatprep.subr.mxu0 0.0
    %1655 = vmatpush1.msra.mxu0 0.0
    %1656 = vmatprep.subr.mxu0 0.0
    %1657 = vmatpush1.msra.mxu0 %v1607
    %1658 = vmatprep.subr.mxu0 0.0
    %1659 = vmatpush1.msra.mxu0 %v1605
    %1660 = vmatprep.subr.mxu0 0.0
    %1661 = vmatpush1.msra.mxu0 %v1603
    %1662 = vmatprep.subr.mxu0 0.0
    %1663 = vmatpush1.msra.mxu0 %v1601
    %1664 = vmatprep.subr.mxu0 0.0
    %1665 = vmatpush1.msra.mxu0 %v1599
    %1666 = vmatprep.subr.mxu0 0.0
    %1667 = vmatpush1.msra.mxu0 %v1597
    %1668 = vmatprep.subr.mxu0 0.0
    %1669 = vmatpush1.msra.mxu0 %v1595
    %1670 = vmatprep.subr.mxu0 0.0
    %1671 = vmatpush1.msra.mxu0 %v1593
    %1672 = vmatprep.subr.mxu0 0.0
    %1673 = vmatpush2.msra.mxu0 0.0
    %1674 = vmatprep.subr.mxu0 0.0
    %1675 = vmatpush2.msra.mxu0 0.0
    %1676 = vmatprep.subr.mxu0 0.0
    %1677 = vmatpush2.msra.mxu0 0.0
    %1678 = vmatprep.subr.mxu0 0.0
    %1679 = vmatpush2.msra.mxu0 0.0
    %1680 = vmatprep.subr.mxu0 0.0
    %1681 = vmatpush2.msra.mxu0 0.0
    %1682 = vmatprep.subr.mxu0 0.0
    %1683 = vmatpush2.msra.mxu0 0.0
    %1684 = vmatprep.subr.mxu0 0.0
    %1685 = vmatpush2.msra.mxu0 0.0
    %1686 = vmatprep.subr.mxu0 0.0
    %1687 = vmatpush2.msra.mxu0 0.0
    %1688 = vmatprep.subr.mxu0 0.0
    %1689 = vmatpush2.msra.mxu0 0.0
    %1690 = vmatprep.subr.mxu0 0.0
    %1691 = vmatpush2.msra.mxu0 0.0
    %1692 = vmatprep.subr.mxu0 0.0
    %1693 = vmatpush2.msra.mxu0 0.0
    %1694 = vmatprep.subr.mxu0 0.0
    %1695 = vmatpush2.msra.mxu0 0.0
    %1696 = vmatprep.subr.mxu0 0.0
    %1697 = vmatpush2.msra.mxu0 0.0
    %1698 = vmatprep.subr.mxu0 0.0
    %1699 = vmatpush2.msra.mxu0 0.0
    %1700 = vmatprep.subr.mxu0 0.0
    %1701 = vmatpush2.msra.mxu0 0.0
    %1702 = vmatprep.subr.mxu0 0.0
    %1703 = vmatpush2.msra.mxu0 0.0
    %1704 = vmatprep.mubr.f32.mxu0 0.0
    %1705 = vmatmul.mubr.f32.gmra.mxu0 %v1617
    %v1706 = vpop.f32.mrf.mxu0
    %v1707 = vadd.f32 0.0, %v1706
    %v1708 = vpop.f32.mrf.mxu0
    %1709 = vmatprep.mubr.f32.mxu0 0.0
    %1710 = vmatmul.mubr.f32.gmra.mxu0 %v1620
    %v1711 = vpop.f32.mrf.mxu0
    %v1712 = vadd.f32 0.0, %v1711
    %v1713 = vpop.f32.mrf.mxu0
    %1714 = vmatprep.mubr.f32.mxu0 0.0
    %1715 = vmatmul.mubr.f32.gmra.mxu0 %v1623
    %v1716 = vpop.f32.mrf.mxu0
    %v1717 = vadd.f32 0.0, %v1716
    %v1718 = vpop.f32.mrf.mxu0
    %1719 = vmatprep.mubr.f32.mxu0 0.0
    %1720 = vmatmul.mubr.f32.gmra.mxu0 %v1626
    %v1721 = vpop.f32.mrf.mxu0
    %v1722 = vadd.f32 0.0, %v1721
    %v1723 = vpop.f32.mrf.mxu0
    %1724 = vmatprep.mubr.f32.mxu0 0.0
    %1725 = vmatmul.mubr.f32.gmra.mxu0 %v1629
    %v1726 = vpop.f32.mrf.mxu0
    %v1727 = vadd.f32 0.0, %v1726
    %v1728 = vpop.f32.mrf.mxu0
    %1729 = vmatprep.mubr.f32.mxu0 0.0
    %1730 = vmatmul.mubr.f32.gmra.mxu0 %v1632
    %v1731 = vpop.f32.mrf.mxu0
    %v1732 = vadd.f32 0.0, %v1731
    %v1733 = vpop.f32.mrf.mxu0
    %1734 = vmatprep.mubr.f32.mxu0 0.0
    %1735 = vmatmul.mubr.f32.gmra.mxu0 %v1635
    %v1736 = vpop.f32.mrf.mxu0
    %v1737 = vadd.f32 0.0, %v1736
    %v1738 = vpop.f32.mrf.mxu0
    %1739 = vmatprep.mubr.f32.mxu0 0.0
    %1740 = vmatmul.mubr.f32.gmra.mxu0 %v1638
    %v1741 = vpop.f32.mrf.mxu0
    %v1742 = vadd.f32 0.0, %v1741
    %v1743 = vpop.f32.mrf.mxu0
    %1744 = vdwg.mxu0
    %v1746 = vsel %vm238, %v1707, 0
    %v1749 = vsel %vm238, %v1712, 0
    %v1752 = vsel %vm238, %v1717, 0
    %v1755 = vsel %vm238, %v1722, 0
    %v1758 = vsel %vm238, %v1727, 0
    %v1761 = vsel %vm238, %v1732, 0
    %v1764 = vsel %vm238, %v1737, 0
    %v1767 = vsel %vm238, %v1742, 0
    %v1770 = vsel %vm650, %v195, 0
    %1772 = vmatprep.subr.mxu0 0.0
    %1773 = vmatpush1.msra.mxu0 0.0
    %1774 = vmatprep.subr.mxu0 0.0
    %1775 = vmatpush1.msra.mxu0 0.0
    %1776 = vmatprep.subr.mxu0 0.0
    %1777 = vmatpush1.msra.mxu0 0.0
    %1778 = vmatprep.subr.mxu0 0.0
    %1779 = vmatpush1.msra.mxu0 0.0
    %1780 = vmatprep.subr.mxu0 0.0
    %1781 = vmatpush1.msra.mxu0 0.0
    %1782 = vmatprep.subr.mxu0 0.0
    %1783 = vmatpush1.msra.mxu0 0.0
    %1784 = vmatprep.subr.mxu0 0.0
    %1785 = vmatpush1.msra.mxu0 0.0
    %1786 = vmatprep.subr.mxu0 0.0
    %1787 = vmatpush1.msra.mxu0 0.0
    %1788 = vmatprep.subr.mxu0 0.0
    %1789 = vmatpush1.msra.mxu0 0.0
    %1790 = vmatprep.subr.mxu0 0.0
    %1791 = vmatpush1.msra.mxu0 0.0
    %1792 = vmatprep.subr.mxu0 0.0
    %1793 = vmatpush1.msra.mxu0 0.0
    %1794 = vmatprep.subr.mxu0 0.0
    %1795 = vmatpush1.msra.mxu0 0.0
    %1796 = vmatprep.subr.mxu0 0.0
    %1797 = vmatpush1.msra.mxu0 0.0
    %1798 = vmatprep.subr.mxu0 0.0
    %1799 = vmatpush1.msra.mxu0 0.0
    %1800 = vmatprep.subr.mxu0 0.0
    %1801 = vmatpush1.msra.mxu0 0.0
    %1802 = vmatprep.subr.mxu0 0.0
    %1803 = vmatpush1.msra.mxu0 %v1770
    %1804 = vmatprep.subr.mxu0 0.0
    %1805 = vmatpush2.msra.mxu0 0.0
    %1806 = vmatprep.subr.mxu0 0.0
    %1807 = vmatpush2.msra.mxu0 0.0
    %1808 = vmatprep.subr.mxu0 0.0
    %1809 = vmatpush2.msra.mxu0 0.0
    %1810 = vmatprep.subr.mxu0 0.0
    %1811 = vmatpush2.msra.mxu0 0.0
    %1812 = vmatprep.subr.mxu0 0.0
    %1813 = vmatpush2.msra.mxu0 0.0
    %1814 = vmatprep.subr.mxu0 0.0
    %1815 = vmatpush2.msra.mxu0 0.0
    %1816 = vmatprep.subr.mxu0 0.0
    %1817 = vmatpush2.msra.mxu0 0.0
    %1818 = vmatprep.subr.mxu0 0.0
    %1819 = vmatpush2.msra.mxu0 0.0
    %1820 = vmatprep.subr.mxu0 0.0
    %1821 = vmatpush2.msra.mxu0 0.0
    %1822 = vmatprep.subr.mxu0 0.0
    %1823 = vmatpush2.msra.mxu0 0.0
    %1824 = vmatprep.subr.mxu0 0.0
    %1825 = vmatpush2.msra.mxu0 0.0
    %1826 = vmatprep.subr.mxu0 0.0
    %1827 = vmatpush2.msra.mxu0 0.0
    %1828 = vmatprep.subr.mxu0 0.0
    %1829 = vmatpush2.msra.mxu0 0.0
    %1830 = vmatprep.subr.mxu0 0.0
    %1831 = vmatpush2.msra.mxu0 0.0
    %1832 = vmatprep.subr.mxu0 0.0
    %1833 = vmatpush2.msra.mxu0 0.0
    %1834 = vmatprep.subr.mxu0 0.0
    %1835 = vmatpush2.msra.mxu0 0.0
    %1836 = vmatprep.mubr.f32.mxu0 0.0
    %1837 = vmatmul.mubr.f32.gmra.mxu0 %v1746
    %v1838 = vpop.f32.mrf.mxu0
    %v1839 = vadd.f32 0.0, %v1838
    %v1840 = vpop.f32.mrf.mxu0
    %1841 = vmatprep.mubr.f32.mxu0 0.0
    %1842 = vmatmul.mubr.f32.gmra.mxu0 %v1749
    %v1843 = vpop.f32.mrf.mxu0
    %v1844 = vadd.f32 0.0, %v1843
    %v1845 = vpop.f32.mrf.mxu0
    %1846 = vmatprep.mubr.f32.mxu0 0.0
    %1847 = vmatmul.mubr.f32.gmra.mxu0 %v1752
    %v1848 = vpop.f32.mrf.mxu0
    %v1849 = vadd.f32 0.0, %v1848
    %v1850 = vpop.f32.mrf.mxu0
    %1851 = vmatprep.mubr.f32.mxu0 0.0
    %1852 = vmatmul.mubr.f32.gmra.mxu0 %v1755
    %v1853 = vpop.f32.mrf.mxu0
    %v1854 = vadd.f32 0.0, %v1853
    %v1855 = vpop.f32.mrf.mxu0
    %1856 = vmatprep.mubr.f32.mxu0 0.0
    %1857 = vmatmul.mubr.f32.gmra.mxu0 %v1758
    %v1858 = vpop.f32.mrf.mxu0
    %v1859 = vadd.f32 0.0, %v1858
    %v1860 = vpop.f32.mrf.mxu0
    %1861 = vmatprep.mubr.f32.mxu0 0.0
    %1862 = vmatmul.mubr.f32.gmra.mxu0 %v1761
    %v1863 = vpop.f32.mrf.mxu0
    %v1864 = vadd.f32 0.0, %v1863
    %v1865 = vpop.f32.mrf.mxu0
    %1866 = vmatprep.mubr.f32.mxu0 0.0
    %1867 = vmatmul.mubr.f32.gmra.mxu0 %v1764
    %v1868 = vpop.f32.mrf.mxu0
    %v1869 = vadd.f32 0.0, %v1868
    %v1870 = vpop.f32.mrf.mxu0
    %1871 = vmatprep.mubr.f32.mxu0 0.0
    %1872 = vmatmul.mubr.f32.gmra.mxu0 %v1767
    %v1873 = vpop.f32.mrf.mxu0
    %v1874 = vadd.f32 0.0, %v1873
    %v1875 = vpop.f32.mrf.mxu0
    %1876 = vdwg.mxu0
    %v1877 = vadd.f32 %v1318, %v1839
    %v1878 = vadd.f32 %v1319, %v1844
    %v1879 = vadd.f32 %v1320, %v1849
    %v1880 = vadd.f32 %v1321, %v1854
    %v1881 = vadd.f32 %v1322, %v1859
    %v1882 = vadd.f32 %v1323, %v1864
    %v1883 = vadd.f32 %v1324, %v1869
    %v1884 = vadd.f32 %v1325, %v1874
    %s1885 = scalar_lea.vmem [#allocation2], 192
    %v1886 = vld [vmem:[%s1885] sm:$0xff]
    %v1887 = vld [vmem:[%s1885 + $0x8] sm:$0xff]
    %v1888 = vld [vmem:[%s1885 + $0x10] sm:$0xff]
    %v1889 = vld [vmem:[%s1885 + $0x18] sm:$0xff]
    %v1890 = vld [vmem:[%s1885 + $0x20] sm:$0xff]
    %v1891 = vld [vmem:[%s1885 + $0x28] sm:$0xff]
    %v1892 = vld [vmem:[%s1885 + $0x30] sm:$0xff]
    %v1893 = vld [vmem:[%s1885 + $0x38] sm:$0xff]
    %1894 = vrot.lane.b32.xlu0 %v186, 116
    %v1895 = vpop.permute.xlu0 %1894
    %1896 = vrot.lane.b32.xlu0 %v187, 116
    %v1897 = vpop.permute.xlu0 %1896
    %1898 = vrot.lane.b32.xlu0 %v188, 116
    %v1899 = vpop.permute.xlu0 %1898
    %1900 = vrot.lane.b32.xlu0 %v189, 116
    %v1901 = vpop.permute.xlu0 %1900
    %1902 = vrot.lane.b32.xlu0 %v190, 116
    %v1903 = vpop.permute.xlu0 %1902
    %1904 = vrot.lane.b32.xlu0 %v191, 116
    %v1905 = vpop.permute.xlu0 %1904
    %1906 = vrot.lane.b32.xlu0 %v192, 116
    %v1907 = vpop.permute.xlu0 %1906
    %1908 = vrot.lane.b32.xlu0 %v193, 116
    %v1909 = vpop.permute.xlu0 %1908
    %1910 = vrot.lane.b32.xlu0 %v148, 84
    %v1911 = vpop.permute.xlu0 %1910
    %1912 = vrot.lane.b32.xlu0 %v153, 84
    %v1913 = vpop.permute.xlu0 %1912
    %1914 = vrot.lane.b32.xlu0 %v158, 84
    %v1915 = vpop.permute.xlu0 %1914
    %1916 = vrot.lane.b32.xlu0 %v163, 84
    %v1917 = vpop.permute.xlu0 %1916
    %1918 = vrot.lane.b32.xlu0 %v168, 84
    %v1919 = vpop.permute.xlu0 %1918
    %1920 = vrot.lane.b32.xlu0 %v173, 84
    %v1921 = vpop.permute.xlu0 %1920
    %1922 = vrot.lane.b32.xlu0 %v178, 84
    %v1923 = vpop.permute.xlu0 %1922
    %1924 = vrot.lane.b32.xlu0 %v183, 84
    %v1925 = vpop.permute.xlu0 %1924
    %v1926 = vsel %vm238, %v1895, 0
    %v1928 = vsel %vm238, %v1897, 0
    %v1930 = vsel %vm238, %v1899, 0
    %v1932 = vsel %vm238, %v1901, 0
    %v1934 = vsel %vm238, %v1903, 0
    %v1936 = vsel %vm238, %v1905, 0
    %v1938 = vsel %vm238, %v1907, 0
    %v1940 = vsel %vm238, %v1909, 0
    %v1942 = vsel %vm238, %v1911, 0
    %v1944 = vsel %vm238, %v1913, 0
    %v1946 = vsel %vm238, %v1915, 0
    %v1948 = vsel %vm238, %v1917, 0
    %v1950 = vsel %vm238, %v1919, 0
    %v1952 = vsel %vm238, %v1921, 0
    %v1954 = vsel %vm238, %v1923, 0
    %v1956 = vsel %vm238, %v1925, 0
    %1958 = vmatprep.subr.mxu0 0.0
    %1959 = vmatpush1.xpose.msra.mxu0 0.0
    %1960 = vmatprep.subr.mxu0 0.0
    %1961 = vmatpush1.xpose.msra.mxu0 0.0
    %1962 = vmatprep.subr.mxu0 0.0
    %1963 = vmatpush1.xpose.msra.mxu0 0.0
    %1964 = vmatprep.subr.mxu0 0.0
    %1965 = vmatpush1.xpose.msra.mxu0 0.0
    %1966 = vmatprep.subr.mxu0 0.0
    %1967 = vmatpush1.xpose.msra.mxu0 0.0
    %1968 = vmatprep.subr.mxu0 0.0
    %1969 = vmatpush1.xpose.msra.mxu0 0.0
    %1970 = vmatprep.subr.mxu0 0.0
    %1971 = vmatpush1.xpose.msra.mxu0 0.0
    %1972 = vmatprep.subr.mxu0 0.0
    %1973 = vmatpush1.xpose.msra.mxu0 0.0
    %1974 = vmatprep.subr.mxu0 0.0
    %1975 = vmatpush1.xpose.msra.mxu0 %v1956
    %1976 = vmatprep.subr.mxu0 0.0
    %1977 = vmatpush1.xpose.msra.mxu0 %v1954
    %1978 = vmatprep.subr.mxu0 0.0
    %1979 = vmatpush1.xpose.msra.mxu0 %v1952
    %1980 = vmatprep.subr.mxu0 0.0
    %1981 = vmatpush1.xpose.msra.mxu0 %v1950
    %1982 = vmatprep.subr.mxu0 0.0
    %1983 = vmatpush1.xpose.msra.mxu0 %v1948
    %1984 = vmatprep.subr.mxu0 0.0
    %1985 = vmatpush1.xpose.msra.mxu0 %v1946
    %1986 = vmatprep.subr.mxu0 0.0
    %1987 = vmatpush1.xpose.msra.mxu0 %v1944
    %1988 = vmatprep.subr.mxu0 0.0
    %1989 = vmatpush1.xpose.msra.mxu0 %v1942
    %1990 = vmatprep.subr.mxu0 0.0
    %1991 = vmatpush2.xpose.msra.mxu0 0.0
    %1992 = vmatprep.subr.mxu0 0.0
    %1993 = vmatpush2.xpose.msra.mxu0 0.0
    %1994 = vmatprep.subr.mxu0 0.0
    %1995 = vmatpush2.xpose.msra.mxu0 0.0
    %1996 = vmatprep.subr.mxu0 0.0
    %1997 = vmatpush2.xpose.msra.mxu0 0.0
    %1998 = vmatprep.subr.mxu0 0.0
    %1999 = vmatpush2.xpose.msra.mxu0 0.0
    %2000 = vmatprep.subr.mxu0 0.0
    %2001 = vmatpush2.xpose.msra.mxu0 0.0
    %2002 = vmatprep.subr.mxu0 0.0
    %2003 = vmatpush2.xpose.msra.mxu0 0.0
    %2004 = vmatprep.subr.mxu0 0.0
    %2005 = vmatpush2.xpose.msra.mxu0 0.0
    %2006 = vmatprep.subr.mxu0 0.0
    %2007 = vmatpush2.xpose.msra.mxu0 0.0
    %2008 = vmatprep.subr.mxu0 0.0
    %2009 = vmatpush2.xpose.msra.mxu0 0.0
    %2010 = vmatprep.subr.mxu0 0.0
    %2011 = vmatpush2.xpose.msra.mxu0 0.0
    %2012 = vmatprep.subr.mxu0 0.0
    %2013 = vmatpush2.xpose.msra.mxu0 0.0
    %2014 = vmatprep.subr.mxu0 0.0
    %2015 = vmatpush2.xpose.msra.mxu0 0.0
    %2016 = vmatprep.subr.mxu0 0.0
    %2017 = vmatpush2.xpose.msra.mxu0 0.0
    %2018 = vmatprep.subr.mxu0 0.0
    %2019 = vmatpush2.xpose.msra.mxu0 0.0
    %2020 = vmatprep.subr.mxu0 0.0
    %2021 = vmatpush2.xpose.msra.mxu0 0.0
    %2022 = vmatprep.mubr.f32.mxu0 0.0
    %2023 = vmatmul.mubr.f32.gmra.mxu0 %v1926
    %v2024 = vpop.f32.mrf.mxu0
    %v2025 = vadd.f32 %v1886, %v2024
    %v2026 = vpop.f32.mrf.mxu0
    %2027 = vmatprep.mubr.f32.mxu0 0.0
    %2028 = vmatmul.mubr.f32.gmra.mxu0 %v1928
    %v2029 = vpop.f32.mrf.mxu0
    %v2030 = vadd.f32 %v1887, %v2029
    %v2031 = vpop.f32.mrf.mxu0
    %2032 = vmatprep.mubr.f32.mxu0 0.0
    %2033 = vmatmul.mubr.f32.gmra.mxu0 %v1930
    %v2034 = vpop.f32.mrf.mxu0
    %v2035 = vadd.f32 %v1888, %v2034
    %v2036 = vpop.f32.mrf.mxu0
    %2037 = vmatprep.mubr.f32.mxu0 0.0
    %2038 = vmatmul.mubr.f32.gmra.mxu0 %v1932
    %v2039 = vpop.f32.mrf.mxu0
    %v2040 = vadd.f32 %v1889, %v2039
    %v2041 = vpop.f32.mrf.mxu0
    %2042 = vmatprep.mubr.f32.mxu0 0.0
    %2043 = vmatmul.mubr.f32.gmra.mxu0 %v1934
    %v2044 = vpop.f32.mrf.mxu0
    %v2045 = vadd.f32 %v1890, %v2044
    %v2046 = vpop.f32.mrf.mxu0
    %2047 = vmatprep.mubr.f32.mxu0 0.0
    %2048 = vmatmul.mubr.f32.gmra.mxu0 %v1936
    %v2049 = vpop.f32.mrf.mxu0
    %v2050 = vadd.f32 %v1891, %v2049
    %v2051 = vpop.f32.mrf.mxu0
    %2052 = vmatprep.mubr.f32.mxu0 0.0
    %2053 = vmatmul.mubr.f32.gmra.mxu0 %v1938
    %v2054 = vpop.f32.mrf.mxu0
    %v2055 = vadd.f32 %v1892, %v2054
    %v2056 = vpop.f32.mrf.mxu0
    %2057 = vmatprep.mubr.f32.mxu0 0.0
    %2058 = vmatmul.mubr.f32.gmra.mxu0 %v1940
    %v2059 = vpop.f32.mrf.mxu0
    %v2060 = vadd.f32 %v1893, %v2059
    %v2061 = vpop.f32.mrf.mxu0
    %2062 = vdwg.mxu0
    %v2063 = vsel %vm384, %v2025, -inf
    %2064 = vmax.xlane.f32.xlu0 %v2063
    %v2065 = vpop.xlane.xlu0 %2064
    %v2066 = vsel %vm384, %v2030, -inf
    %2067 = vmax.xlane.f32.xlu0 %v2066
    %v2068 = vpop.xlane.xlu0 %2067
    %v2069 = vsel %vm384, %v2035, -inf
    %2070 = vmax.xlane.f32.xlu0 %v2069
    %v2071 = vpop.xlane.xlu0 %2070
    %v2072 = vsel %vm384, %v2040, -inf
    %2073 = vmax.xlane.f32.xlu0 %v2072
    %v2074 = vpop.xlane.xlu0 %2073
    %v2075 = vsel %vm384, %v2045, -inf
    %2076 = vmax.xlane.f32.xlu0 %v2075
    %v2077 = vpop.xlane.xlu0 %2076
    %v2078 = vsel %vm384, %v2050, -inf
    %2079 = vmax.xlane.f32.xlu0 %v2078
    %v2080 = vpop.xlane.xlu0 %2079
    %v2081 = vsel %vm384, %v2055, -inf
    %2082 = vmax.xlane.f32.xlu0 %v2081
    %v2083 = vpop.xlane.xlu0 %2082
    %v2084 = vsel %vm384, %v2060, -inf
    %2085 = vmax.xlane.f32.xlu0 %v2084
    %v2086 = vpop.xlane.xlu0 %2085
    %v2087 = vsub.f32 %v2025, %v2065
    %v2088 = vsub.f32 %v2030, %v2068
    %v2089 = vsub.f32 %v2035, %v2071
    %v2090 = vsub.f32 %v2040, %v2074
    %v2091 = vsub.f32 %v2045, %v2077
    %v2092 = vsub.f32 %v2050, %v2080
    %v2093 = vsub.f32 %v2055, %v2083
    %v2094 = vsub.f32 %v2060, %v2086
    %v2095 = vmul.f32 %v2087, 1.442695
    %v2096 = vpow.pop %v2095
    %v2097 = vmul.f32 %v2088, 1.442695
    %v2098 = vpow.pop %v2097
    %v2099 = vmul.f32 %v2089, 1.442695
    %v2100 = vpow.pop %v2099
    %v2101 = vmul.f32 %v2090, 1.442695
    %v2102 = vpow.pop %v2101
    %v2103 = vmul.f32 %v2091, 1.442695
    %v2104 = vpow.pop %v2103
    %v2105 = vmul.f32 %v2092, 1.442695
    %v2106 = vpow.pop %v2105
    %v2107 = vmul.f32 %v2093, 1.442695
    %v2108 = vpow.pop %v2107
    %v2109 = vmul.f32 %v2094, 1.442695
    %v2110 = vpow.pop %v2109
    %v2111 = vsel %vm384, %v2096, 0.0
    %2112 = vadd.xlane.f32.xlu0 %v2111
    %v2113 = vpop.xlane.xlu0 %2112
    %v2114 = vsel %vm384, %v2098, 0.0
    %2115 = vadd.xlane.f32.xlu0 %v2114
    %v2116 = vpop.xlane.xlu0 %2115
    %v2117 = vsel %vm384, %v2100, 0.0
    %2118 = vadd.xlane.f32.xlu0 %v2117
    %v2119 = vpop.xlane.xlu0 %2118
    %v2120 = vsel %vm384, %v2102, 0.0
    %2121 = vadd.xlane.f32.xlu0 %v2120
    %v2122 = vpop.xlane.xlu0 %2121
    %v2123 = vsel %vm384, %v2104, 0.0
    %2124 = vadd.xlane.f32.xlu0 %v2123
    %v2125 = vpop.xlane.xlu0 %2124
    %v2126 = vsel %vm384, %v2106, 0.0
    %2127 = vadd.xlane.f32.xlu0 %v2126
    %v2128 = vpop.xlane.xlu0 %2127
    %v2129 = vsel %vm384, %v2108, 0.0
    %2130 = vadd.xlane.f32.xlu0 %v2129
    %v2131 = vpop.xlane.xlu0 %2130
    %v2132 = vsel %vm384, %v2110, 0.0
    %2133 = vadd.xlane.f32.xlu0 %v2132
    %v2134 = vpop.xlane.xlu0 %2133
    %v2135 = vrcp.pop %v2113
    %v2136 = vrcp.pop %v2116
    %v2137 = vrcp.pop %v2119
    %v2138 = vrcp.pop %v2122
    %v2139 = vrcp.pop %v2125
    %v2140 = vrcp.pop %v2128
    %v2141 = vrcp.pop %v2131
    %v2142 = vrcp.pop %v2134
    %v2143 = vmul.f32 %v2096, %v2135
    %v2144 = vmul.f32 %v2098, %v2136
    %v2145 = vmul.f32 %v2100, %v2137
    %v2146 = vmul.f32 %v2102, %v2138
    %v2147 = vmul.f32 %v2104, %v2139
    %v2148 = vmul.f32 %v2106, %v2140
    %v2149 = vmul.f32 %v2108, %v2141
    %v2150 = vmul.f32 %v2110, %v2142
    %2151 = vrot.lane.b32.xlu0 %v148, 52
    %v2152 = vpop.permute.xlu0 %2151
    %2153 = vrot.lane.b32.xlu0 %v153, 52
    %v2154 = vpop.permute.xlu0 %2153
    %2155 = vrot.lane.b32.xlu0 %v158, 52
    %v2156 = vpop.permute.xlu0 %2155
    %2157 = vrot.lane.b32.xlu0 %v163, 52
    %v2158 = vpop.permute.xlu0 %2157
    %2159 = vrot.lane.b32.xlu0 %v168, 52
    %v2160 = vpop.permute.xlu0 %2159
    %2161 = vrot.lane.b32.xlu0 %v173, 52
    %v2162 = vpop.permute.xlu0 %2161
    %2163 = vrot.lane.b32.xlu0 %v178, 52
    %v2164 = vpop.permute.xlu0 %2163
    %2165 = vrot.lane.b32.xlu0 %v183, 52
    %v2166 = vpop.permute.xlu0 %2165
    %v2176 = vsel %vm384, %v2143, 0
    %v2179 = vsel %vm384, %v2144, 0
    %v2182 = vsel %vm384, %v2145, 0
    %v2185 = vsel %vm384, %v2146, 0
    %v2188 = vsel %vm384, %v2147, 0
    %v2191 = vsel %vm384, %v2148, 0
    %v2194 = vsel %vm384, %v2149, 0
    %v2197 = vsel %vm384, %v2150, 0
    %2199 = vmatprep.subr.mxu0 0.0
    %2200 = vmatpush1.msra.mxu0 0.0
    %2201 = vmatprep.subr.mxu0 0.0
    %2202 = vmatpush1.msra.mxu0 0.0
    %2203 = vmatprep.subr.mxu0 0.0
    %2204 = vmatpush1.msra.mxu0 0.0
    %2205 = vmatprep.subr.mxu0 0.0
    %2206 = vmatpush1.msra.mxu0 0.0
    %2207 = vmatprep.subr.mxu0 0.0
    %2208 = vmatpush1.msra.mxu0 0.0
    %2209 = vmatprep.subr.mxu0 0.0
    %2210 = vmatpush1.msra.mxu0 0.0
    %2211 = vmatprep.subr.mxu0 0.0
    %2212 = vmatpush1.msra.mxu0 0.0
    %2213 = vmatprep.subr.mxu0 0.0
    %2214 = vmatpush1.msra.mxu0 0.0
    %2215 = vmatprep.subr.mxu0 0.0
    %2216 = vmatpush1.msra.mxu0 %v2166
    %2217 = vmatprep.subr.mxu0 0.0
    %2218 = vmatpush1.msra.mxu0 %v2164
    %2219 = vmatprep.subr.mxu0 0.0
    %2220 = vmatpush1.msra.mxu0 %v2162
    %2221 = vmatprep.subr.mxu0 0.0
    %2222 = vmatpush1.msra.mxu0 %v2160
    %2223 = vmatprep.subr.mxu0 0.0
    %2224 = vmatpush1.msra.mxu0 %v2158
    %2225 = vmatprep.subr.mxu0 0.0
    %2226 = vmatpush1.msra.mxu0 %v2156
    %2227 = vmatprep.subr.mxu0 0.0
    %2228 = vmatpush1.msra.mxu0 %v2154
    %2229 = vmatprep.subr.mxu0 0.0
    %2230 = vmatpush1.msra.mxu0 %v2152
    %2231 = vmatprep.subr.mxu0 0.0
    %2232 = vmatpush2.msra.mxu0 0.0
    %2233 = vmatprep.subr.mxu0 0.0
    %2234 = vmatpush2.msra.mxu0 0.0
    %2235 = vmatprep.subr.mxu0 0.0
    %2236 = vmatpush2.msra.mxu0 0.0
    %2237 = vmatprep.subr.mxu0 0.0
    %2238 = vmatpush2.msra.mxu0 0.0
    %2239 = vmatprep.subr.mxu0 0.0
    %2240 = vmatpush2.msra.mxu0 0.0
    %2241 = vmatprep.subr.mxu0 0.0
    %2242 = vmatpush2.msra.mxu0 0.0
    %2243 = vmatprep.subr.mxu0 0.0
    %2244 = vmatpush2.msra.mxu0 0.0
    %2245 = vmatprep.subr.mxu0 0.0
    %2246 = vmatpush2.msra.mxu0 0.0
    %2247 = vmatprep.subr.mxu0 0.0
    %2248 = vmatpush2.msra.mxu0 0.0
    %2249 = vmatprep.subr.mxu0 0.0
    %2250 = vmatpush2.msra.mxu0 0.0
    %2251 = vmatprep.subr.mxu0 0.0
    %2252 = vmatpush2.msra.mxu0 0.0
    %2253 = vmatprep.subr.mxu0 0.0
    %2254 = vmatpush2.msra.mxu0 0.0
    %2255 = vmatprep.subr.mxu0 0.0
    %2256 = vmatpush2.msra.mxu0 0.0
    %2257 = vmatprep.subr.mxu0 0.0
    %2258 = vmatpush2.msra.mxu0 0.0
    %2259 = vmatprep.subr.mxu0 0.0
    %2260 = vmatpush2.msra.mxu0 0.0
    %2261 = vmatprep.subr.mxu0 0.0
    %2262 = vmatpush2.msra.mxu0 0.0
    %2263 = vmatprep.mubr.f32.mxu0 0.0
    %2264 = vmatmul.mubr.f32.gmra.mxu0 %v2176
    %v2265 = vpop.f32.mrf.mxu0
    %v2266 = vadd.f32 0.0, %v2265
    %v2267 = vpop.f32.mrf.mxu0
    %2268 = vmatprep.mubr.f32.mxu0 0.0
    %2269 = vmatmul.mubr.f32.gmra.mxu0 %v2179
    %v2270 = vpop.f32.mrf.mxu0
    %v2271 = vadd.f32 0.0, %v2270
    %v2272 = vpop.f32.mrf.mxu0
    %2273 = vmatprep.mubr.f32.mxu0 0.0
    %2274 = vmatmul.mubr.f32.gmra.mxu0 %v2182
    %v2275 = vpop.f32.mrf.mxu0
    %v2276 = vadd.f32 0.0, %v2275
    %v2277 = vpop.f32.mrf.mxu0
    %2278 = vmatprep.mubr.f32.mxu0 0.0
    %2279 = vmatmul.mubr.f32.gmra.mxu0 %v2185
    %v2280 = vpop.f32.mrf.mxu0
    %v2281 = vadd.f32 0.0, %v2280
    %v2282 = vpop.f32.mrf.mxu0
    %2283 = vmatprep.mubr.f32.mxu0 0.0
    %2284 = vmatmul.mubr.f32.gmra.mxu0 %v2188
    %v2285 = vpop.f32.mrf.mxu0
    %v2286 = vadd.f32 0.0, %v2285
    %v2287 = vpop.f32.mrf.mxu0
    %2288 = vmatprep.mubr.f32.mxu0 0.0
    %2289 = vmatmul.mubr.f32.gmra.mxu0 %v2191
    %v2290 = vpop.f32.mrf.mxu0
    %v2291 = vadd.f32 0.0, %v2290
    %v2292 = vpop.f32.mrf.mxu0
    %2293 = vmatprep.mubr.f32.mxu0 0.0
    %2294 = vmatmul.mubr.f32.gmra.mxu0 %v2194
    %v2295 = vpop.f32.mrf.mxu0
    %v2296 = vadd.f32 0.0, %v2295
    %v2297 = vpop.f32.mrf.mxu0
    %2298 = vmatprep.mubr.f32.mxu0 0.0
    %2299 = vmatmul.mubr.f32.gmra.mxu0 %v2197
    %v2300 = vpop.f32.mrf.mxu0
    %v2301 = vadd.f32 0.0, %v2300
    %v2302 = vpop.f32.mrf.mxu0
    %2303 = vdwg.mxu0
    %v2304 = vrot.slane %v195, 4
    %v2306 = vsel %vm238, %v2266, 0
    %v2309 = vsel %vm238, %v2271, 0
    %v2312 = vsel %vm238, %v2276, 0
    %v2315 = vsel %vm238, %v2281, 0
    %v2318 = vsel %vm238, %v2286, 0
    %v2321 = vsel %vm238, %v2291, 0
    %v2324 = vsel %vm238, %v2296, 0
    %v2327 = vsel %vm238, %v2301, 0
    %v2329 = vsel %vm650, %v2304, 0
    %2331 = vmatprep.subr.mxu0 0.0
    %2332 = vmatpush1.msra.mxu0 0.0
    %2333 = vmatprep.subr.mxu0 0.0
    %2334 = vmatpush1.msra.mxu0 0.0
    %2335 = vmatprep.subr.mxu0 0.0
    %2336 = vmatpush1.msra.mxu0 0.0
    %2337 = vmatprep.subr.mxu0 0.0
    %2338 = vmatpush1.msra.mxu0 0.0
    %2339 = vmatprep.subr.mxu0 0.0
    %2340 = vmatpush1.msra.mxu0 0.0
    %2341 = vmatprep.subr.mxu0 0.0
    %2342 = vmatpush1.msra.mxu0 0.0
    %2343 = vmatprep.subr.mxu0 0.0
    %2344 = vmatpush1.msra.mxu0 0.0
    %2345 = vmatprep.subr.mxu0 0.0
    %2346 = vmatpush1.msra.mxu0 0.0
    %2347 = vmatprep.subr.mxu0 0.0
    %2348 = vmatpush1.msra.mxu0 0.0
    %2349 = vmatprep.subr.mxu0 0.0
    %2350 = vmatpush1.msra.mxu0 0.0
    %2351 = vmatprep.subr.mxu0 0.0
    %2352 = vmatpush1.msra.mxu0 0.0
    %2353 = vmatprep.subr.mxu0 0.0
    %2354 = vmatpush1.msra.mxu0 0.0
    %2355 = vmatprep.subr.mxu0 0.0
    %2356 = vmatpush1.msra.mxu0 0.0
    %2357 = vmatprep.subr.mxu0 0.0
    %2358 = vmatpush1.msra.mxu0 0.0
    %2359 = vmatprep.subr.mxu0 0.0
    %2360 = vmatpush1.msra.mxu0 0.0
    %2361 = vmatprep.subr.mxu0 0.0
    %2362 = vmatpush1.msra.mxu0 %v2329
    %2363 = vmatprep.subr.mxu0 0.0
    %2364 = vmatpush2.msra.mxu0 0.0
    %2365 = vmatprep.subr.mxu0 0.0
    %2366 = vmatpush2.msra.mxu0 0.0
    %2367 = vmatprep.subr.mxu0 0.0
    %2368 = vmatpush2.msra.mxu0 0.0
    %2369 = vmatprep.subr.mxu0 0.0
    %2370 = vmatpush2.msra.mxu0 0.0
    %2371 = vmatprep.subr.mxu0 0.0
    %2372 = vmatpush2.msra.mxu0 0.0
    %2373 = vmatprep.subr.mxu0 0.0
    %2374 = vmatpush2.msra.mxu0 0.0
    %2375 = vmatprep.subr.mxu0 0.0
    %2376 = vmatpush2.msra.mxu0 0.0
    %2377 = vmatprep.subr.mxu0 0.0
    %2378 = vmatpush2.msra.mxu0 0.0
    %2379 = vmatprep.subr.mxu0 0.0
    %2380 = vmatpush2.msra.mxu0 0.0
    %2381 = vmatprep.subr.mxu0 0.0
    %2382 = vmatpush2.msra.mxu0 0.0
    %2383 = vmatprep.subr.mxu0 0.0
    %2384 = vmatpush2.msra.mxu0 0.0
    %2385 = vmatprep.subr.mxu0 0.0
    %2386 = vmatpush2.msra.mxu0 0.0
    %2387 = vmatprep.subr.mxu0 0.0
    %2388 = vmatpush2.msra.mxu0 0.0
    %2389 = vmatprep.subr.mxu0 0.0
    %2390 = vmatpush2.msra.mxu0 0.0
    %2391 = vmatprep.subr.mxu0 0.0
    %2392 = vmatpush2.msra.mxu0 0.0
    %2393 = vmatprep.subr.mxu0 0.0
    %2394 = vmatpush2.msra.mxu0 0.0
    %2395 = vmatprep.mubr.f32.mxu0 0.0
    %2396 = vmatmul.mubr.f32.gmra.mxu0 %v2306
    %v2397 = vpop.f32.mrf.mxu0
    %v2398 = vadd.f32 0.0, %v2397
    %v2399 = vpop.f32.mrf.mxu0
    %2400 = vmatprep.mubr.f32.mxu0 0.0
    %2401 = vmatmul.mubr.f32.gmra.mxu0 %v2309
    %v2402 = vpop.f32.mrf.mxu0
    %v2403 = vadd.f32 0.0, %v2402
    %v2404 = vpop.f32.mrf.mxu0
    %2405 = vmatprep.mubr.f32.mxu0 0.0
    %2406 = vmatmul.mubr.f32.gmra.mxu0 %v2312
    %v2407 = vpop.f32.mrf.mxu0
    %v2408 = vadd.f32 0.0, %v2407
    %v2409 = vpop.f32.mrf.mxu0
    %2410 = vmatprep.mubr.f32.mxu0 0.0
    %2411 = vmatmul.mubr.f32.gmra.mxu0 %v2315
    %v2412 = vpop.f32.mrf.mxu0
    %v2413 = vadd.f32 0.0, %v2412
    %v2414 = vpop.f32.mrf.mxu0
    %2415 = vmatprep.mubr.f32.mxu0 0.0
    %2416 = vmatmul.mubr.f32.gmra.mxu0 %v2318
    %v2417 = vpop.f32.mrf.mxu0
    %v2418 = vadd.f32 0.0, %v2417
    %v2419 = vpop.f32.mrf.mxu0
    %2420 = vmatprep.mubr.f32.mxu0 0.0
    %2421 = vmatmul.mubr.f32.gmra.mxu0 %v2321
    %v2422 = vpop.f32.mrf.mxu0
    %v2423 = vadd.f32 0.0, %v2422
    %v2424 = vpop.f32.mrf.mxu0
    %2425 = vmatprep.mubr.f32.mxu0 0.0
    %2426 = vmatmul.mubr.f32.gmra.mxu0 %v2324
    %v2427 = vpop.f32.mrf.mxu0
    %v2428 = vadd.f32 0.0, %v2427
    %v2429 = vpop.f32.mrf.mxu0
    %2430 = vmatprep.mubr.f32.mxu0 0.0
    %2431 = vmatmul.mubr.f32.gmra.mxu0 %v2327
    %v2432 = vpop.f32.mrf.mxu0
    %v2433 = vadd.f32 0.0, %v2432
    %v2434 = vpop.f32.mrf.mxu0
    %2435 = vdwg.mxu0
    %v2436 = vadd.f32 %v1877, %v2398
    %v2437 = vadd.f32 %v1878, %v2403
    %v2438 = vadd.f32 %v1879, %v2408
    %v2439 = vadd.f32 %v1880, %v2413
    %v2440 = vadd.f32 %v1881, %v2418
    %v2441 = vadd.f32 %v1882, %v2423
    %v2442 = vadd.f32 %v1883, %v2428
    %v2443 = vadd.f32 %v1884, %v2433
    %s2444 = scalar_lea.vmem [#allocation2], 256
    %v2445 = vld [vmem:[%s2444] sm:$0xff]
    %v2446 = vld [vmem:[%s2444 + $0x8] sm:$0xff]
    %v2447 = vld [vmem:[%s2444 + $0x10] sm:$0xff]
    %v2448 = vld [vmem:[%s2444 + $0x18] sm:$0xff]
    %v2449 = vld [vmem:[%s2444 + $0x20] sm:$0xff]
    %v2450 = vld [vmem:[%s2444 + $0x28] sm:$0xff]
    %v2451 = vld [vmem:[%s2444 + $0x30] sm:$0xff]
    %v2452 = vld [vmem:[%s2444 + $0x38] sm:$0xff]
    %2453 = vrot.lane.b32.xlu0 %v186, 112
    %v2454 = vpop.permute.xlu0 %2453
    %2455 = vrot.lane.b32.xlu0 %v187, 112
    %v2456 = vpop.permute.xlu0 %2455
    %2457 = vrot.lane.b32.xlu0 %v188, 112
    %v2458 = vpop.permute.xlu0 %2457
    %2459 = vrot.lane.b32.xlu0 %v189, 112
    %v2460 = vpop.permute.xlu0 %2459
    %2461 = vrot.lane.b32.xlu0 %v190, 112
    %v2462 = vpop.permute.xlu0 %2461
    %2463 = vrot.lane.b32.xlu0 %v191, 112
    %v2464 = vpop.permute.xlu0 %2463
    %2465 = vrot.lane.b32.xlu0 %v192, 112
    %v2466 = vpop.permute.xlu0 %2465
    %2467 = vrot.lane.b32.xlu0 %v193, 112
    %v2468 = vpop.permute.xlu0 %2467
    %2469 = vrot.lane.b32.xlu0 %v148, 80
    %v2470 = vpop.permute.xlu0 %2469
    %2471 = vrot.lane.b32.xlu0 %v153, 80
    %v2472 = vpop.permute.xlu0 %2471
    %2473 = vrot.lane.b32.xlu0 %v158, 80
    %v2474 = vpop.permute.xlu0 %2473
    %2475 = vrot.lane.b32.xlu0 %v163, 80
    %v2476 = vpop.permute.xlu0 %2475
    %2477 = vrot.lane.b32.xlu0 %v168, 80
    %v2478 = vpop.permute.xlu0 %2477
    %2479 = vrot.lane.b32.xlu0 %v173, 80
    %v2480 = vpop.permute.xlu0 %2479
    %2481 = vrot.lane.b32.xlu0 %v178, 80
    %v2482 = vpop.permute.xlu0 %2481
    %2483 = vrot.lane.b32.xlu0 %v183, 80
    %v2484 = vpop.permute.xlu0 %2483
    %v2485 = vsel %vm238, %v2454, 0
    %v2487 = vsel %vm238, %v2456, 0
    %v2489 = vsel %vm238, %v2458, 0
    %v2491 = vsel %vm238, %v2460, 0
    %v2493 = vsel %vm238, %v2462, 0
    %v2495 = vsel %vm238, %v2464, 0
    %v2497 = vsel %vm238, %v2466, 0
    %v2499 = vsel %vm238, %v2468, 0
    %v2501 = vsel %vm238, %v2470, 0
    %v2503 = vsel %vm238, %v2472, 0
    %v2505 = vsel %vm238, %v2474, 0
    %v2507 = vsel %vm238, %v2476, 0
    %v2509 = vsel %vm238, %v2478, 0
    %v2511 = vsel %vm238, %v2480, 0
    %v2513 = vsel %vm238, %v2482, 0
    %v2515 = vsel %vm238, %v2484, 0
    %2517 = vmatprep.subr.mxu0 0.0
    %2518 = vmatpush1.xpose.msra.mxu0 0.0
    %2519 = vmatprep.subr.mxu0 0.0
    %2520 = vmatpush1.xpose.msra.mxu0 0.0
    %2521 = vmatprep.subr.mxu0 0.0
    %2522 = vmatpush1.xpose.msra.mxu0 0.0
    %2523 = vmatprep.subr.mxu0 0.0
    %2524 = vmatpush1.xpose.msra.mxu0 0.0
    %2525 = vmatprep.subr.mxu0 0.0
    %2526 = vmatpush1.xpose.msra.mxu0 0.0
    %2527 = vmatprep.subr.mxu0 0.0
    %2528 = vmatpush1.xpose.msra.mxu0 0.0
    %2529 = vmatprep.subr.mxu0 0.0
    %2530 = vmatpush1.xpose.msra.mxu0 0.0
    %2531 = vmatprep.subr.mxu0 0.0
    %2532 = vmatpush1.xpose.msra.mxu0 0.0
    %2533 = vmatprep.subr.mxu0 0.0
    %2534 = vmatpush1.xpose.msra.mxu0 %v2515
    %2535 = vmatprep.subr.mxu0 0.0
    %2536 = vmatpush1.xpose.msra.mxu0 %v2513
    %2537 = vmatprep.subr.mxu0 0.0
    %2538 = vmatpush1.xpose.msra.mxu0 %v2511
    %2539 = vmatprep.subr.mxu0 0.0
    %2540 = vmatpush1.xpose.msra.mxu0 %v2509
    %2541 = vmatprep.subr.mxu0 0.0
    %2542 = vmatpush1.xpose.msra.mxu0 %v2507
    %2543 = vmatprep.subr.mxu0 0.0
    %2544 = vmatpush1.xpose.msra.mxu0 %v2505
    %2545 = vmatprep.subr.mxu0 0.0
    %2546 = vmatpush1.xpose.msra.mxu0 %v2503
    %2547 = vmatprep.subr.mxu0 0.0
    %2548 = vmatpush1.xpose.msra.mxu0 %v2501
    %2549 = vmatprep.subr.mxu0 0.0
    %2550 = vmatpush2.xpose.msra.mxu0 0.0
    %2551 = vmatprep.subr.mxu0 0.0
    %2552 = vmatpush2.xpose.msra.mxu0 0.0
    %2553 = vmatprep.subr.mxu0 0.0
    %2554 = vmatpush2.xpose.msra.mxu0 0.0
    %2555 = vmatprep.subr.mxu0 0.0
    %2556 = vmatpush2.xpose.msra.mxu0 0.0
    %2557 = vmatprep.subr.mxu0 0.0
    %2558 = vmatpush2.xpose.msra.mxu0 0.0
    %2559 = vmatprep.subr.mxu0 0.0
    %2560 = vmatpush2.xpose.msra.mxu0 0.0
    %2561 = vmatprep.subr.mxu0 0.0
    %2562 = vmatpush2.xpose.msra.mxu0 0.0
    %2563 = vmatprep.subr.mxu0 0.0
    %2564 = vmatpush2.xpose.msra.mxu0 0.0
    %2565 = vmatprep.subr.mxu0 0.0
    %2566 = vmatpush2.xpose.msra.mxu0 0.0
    %2567 = vmatprep.subr.mxu0 0.0
    %2568 = vmatpush2.xpose.msra.mxu0 0.0
    %2569 = vmatprep.subr.mxu0 0.0
    %2570 = vmatpush2.xpose.msra.mxu0 0.0
    %2571 = vmatprep.subr.mxu0 0.0
    %2572 = vmatpush2.xpose.msra.mxu0 0.0
    %2573 = vmatprep.subr.mxu0 0.0
    %2574 = vmatpush2.xpose.msra.mxu0 0.0
    %2575 = vmatprep.subr.mxu0 0.0
    %2576 = vmatpush2.xpose.msra.mxu0 0.0
    %2577 = vmatprep.subr.mxu0 0.0
    %2578 = vmatpush2.xpose.msra.mxu0 0.0
    %2579 = vmatprep.subr.mxu0 0.0
    %2580 = vmatpush2.xpose.msra.mxu0 0.0
    %2581 = vmatprep.mubr.f32.mxu0 0.0
    %2582 = vmatmul.mubr.f32.gmra.mxu0 %v2485
    %v2583 = vpop.f32.mrf.mxu0
    %v2584 = vadd.f32 %v2445, %v2583
    %v2585 = vpop.f32.mrf.mxu0
    %2586 = vmatprep.mubr.f32.mxu0 0.0
    %2587 = vmatmul.mubr.f32.gmra.mxu0 %v2487
    %v2588 = vpop.f32.mrf.mxu0
    %v2589 = vadd.f32 %v2446, %v2588
    %v2590 = vpop.f32.mrf.mxu0
    %2591 = vmatprep.mubr.f32.mxu0 0.0
    %2592 = vmatmul.mubr.f32.gmra.mxu0 %v2489
    %v2593 = vpop.f32.mrf.mxu0
    %v2594 = vadd.f32 %v2447, %v2593
    %v2595 = vpop.f32.mrf.mxu0
    %2596 = vmatprep.mubr.f32.mxu0 0.0
    %2597 = vmatmul.mubr.f32.gmra.mxu0 %v2491
    %v2598 = vpop.f32.mrf.mxu0
    %v2599 = vadd.f32 %v2448, %v2598
    %v2600 = vpop.f32.mrf.mxu0
    %2601 = vmatprep.mubr.f32.mxu0 0.0
    %2602 = vmatmul.mubr.f32.gmra.mxu0 %v2493
    %v2603 = vpop.f32.mrf.mxu0
    %v2604 = vadd.f32 %v2449, %v2603
    %v2605 = vpop.f32.mrf.mxu0
    %2606 = vmatprep.mubr.f32.mxu0 0.0
    %2607 = vmatmul.mubr.f32.gmra.mxu0 %v2495
    %v2608 = vpop.f32.mrf.mxu0
    %v2609 = vadd.f32 %v2450, %v2608
    %v2610 = vpop.f32.mrf.mxu0
    %2611 = vmatprep.mubr.f32.mxu0 0.0
    %2612 = vmatmul.mubr.f32.gmra.mxu0 %v2497
    %v2613 = vpop.f32.mrf.mxu0
    %v2614 = vadd.f32 %v2451, %v2613
    %v2615 = vpop.f32.mrf.mxu0
    %2616 = vmatprep.mubr.f32.mxu0 0.0
    %2617 = vmatmul.mubr.f32.gmra.mxu0 %v2499
    %v2618 = vpop.f32.mrf.mxu0
    %v2619 = vadd.f32 %v2452, %v2618
    %v2620 = vpop.f32.mrf.mxu0
    %2621 = vdwg.mxu0
    %v2622 = vsel %vm384, %v2584, -inf
    %2623 = vmax.xlane.f32.xlu0 %v2622
    %v2624 = vpop.xlane.xlu0 %2623
    %v2625 = vsel %vm384, %v2589, -inf
    %2626 = vmax.xlane.f32.xlu0 %v2625
    %v2627 = vpop.xlane.xlu0 %2626
    %v2628 = vsel %vm384, %v2594, -inf
    %2629 = vmax.xlane.f32.xlu0 %v2628
    %v2630 = vpop.xlane.xlu0 %2629
    %v2631 = vsel %vm384, %v2599, -inf
    %2632 = vmax.xlane.f32.xlu0 %v2631
    %v2633 = vpop.xlane.xlu0 %2632
    %v2634 = vsel %vm384, %v2604, -inf
    %2635 = vmax.xlane.f32.xlu0 %v2634
    %v2636 = vpop.xlane.xlu0 %2635
    %v2637 = vsel %vm384, %v2609, -inf
    %2638 = vmax.xlane.f32.xlu0 %v2637
    %v2639 = vpop.xlane.xlu0 %2638
    %v2640 = vsel %vm384, %v2614, -inf
    %2641 = vmax.xlane.f32.xlu0 %v2640
    %v2642 = vpop.xlane.xlu0 %2641
    %v2643 = vsel %vm384, %v2619, -inf
    %2644 = vmax.xlane.f32.xlu0 %v2643
    %v2645 = vpop.xlane.xlu0 %2644
    %v2646 = vsub.f32 %v2584, %v2624
    %v2647 = vsub.f32 %v2589, %v2627
    %v2648 = vsub.f32 %v2594, %v2630
    %v2649 = vsub.f32 %v2599, %v2633
    %v2650 = vsub.f32 %v2604, %v2636
    %v2651 = vsub.f32 %v2609, %v2639
    %v2652 = vsub.f32 %v2614, %v2642
    %v2653 = vsub.f32 %v2619, %v2645
    %v2654 = vmul.f32 %v2646, 1.442695
    %v2655 = vpow.pop %v2654
    %v2656 = vmul.f32 %v2647, 1.442695
    %v2657 = vpow.pop %v2656
    %v2658 = vmul.f32 %v2648, 1.442695
    %v2659 = vpow.pop %v2658
    %v2660 = vmul.f32 %v2649, 1.442695
    %v2661 = vpow.pop %v2660
    %v2662 = vmul.f32 %v2650, 1.442695
    %v2663 = vpow.pop %v2662
    %v2664 = vmul.f32 %v2651, 1.442695
    %v2665 = vpow.pop %v2664
    %v2666 = vmul.f32 %v2652, 1.442695
    %v2667 = vpow.pop %v2666
    %v2668 = vmul.f32 %v2653, 1.442695
    %v2669 = vpow.pop %v2668
    %v2670 = vsel %vm384, %v2655, 0.0
    %2671 = vadd.xlane.f32.xlu0 %v2670
    %v2672 = vpop.xlane.xlu0 %2671
    %v2673 = vsel %vm384, %v2657, 0.0
    %2674 = vadd.xlane.f32.xlu0 %v2673
    %v2675 = vpop.xlane.xlu0 %2674
    %v2676 = vsel %vm384, %v2659, 0.0
    %2677 = vadd.xlane.f32.xlu0 %v2676
    %v2678 = vpop.xlane.xlu0 %2677
    %v2679 = vsel %vm384, %v2661, 0.0
    %2680 = vadd.xlane.f32.xlu0 %v2679
    %v2681 = vpop.xlane.xlu0 %2680
    %v2682 = vsel %vm384, %v2663, 0.0
    %2683 = vadd.xlane.f32.xlu0 %v2682
    %v2684 = vpop.xlane.xlu0 %2683
    %v2685 = vsel %vm384, %v2665, 0.0
    %2686 = vadd.xlane.f32.xlu0 %v2685
    %v2687 = vpop.xlane.xlu0 %2686
    %v2688 = vsel %vm384, %v2667, 0.0
    %2689 = vadd.xlane.f32.xlu0 %v2688
    %v2690 = vpop.xlane.xlu0 %2689
    %v2691 = vsel %vm384, %v2669, 0.0
    %2692 = vadd.xlane.f32.xlu0 %v2691
    %v2693 = vpop.xlane.xlu0 %2692
    %v2694 = vrcp.pop %v2672
    %v2695 = vrcp.pop %v2675
    %v2696 = vrcp.pop %v2678
    %v2697 = vrcp.pop %v2681
    %v2698 = vrcp.pop %v2684
    %v2699 = vrcp.pop %v2687
    %v2700 = vrcp.pop %v2690
    %v2701 = vrcp.pop %v2693
    %v2702 = vmul.f32 %v2655, %v2694
    %v2703 = vmul.f32 %v2657, %v2695
    %v2704 = vmul.f32 %v2659, %v2696
    %v2705 = vmul.f32 %v2661, %v2697
    %v2706 = vmul.f32 %v2663, %v2698
    %v2707 = vmul.f32 %v2665, %v2699
    %v2708 = vmul.f32 %v2667, %v2700
    %v2709 = vmul.f32 %v2669, %v2701
    %2710 = vrot.lane.b32.xlu0 %v148, 48
    %v2711 = vpop.permute.xlu0 %2710
    %2712 = vrot.lane.b32.xlu0 %v153, 48
    %v2713 = vpop.permute.xlu0 %2712
    %2714 = vrot.lane.b32.xlu0 %v158, 48
    %v2715 = vpop.permute.xlu0 %2714
    %2716 = vrot.lane.b32.xlu0 %v163, 48
    %v2717 = vpop.permute.xlu0 %2716
    %2718 = vrot.lane.b32.xlu0 %v168, 48
    %v2719 = vpop.permute.xlu0 %2718
    %2720 = vrot.lane.b32.xlu0 %v173, 48
    %v2721 = vpop.permute.xlu0 %2720
    %2722 = vrot.lane.b32.xlu0 %v178, 48
    %v2723 = vpop.permute.xlu0 %2722
    %2724 = vrot.lane.b32.xlu0 %v183, 48
    %v2725 = vpop.permute.xlu0 %2724
    %v2735 = vsel %vm384, %v2702, 0
    %v2738 = vsel %vm384, %v2703, 0
    %v2741 = vsel %vm384, %v2704, 0
    %v2744 = vsel %vm384, %v2705, 0
    %v2747 = vsel %vm384, %v2706, 0
    %v2750 = vsel %vm384, %v2707, 0
    %v2753 = vsel %vm384, %v2708, 0
    %v2756 = vsel %vm384, %v2709, 0
    %2758 = vmatprep.subr.mxu0 0.0
    %2759 = vmatpush1.msra.mxu0 0.0
    %2760 = vmatprep.subr.mxu0 0.0
    %2761 = vmatpush1.msra.mxu0 0.0
    %2762 = vmatprep.subr.mxu0 0.0
    %2763 = vmatpush1.msra.mxu0 0.0
    %2764 = vmatprep.subr.mxu0 0.0
    %2765 = vmatpush1.msra.mxu0 0.0
    %2766 = vmatprep.subr.mxu0 0.0
    %2767 = vmatpush1.msra.mxu0 0.0
    %2768 = vmatprep.subr.mxu0 0.0
    %2769 = vmatpush1.msra.mxu0 0.0
    %2770 = vmatprep.subr.mxu0 0.0
    %2771 = vmatpush1.msra.mxu0 0.0
    %2772 = vmatprep.subr.mxu0 0.0
    %2773 = vmatpush1.msra.mxu0 0.0
    %2774 = vmatprep.subr.mxu0 0.0
    %2775 = vmatpush1.msra.mxu0 %v2725
    %2776 = vmatprep.subr.mxu0 0.0
    %2777 = vmatpush1.msra.mxu0 %v2723
    %2778 = vmatprep.subr.mxu0 0.0
    %2779 = vmatpush1.msra.mxu0 %v2721
    %2780 = vmatprep.subr.mxu0 0.0
    %2781 = vmatpush1.msra.mxu0 %v2719
    %2782 = vmatprep.subr.mxu0 0.0
    %2783 = vmatpush1.msra.mxu0 %v2717
    %2784 = vmatprep.subr.mxu0 0.0
    %2785 = vmatpush1.msra.mxu0 %v2715
    %2786 = vmatprep.subr.mxu0 0.0
    %2787 = vmatpush1.msra.mxu0 %v2713
    %2788 = vmatprep.subr.mxu0 0.0
    %2789 = vmatpush1.msra.mxu0 %v2711
    %2790 = vmatprep.subr.mxu0 0.0
    %2791 = vmatpush2.msra.mxu0 0.0
    %2792 = vmatprep.subr.mxu0 0.0
    %2793 = vmatpush2.msra.mxu0 0.0
    %2794 = vmatprep.subr.mxu0 0.0
    %2795 = vmatpush2.msra.mxu0 0.0
    %2796 = vmatprep.subr.mxu0 0.0
    %2797 = vmatpush2.msra.mxu0 0.0
    %2798 = vmatprep.subr.mxu0 0.0
    %2799 = vmatpush2.msra.mxu0 0.0
    %2800 = vmatprep.subr.mxu0 0.0
    %2801 = vmatpush2.msra.mxu0 0.0
    %2802 = vmatprep.subr.mxu0 0.0
    %2803 = vmatpush2.msra.mxu0 0.0
    %2804 = vmatprep.subr.mxu0 0.0
    %2805 = vmatpush2.msra.mxu0 0.0
    %2806 = vmatprep.subr.mxu0 0.0
    %2807 = vmatpush2.msra.mxu0 0.0
    %2808 = vmatprep.subr.mxu0 0.0
    %2809 = vmatpush2.msra.mxu0 0.0
    %2810 = vmatprep.subr.mxu0 0.0
    %2811 = vmatpush2.msra.mxu0 0.0
    %2812 = vmatprep.subr.mxu0 0.0
    %2813 = vmatpush2.msra.mxu0 0.0
    %2814 = vmatprep.subr.mxu0 0.0
    %2815 = vmatpush2.msra.mxu0 0.0
    %2816 = vmatprep.subr.mxu0 0.0
    %2817 = vmatpush2.msra.mxu0 0.0
    %2818 = vmatprep.subr.mxu0 0.0
    %2819 = vmatpush2.msra.mxu0 0.0
    %2820 = vmatprep.subr.mxu0 0.0
    %2821 = vmatpush2.msra.mxu0 0.0
    %2822 = vmatprep.mubr.f32.mxu0 0.0
    %2823 = vmatmul.mubr.f32.gmra.mxu0 %v2735
    %v2824 = vpop.f32.mrf.mxu0
    %v2825 = vadd.f32 0.0, %v2824
    %v2826 = vpop.f32.mrf.mxu0
    %2827 = vmatprep.mubr.f32.mxu0 0.0
    %2828 = vmatmul.mubr.f32.gmra.mxu0 %v2738
    %v2829 = vpop.f32.mrf.mxu0
    %v2830 = vadd.f32 0.0, %v2829
    %v2831 = vpop.f32.mrf.mxu0
    %2832 = vmatprep.mubr.f32.mxu0 0.0
    %2833 = vmatmul.mubr.f32.gmra.mxu0 %v2741
    %v2834 = vpop.f32.mrf.mxu0
    %v2835 = vadd.f32 0.0, %v2834
    %v2836 = vpop.f32.mrf.mxu0
    %2837 = vmatprep.mubr.f32.mxu0 0.0
    %2838 = vmatmul.mubr.f32.gmra.mxu0 %v2744
    %v2839 = vpop.f32.mrf.mxu0
    %v2840 = vadd.f32 0.0, %v2839
    %v2841 = vpop.f32.mrf.mxu0
    %2842 = vmatprep.mubr.f32.mxu0 0.0
    %2843 = vmatmul.mubr.f32.gmra.mxu0 %v2747
    %v2844 = vpop.f32.mrf.mxu0
    %v2845 = vadd.f32 0.0, %v2844
    %v2846 = vpop.f32.mrf.mxu0
    %2847 = vmatprep.mubr.f32.mxu0 0.0
    %2848 = vmatmul.mubr.f32.gmra.mxu0 %v2750
    %v2849 = vpop.f32.mrf.mxu0
    %v2850 = vadd.f32 0.0, %v2849
    %v2851 = vpop.f32.mrf.mxu0
    %2852 = vmatprep.mubr.f32.mxu0 0.0
    %2853 = vmatmul.mubr.f32.gmra.mxu0 %v2753
    %v2854 = vpop.f32.mrf.mxu0
    %v2855 = vadd.f32 0.0, %v2854
    %v2856 = vpop.f32.mrf.mxu0
    %2857 = vmatprep.mubr.f32.mxu0 0.0
    %2858 = vmatmul.mubr.f32.gmra.mxu0 %v2756
    %v2859 = vpop.f32.mrf.mxu0
    %v2860 = vadd.f32 0.0, %v2859
    %v2861 = vpop.f32.mrf.mxu0
    %2862 = vdwg.mxu0
    %v2864 = vsel %vm238, %v2825, 0
    %v2867 = vsel %vm238, %v2830, 0
    %v2870 = vsel %vm238, %v2835, 0
    %v2873 = vsel %vm238, %v2840, 0
    %v2876 = vsel %vm238, %v2845, 0
    %v2879 = vsel %vm238, %v2850, 0
    %v2882 = vsel %vm238, %v2855, 0
    %v2885 = vsel %vm238, %v2860, 0
    %v2888 = vsel %vm650, %v196, 0
    %2890 = vmatprep.subr.mxu0 0.0
    %2891 = vmatpush1.msra.mxu0 0.0
    %2892 = vmatprep.subr.mxu0 0.0
    %2893 = vmatpush1.msra.mxu0 0.0
    %2894 = vmatprep.subr.mxu0 0.0
    %2895 = vmatpush1.msra.mxu0 0.0
    %2896 = vmatprep.subr.mxu0 0.0
    %2897 = vmatpush1.msra.mxu0 0.0
    %2898 = vmatprep.subr.mxu0 0.0
    %2899 = vmatpush1.msra.mxu0 0.0
    %2900 = vmatprep.subr.mxu0 0.0
    %2901 = vmatpush1.msra.mxu0 0.0
    %2902 = vmatprep.subr.mxu0 0.0
    %2903 = vmatpush1.msra.mxu0 0.0
    %2904 = vmatprep.subr.mxu0 0.0
    %2905 = vmatpush1.msra.mxu0 0.0
    %2906 = vmatprep.subr.mxu0 0.0
    %2907 = vmatpush1.msra.mxu0 0.0
    %2908 = vmatprep.subr.mxu0 0.0
    %2909 = vmatpush1.msra.mxu0 0.0
    %2910 = vmatprep.subr.mxu0 0.0
    %2911 = vmatpush1.msra.mxu0 0.0
    %2912 = vmatprep.subr.mxu0 0.0
    %2913 = vmatpush1.msra.mxu0 0.0
    %2914 = vmatprep.subr.mxu0 0.0
    %2915 = vmatpush1.msra.mxu0 0.0
    %2916 = vmatprep.subr.mxu0 0.0
    %2917 = vmatpush1.msra.mxu0 0.0
    %2918 = vmatprep.subr.mxu0 0.0
    %2919 = vmatpush1.msra.mxu0 0.0
    %2920 = vmatprep.subr.mxu0 0.0
    %2921 = vmatpush1.msra.mxu0 %v2888
    %2922 = vmatprep.subr.mxu0 0.0
    %2923 = vmatpush2.msra.mxu0 0.0
    %2924 = vmatprep.subr.mxu0 0.0
    %2925 = vmatpush2.msra.mxu0 0.0
    %2926 = vmatprep.subr.mxu0 0.0
    %2927 = vmatpush2.msra.mxu0 0.0
    %2928 = vmatprep.subr.mxu0 0.0
    %2929 = vmatpush2.msra.mxu0 0.0
    %2930 = vmatprep.subr.mxu0 0.0
    %2931 = vmatpush2.msra.mxu0 0.0
    %2932 = vmatprep.subr.mxu0 0.0
    %2933 = vmatpush2.msra.mxu0 0.0
    %2934 = vmatprep.subr.mxu0 0.0
    %2935 = vmatpush2.msra.mxu0 0.0
    %2936 = vmatprep.subr.mxu0 0.0
    %2937 = vmatpush2.msra.mxu0 0.0
    %2938 = vmatprep.subr.mxu0 0.0
    %2939 = vmatpush2.msra.mxu0 0.0
    %2940 = vmatprep.subr.mxu0 0.0
    %2941 = vmatpush2.msra.mxu0 0.0
    %2942 = vmatprep.subr.mxu0 0.0
    %2943 = vmatpush2.msra.mxu0 0.0
    %2944 = vmatprep.subr.mxu0 0.0
    %2945 = vmatpush2.msra.mxu0 0.0
    %2946 = vmatprep.subr.mxu0 0.0
    %2947 = vmatpush2.msra.mxu0 0.0
    %2948 = vmatprep.subr.mxu0 0.0
    %2949 = vmatpush2.msra.mxu0 0.0
    %2950 = vmatprep.subr.mxu0 0.0
    %2951 = vmatpush2.msra.mxu0 0.0
    %2952 = vmatprep.subr.mxu0 0.0
    %2953 = vmatpush2.msra.mxu0 0.0
    %2954 = vmatprep.mubr.f32.mxu0 0.0
    %2955 = vmatmul.mubr.f32.gmra.mxu0 %v2864
    %v2956 = vpop.f32.mrf.mxu0
    %v2957 = vadd.f32 0.0, %v2956
    %v2958 = vpop.f32.mrf.mxu0
    %2959 = vmatprep.mubr.f32.mxu0 0.0
    %2960 = vmatmul.mubr.f32.gmra.mxu0 %v2867
    %v2961 = vpop.f32.mrf.mxu0
    %v2962 = vadd.f32 0.0, %v2961
    %v2963 = vpop.f32.mrf.mxu0
    %2964 = vmatprep.mubr.f32.mxu0 0.0
    %2965 = vmatmul.mubr.f32.gmra.mxu0 %v2870
    %v2966 = vpop.f32.mrf.mxu0
    %v2967 = vadd.f32 0.0, %v2966
    %v2968 = vpop.f32.mrf.mxu0
    %2969 = vmatprep.mubr.f32.mxu0 0.0
    %2970 = vmatmul.mubr.f32.gmra.mxu0 %v2873
    %v2971 = vpop.f32.mrf.mxu0
    %v2972 = vadd.f32 0.0, %v2971
    %v2973 = vpop.f32.mrf.mxu0
    %2974 = vmatprep.mubr.f32.mxu0 0.0
    %2975 = vmatmul.mubr.f32.gmra.mxu0 %v2876
    %v2976 = vpop.f32.mrf.mxu0
    %v2977 = vadd.f32 0.0, %v2976
    %v2978 = vpop.f32.mrf.mxu0
    %2979 = vmatprep.mubr.f32.mxu0 0.0
    %2980 = vmatmul.mubr.f32.gmra.mxu0 %v2879
    %v2981 = vpop.f32.mrf.mxu0
    %v2982 = vadd.f32 0.0, %v2981
    %v2983 = vpop.f32.mrf.mxu0
    %2984 = vmatprep.mubr.f32.mxu0 0.0
    %2985 = vmatmul.mubr.f32.gmra.mxu0 %v2882
    %v2986 = vpop.f32.mrf.mxu0
    %v2987 = vadd.f32 0.0, %v2986
    %v2988 = vpop.f32.mrf.mxu0
    %2989 = vmatprep.mubr.f32.mxu0 0.0
    %2990 = vmatmul.mubr.f32.gmra.mxu0 %v2885
    %v2991 = vpop.f32.mrf.mxu0
    %v2992 = vadd.f32 0.0, %v2991
    %v2993 = vpop.f32.mrf.mxu0
    %2994 = vdwg.mxu0
    %v2995 = vadd.f32 %v2436, %v2957
    %v2996 = vadd.f32 %v2437, %v2962
    %v2997 = vadd.f32 %v2438, %v2967
    %v2998 = vadd.f32 %v2439, %v2972
    %v2999 = vadd.f32 %v2440, %v2977
    %v3000 = vadd.f32 %v2441, %v2982
    %v3001 = vadd.f32 %v2442, %v2987
    %v3002 = vadd.f32 %v2443, %v2992
    %s3003 = scalar_lea.vmem [#allocation2], 320
    %v3004 = vld [vmem:[%s3003] sm:$0xff]
    %v3005 = vld [vmem:[%s3003 + $0x8] sm:$0xff]
    %v3006 = vld [vmem:[%s3003 + $0x10] sm:$0xff]
    %v3007 = vld [vmem:[%s3003 + $0x18] sm:$0xff]
    %v3008 = vld [vmem:[%s3003 + $0x20] sm:$0xff]
    %v3009 = vld [vmem:[%s3003 + $0x28] sm:$0xff]
    %v3010 = vld [vmem:[%s3003 + $0x30] sm:$0xff]
    %v3011 = vld [vmem:[%s3003 + $0x38] sm:$0xff]
    %3012 = vrot.lane.b32.xlu0 %v186, 108
    %v3013 = vpop.permute.xlu0 %3012
    %3014 = vrot.lane.b32.xlu0 %v187, 108
    %v3015 = vpop.permute.xlu0 %3014
    %3016 = vrot.lane.b32.xlu0 %v188, 108
    %v3017 = vpop.permute.xlu0 %3016
    %3018 = vrot.lane.b32.xlu0 %v189, 108
    %v3019 = vpop.permute.xlu0 %3018
    %3020 = vrot.lane.b32.xlu0 %v190, 108
    %v3021 = vpop.permute.xlu0 %3020
    %3022 = vrot.lane.b32.xlu0 %v191, 108
    %v3023 = vpop.permute.xlu0 %3022
    %3024 = vrot.lane.b32.xlu0 %v192, 108
    %v3025 = vpop.permute.xlu0 %3024
    %3026 = vrot.lane.b32.xlu0 %v193, 108
    %v3027 = vpop.permute.xlu0 %3026
    %3028 = vrot.lane.b32.xlu0 %v148, 76
    %v3029 = vpop.permute.xlu0 %3028
    %3030 = vrot.lane.b32.xlu0 %v153, 76
    %v3031 = vpop.permute.xlu0 %3030
    %3032 = vrot.lane.b32.xlu0 %v158, 76
    %v3033 = vpop.permute.xlu0 %3032
    %3034 = vrot.lane.b32.xlu0 %v163, 76
    %v3035 = vpop.permute.xlu0 %3034
    %3036 = vrot.lane.b32.xlu0 %v168, 76
    %v3037 = vpop.permute.xlu0 %3036
    %3038 = vrot.lane.b32.xlu0 %v173, 76
    %v3039 = vpop.permute.xlu0 %3038
    %3040 = vrot.lane.b32.xlu0 %v178, 76
    %v3041 = vpop.permute.xlu0 %3040
    %3042 = vrot.lane.b32.xlu0 %v183, 76
    %v3043 = vpop.permute.xlu0 %3042
    %v3044 = vsel %vm238, %v3013, 0
    %v3046 = vsel %vm238, %v3015, 0
    %v3048 = vsel %vm238, %v3017, 0
    %v3050 = vsel %vm238, %v3019, 0
    %v3052 = vsel %vm238, %v3021, 0
    %v3054 = vsel %vm238, %v3023, 0
    %v3056 = vsel %vm238, %v3025, 0
    %v3058 = vsel %vm238, %v3027, 0
    %v3060 = vsel %vm238, %v3029, 0
    %v3062 = vsel %vm238, %v3031, 0
    %v3064 = vsel %vm238, %v3033, 0
    %v3066 = vsel %vm238, %v3035, 0
    %v3068 = vsel %vm238, %v3037, 0
    %v3070 = vsel %vm238, %v3039, 0
    %v3072 = vsel %vm238, %v3041, 0
    %v3074 = vsel %vm238, %v3043, 0
    %3076 = vmatprep.subr.mxu0 0.0
    %3077 = vmatpush1.xpose.msra.mxu0 0.0
    %3078 = vmatprep.subr.mxu0 0.0
    %3079 = vmatpush1.xpose.msra.mxu0 0.0
    %3080 = vmatprep.subr.mxu0 0.0
    %3081 = vmatpush1.xpose.msra.mxu0 0.0
    %3082 = vmatprep.subr.mxu0 0.0
    %3083 = vmatpush1.xpose.msra.mxu0 0.0
    %3084 = vmatprep.subr.mxu0 0.0
    %3085 = vmatpush1.xpose.msra.mxu0 0.0
    %3086 = vmatprep.subr.mxu0 0.0
    %3087 = vmatpush1.xpose.msra.mxu0 0.0
    %3088 = vmatprep.subr.mxu0 0.0
    %3089 = vmatpush1.xpose.msra.mxu0 0.0
    %3090 = vmatprep.subr.mxu0 0.0
    %3091 = vmatpush1.xpose.msra.mxu0 0.0
    %3092 = vmatprep.subr.mxu0 0.0
    %3093 = vmatpush1.xpose.msra.mxu0 %v3074
    %3094 = vmatprep.subr.mxu0 0.0
    %3095 = vmatpush1.xpose.msra.mxu0 %v3072
    %3096 = vmatprep.subr.mxu0 0.0
    %3097 = vmatpush1.xpose.msra.mxu0 %v3070
    %3098 = vmatprep.subr.mxu0 0.0
    %3099 = vmatpush1.xpose.msra.mxu0 %v3068
    %3100 = vmatprep.subr.mxu0 0.0
    %3101 = vmatpush1.xpose.msra.mxu0 %v3066
    %3102 = vmatprep.subr.mxu0 0.0
    %3103 = vmatpush1.xpose.msra.mxu0 %v3064
    %3104 = vmatprep.subr.mxu0 0.0
    %3105 = vmatpush1.xpose.msra.mxu0 %v3062
    %3106 = vmatprep.subr.mxu0 0.0
    %3107 = vmatpush1.xpose.msra.mxu0 %v3060
    %3108 = vmatprep.subr.mxu0 0.0
    %3109 = vmatpush2.xpose.msra.mxu0 0.0
    %3110 = vmatprep.subr.mxu0 0.0
    %3111 = vmatpush2.xpose.msra.mxu0 0.0
    %3112 = vmatprep.subr.mxu0 0.0
    %3113 = vmatpush2.xpose.msra.mxu0 0.0
    %3114 = vmatprep.subr.mxu0 0.0
    %3115 = vmatpush2.xpose.msra.mxu0 0.0
    %3116 = vmatprep.subr.mxu0 0.0
    %3117 = vmatpush2.xpose.msra.mxu0 0.0
    %3118 = vmatprep.subr.mxu0 0.0
    %3119 = vmatpush2.xpose.msra.mxu0 0.0
    %3120 = vmatprep.subr.mxu0 0.0
    %3121 = vmatpush2.xpose.msra.mxu0 0.0
    %3122 = vmatprep.subr.mxu0 0.0
    %3123 = vmatpush2.xpose.msra.mxu0 0.0
    %3124 = vmatprep.subr.mxu0 0.0
    %3125 = vmatpush2.xpose.msra.mxu0 0.0
    %3126 = vmatprep.subr.mxu0 0.0
    %3127 = vmatpush2.xpose.msra.mxu0 0.0
    %3128 = vmatprep.subr.mxu0 0.0
    %3129 = vmatpush2.xpose.msra.mxu0 0.0
    %3130 = vmatprep.subr.mxu0 0.0
    %3131 = vmatpush2.xpose.msra.mxu0 0.0
    %3132 = vmatprep.subr.mxu0 0.0
    %3133 = vmatpush2.xpose.msra.mxu0 0.0
    %3134 = vmatprep.subr.mxu0 0.0
    %3135 = vmatpush2.xpose.msra.mxu0 0.0
    %3136 = vmatprep.subr.mxu0 0.0
    %3137 = vmatpush2.xpose.msra.mxu0 0.0
    %3138 = vmatprep.subr.mxu0 0.0
    %3139 = vmatpush2.xpose.msra.mxu0 0.0
    %3140 = vmatprep.mubr.f32.mxu0 0.0
    %3141 = vmatmul.mubr.f32.gmra.mxu0 %v3044
    %v3142 = vpop.f32.mrf.mxu0
    %v3143 = vadd.f32 %v3004, %v3142
    %v3144 = vpop.f32.mrf.mxu0
    %3145 = vmatprep.mubr.f32.mxu0 0.0
    %3146 = vmatmul.mubr.f32.gmra.mxu0 %v3046
    %v3147 = vpop.f32.mrf.mxu0
    %v3148 = vadd.f32 %v3005, %v3147
    %v3149 = vpop.f32.mrf.mxu0
    %3150 = vmatprep.mubr.f32.mxu0 0.0
    %3151 = vmatmul.mubr.f32.gmra.mxu0 %v3048
    %v3152 = vpop.f32.mrf.mxu0
    %v3153 = vadd.f32 %v3006, %v3152
    %v3154 = vpop.f32.mrf.mxu0
    %3155 = vmatprep.mubr.f32.mxu0 0.0
    %3156 = vmatmul.mubr.f32.gmra.mxu0 %v3050
    %v3157 = vpop.f32.mrf.mxu0
    %v3158 = vadd.f32 %v3007, %v3157
    %v3159 = vpop.f32.mrf.mxu0
    %3160 = vmatprep.mubr.f32.mxu0 0.0
    %3161 = vmatmul.mubr.f32.gmra.mxu0 %v3052
    %v3162 = vpop.f32.mrf.mxu0
    %v3163 = vadd.f32 %v3008, %v3162
    %v3164 = vpop.f32.mrf.mxu0
    %3165 = vmatprep.mubr.f32.mxu0 0.0
    %3166 = vmatmul.mubr.f32.gmra.mxu0 %v3054
    %v3167 = vpop.f32.mrf.mxu0
    %v3168 = vadd.f32 %v3009, %v3167
    %v3169 = vpop.f32.mrf.mxu0
    %3170 = vmatprep.mubr.f32.mxu0 0.0
    %3171 = vmatmul.mubr.f32.gmra.mxu0 %v3056
    %v3172 = vpop.f32.mrf.mxu0
    %v3173 = vadd.f32 %v3010, %v3172
    %v3174 = vpop.f32.mrf.mxu0
    %3175 = vmatprep.mubr.f32.mxu0 0.0
    %3176 = vmatmul.mubr.f32.gmra.mxu0 %v3058
    %v3177 = vpop.f32.mrf.mxu0
    %v3178 = vadd.f32 %v3011, %v3177
    %v3179 = vpop.f32.mrf.mxu0
    %3180 = vdwg.mxu0
    %v3181 = vsel %vm384, %v3143, -inf
    %3182 = vmax.xlane.f32.xlu0 %v3181
    %v3183 = vpop.xlane.xlu0 %3182
    %v3184 = vsel %vm384, %v3148, -inf
    %3185 = vmax.xlane.f32.xlu0 %v3184
    %v3186 = vpop.xlane.xlu0 %3185
    %v3187 = vsel %vm384, %v3153, -inf
    %3188 = vmax.xlane.f32.xlu0 %v3187
    %v3189 = vpop.xlane.xlu0 %3188
    %v3190 = vsel %vm384, %v3158, -inf
    %3191 = vmax.xlane.f32.xlu0 %v3190
    %v3192 = vpop.xlane.xlu0 %3191
    %v3193 = vsel %vm384, %v3163, -inf
    %3194 = vmax.xlane.f32.xlu0 %v3193
    %v3195 = vpop.xlane.xlu0 %3194
    %v3196 = vsel %vm384, %v3168, -inf
    %3197 = vmax.xlane.f32.xlu0 %v3196
    %v3198 = vpop.xlane.xlu0 %3197
    %v3199 = vsel %vm384, %v3173, -inf
    %3200 = vmax.xlane.f32.xlu0 %v3199
    %v3201 = vpop.xlane.xlu0 %3200
    %v3202 = vsel %vm384, %v3178, -inf
    %3203 = vmax.xlane.f32.xlu0 %v3202
    %v3204 = vpop.xlane.xlu0 %3203
    %v3205 = vsub.f32 %v3143, %v3183
    %v3206 = vsub.f32 %v3148, %v3186
    %v3207 = vsub.f32 %v3153, %v3189
    %v3208 = vsub.f32 %v3158, %v3192
    %v3209 = vsub.f32 %v3163, %v3195
    %v3210 = vsub.f32 %v3168, %v3198
    %v3211 = vsub.f32 %v3173, %v3201
    %v3212 = vsub.f32 %v3178, %v3204
    %v3213 = vmul.f32 %v3205, 1.442695
    %v3214 = vpow.pop %v3213
    %v3215 = vmul.f32 %v3206, 1.442695
    %v3216 = vpow.pop %v3215
    %v3217 = vmul.f32 %v3207, 1.442695
    %v3218 = vpow.pop %v3217
    %v3219 = vmul.f32 %v3208, 1.442695
    %v3220 = vpow.pop %v3219
    %v3221 = vmul.f32 %v3209, 1.442695
    %v3222 = vpow.pop %v3221
    %v3223 = vmul.f32 %v3210, 1.442695
    %v3224 = vpow.pop %v3223
    %v3225 = vmul.f32 %v3211, 1.442695
    %v3226 = vpow.pop %v3225
    %v3227 = vmul.f32 %v3212, 1.442695
    %v3228 = vpow.pop %v3227
    %v3229 = vsel %vm384, %v3214, 0.0
    %3230 = vadd.xlane.f32.xlu0 %v3229
    %v3231 = vpop.xlane.xlu0 %3230
    %v3232 = vsel %vm384, %v3216, 0.0
    %3233 = vadd.xlane.f32.xlu0 %v3232
    %v3234 = vpop.xlane.xlu0 %3233
    %v3235 = vsel %vm384, %v3218, 0.0
    %3236 = vadd.xlane.f32.xlu0 %v3235
    %v3237 = vpop.xlane.xlu0 %3236
    %v3238 = vsel %vm384, %v3220, 0.0
    %3239 = vadd.xlane.f32.xlu0 %v3238
    %v3240 = vpop.xlane.xlu0 %3239
    %v3241 = vsel %vm384, %v3222, 0.0
    %3242 = vadd.xlane.f32.xlu0 %v3241
    %v3243 = vpop.xlane.xlu0 %3242
    %v3244 = vsel %vm384, %v3224, 0.0
    %3245 = vadd.xlane.f32.xlu0 %v3244
    %v3246 = vpop.xlane.xlu0 %3245
    %v3247 = vsel %vm384, %v3226, 0.0
    %3248 = vadd.xlane.f32.xlu0 %v3247
    %v3249 = vpop.xlane.xlu0 %3248
    %v3250 = vsel %vm384, %v3228, 0.0
    %3251 = vadd.xlane.f32.xlu0 %v3250
    %v3252 = vpop.xlane.xlu0 %3251
    %v3253 = vrcp.pop %v3231
    %v3254 = vrcp.pop %v3234
    %v3255 = vrcp.pop %v3237
    %v3256 = vrcp.pop %v3240
    %v3257 = vrcp.pop %v3243
    %v3258 = vrcp.pop %v3246
    %v3259 = vrcp.pop %v3249
    %v3260 = vrcp.pop %v3252
    %v3261 = vmul.f32 %v3214, %v3253
    %v3262 = vmul.f32 %v3216, %v3254
    %v3263 = vmul.f32 %v3218, %v3255
    %v3264 = vmul.f32 %v3220, %v3256
    %v3265 = vmul.f32 %v3222, %v3257
    %v3266 = vmul.f32 %v3224, %v3258
    %v3267 = vmul.f32 %v3226, %v3259
    %v3268 = vmul.f32 %v3228, %v3260
    %3269 = vrot.lane.b32.xlu0 %v148, 44
    %v3270 = vpop.permute.xlu0 %3269
    %3271 = vrot.lane.b32.xlu0 %v153, 44
    %v3272 = vpop.permute.xlu0 %3271
    %3273 = vrot.lane.b32.xlu0 %v158, 44
    %v3274 = vpop.permute.xlu0 %3273
    %3275 = vrot.lane.b32.xlu0 %v163, 44
    %v3276 = vpop.permute.xlu0 %3275
    %3277 = vrot.lane.b32.xlu0 %v168, 44
    %v3278 = vpop.permute.xlu0 %3277
    %3279 = vrot.lane.b32.xlu0 %v173, 44
    %v3280 = vpop.permute.xlu0 %3279
    %3281 = vrot.lane.b32.xlu0 %v178, 44
    %v3282 = vpop.permute.xlu0 %3281
    %3283 = vrot.lane.b32.xlu0 %v183, 44
    %v3284 = vpop.permute.xlu0 %3283
    %v3294 = vsel %vm384, %v3261, 0
    %v3297 = vsel %vm384, %v3262, 0
    %v3300 = vsel %vm384, %v3263, 0
    %v3303 = vsel %vm384, %v3264, 0
    %v3306 = vsel %vm384, %v3265, 0
    %v3309 = vsel %vm384, %v3266, 0
    %v3312 = vsel %vm384, %v3267, 0
    %v3315 = vsel %vm384, %v3268, 0
    %3317 = vmatprep.subr.mxu0 0.0
    %3318 = vmatpush1.msra.mxu0 0.0
    %3319 = vmatprep.subr.mxu0 0.0
    %3320 = vmatpush1.msra.mxu0 0.0
    %3321 = vmatprep.subr.mxu0 0.0
    %3322 = vmatpush1.msra.mxu0 0.0
    %3323 = vmatprep.subr.mxu0 0.0
    %3324 = vmatpush1.msra.mxu0 0.0
    %3325 = vmatprep.subr.mxu0 0.0
    %3326 = vmatpush1.msra.mxu0 0.0
    %3327 = vmatprep.subr.mxu0 0.0
    %3328 = vmatpush1.msra.mxu0 0.0
    %3329 = vmatprep.subr.mxu0 0.0
    %3330 = vmatpush1.msra.mxu0 0.0
    %3331 = vmatprep.subr.mxu0 0.0
    %3332 = vmatpush1.msra.mxu0 0.0
    %3333 = vmatprep.subr.mxu0 0.0
    %3334 = vmatpush1.msra.mxu0 %v3284
    %3335 = vmatprep.subr.mxu0 0.0
    %3336 = vmatpush1.msra.mxu0 %v3282
    %3337 = vmatprep.subr.mxu0 0.0
    %3338 = vmatpush1.msra.mxu0 %v3280
    %3339 = vmatprep.subr.mxu0 0.0
    %3340 = vmatpush1.msra.mxu0 %v3278
    %3341 = vmatprep.subr.mxu0 0.0
    %3342 = vmatpush1.msra.mxu0 %v3276
    %3343 = vmatprep.subr.mxu0 0.0
    %3344 = vmatpush1.msra.mxu0 %v3274
    %3345 = vmatprep.subr.mxu0 0.0
    %3346 = vmatpush1.msra.mxu0 %v3272
    %3347 = vmatprep.subr.mxu0 0.0
    %3348 = vmatpush1.msra.mxu0 %v3270
    %3349 = vmatprep.subr.mxu0 0.0
    %3350 = vmatpush2.msra.mxu0 0.0
    %3351 = vmatprep.subr.mxu0 0.0
    %3352 = vmatpush2.msra.mxu0 0.0
    %3353 = vmatprep.subr.mxu0 0.0
    %3354 = vmatpush2.msra.mxu0 0.0
    %3355 = vmatprep.subr.mxu0 0.0
    %3356 = vmatpush2.msra.mxu0 0.0
    %3357 = vmatprep.subr.mxu0 0.0
    %3358 = vmatpush2.msra.mxu0 0.0
    %3359 = vmatprep.subr.mxu0 0.0
    %3360 = vmatpush2.msra.mxu0 0.0
    %3361 = vmatprep.subr.mxu0 0.0
    %3362 = vmatpush2.msra.mxu0 0.0
    %3363 = vmatprep.subr.mxu0 0.0
    %3364 = vmatpush2.msra.mxu0 0.0
    %3365 = vmatprep.subr.mxu0 0.0
    %3366 = vmatpush2.msra.mxu0 0.0
    %3367 = vmatprep.subr.mxu0 0.0
    %3368 = vmatpush2.msra.mxu0 0.0
    %3369 = vmatprep.subr.mxu0 0.0
    %3370 = vmatpush2.msra.mxu0 0.0
    %3371 = vmatprep.subr.mxu0 0.0
    %3372 = vmatpush2.msra.mxu0 0.0
    %3373 = vmatprep.subr.mxu0 0.0
    %3374 = vmatpush2.msra.mxu0 0.0
    %3375 = vmatprep.subr.mxu0 0.0
    %3376 = vmatpush2.msra.mxu0 0.0
    %3377 = vmatprep.subr.mxu0 0.0
    %3378 = vmatpush2.msra.mxu0 0.0
    %3379 = vmatprep.subr.mxu0 0.0
    %3380 = vmatpush2.msra.mxu0 0.0
    %3381 = vmatprep.mubr.f32.mxu0 0.0
    %3382 = vmatmul.mubr.f32.gmra.mxu0 %v3294
    %v3383 = vpop.f32.mrf.mxu0
    %v3384 = vadd.f32 0.0, %v3383
    %v3385 = vpop.f32.mrf.mxu0
    %3386 = vmatprep.mubr.f32.mxu0 0.0
    %3387 = vmatmul.mubr.f32.gmra.mxu0 %v3297
    %v3388 = vpop.f32.mrf.mxu0
    %v3389 = vadd.f32 0.0, %v3388
    %v3390 = vpop.f32.mrf.mxu0
    %3391 = vmatprep.mubr.f32.mxu0 0.0
    %3392 = vmatmul.mubr.f32.gmra.mxu0 %v3300
    %v3393 = vpop.f32.mrf.mxu0
    %v3394 = vadd.f32 0.0, %v3393
    %v3395 = vpop.f32.mrf.mxu0
    %3396 = vmatprep.mubr.f32.mxu0 0.0
    %3397 = vmatmul.mubr.f32.gmra.mxu0 %v3303
    %v3398 = vpop.f32.mrf.mxu0
    %v3399 = vadd.f32 0.0, %v3398
    %v3400 = vpop.f32.mrf.mxu0
    %3401 = vmatprep.mubr.f32.mxu0 0.0
    %3402 = vmatmul.mubr.f32.gmra.mxu0 %v3306
    %v3403 = vpop.f32.mrf.mxu0
    %v3404 = vadd.f32 0.0, %v3403
    %v3405 = vpop.f32.mrf.mxu0
    %3406 = vmatprep.mubr.f32.mxu0 0.0
    %3407 = vmatmul.mubr.f32.gmra.mxu0 %v3309
    %v3408 = vpop.f32.mrf.mxu0
    %v3409 = vadd.f32 0.0, %v3408
    %v3410 = vpop.f32.mrf.mxu0
    %3411 = vmatprep.mubr.f32.mxu0 0.0
    %3412 = vmatmul.mubr.f32.gmra.mxu0 %v3312
    %v3413 = vpop.f32.mrf.mxu0
    %v3414 = vadd.f32 0.0, %v3413
    %v3415 = vpop.f32.mrf.mxu0
    %3416 = vmatprep.mubr.f32.mxu0 0.0
    %3417 = vmatmul.mubr.f32.gmra.mxu0 %v3315
    %v3418 = vpop.f32.mrf.mxu0
    %v3419 = vadd.f32 0.0, %v3418
    %v3420 = vpop.f32.mrf.mxu0
    %3421 = vdwg.mxu0
    %v3422 = vrot.slane %v196, 4
    %v3424 = vsel %vm238, %v3384, 0
    %v3427 = vsel %vm238, %v3389, 0
    %v3430 = vsel %vm238, %v3394, 0
    %v3433 = vsel %vm238, %v3399, 0
    %v3436 = vsel %vm238, %v3404, 0
    %v3439 = vsel %vm238, %v3409, 0
    %v3442 = vsel %vm238, %v3414, 0
    %v3445 = vsel %vm238, %v3419, 0
    %v3447 = vsel %vm650, %v3422, 0
    %3449 = vmatprep.subr.mxu0 0.0
    %3450 = vmatpush1.msra.mxu0 0.0
    %3451 = vmatprep.subr.mxu0 0.0
    %3452 = vmatpush1.msra.mxu0 0.0
    %3453 = vmatprep.subr.mxu0 0.0
    %3454 = vmatpush1.msra.mxu0 0.0
    %3455 = vmatprep.subr.mxu0 0.0
    %3456 = vmatpush1.msra.mxu0 0.0
    %3457 = vmatprep.subr.mxu0 0.0
    %3458 = vmatpush1.msra.mxu0 0.0
    %3459 = vmatprep.subr.mxu0 0.0
    %3460 = vmatpush1.msra.mxu0 0.0
    %3461 = vmatprep.subr.mxu0 0.0
    %3462 = vmatpush1.msra.mxu0 0.0
    %3463 = vmatprep.subr.mxu0 0.0
    %3464 = vmatpush1.msra.mxu0 0.0
    %3465 = vmatprep.subr.mxu0 0.0
    %3466 = vmatpush1.msra.mxu0 0.0
    %3467 = vmatprep.subr.mxu0 0.0
    %3468 = vmatpush1.msra.mxu0 0.0
    %3469 = vmatprep.subr.mxu0 0.0
    %3470 = vmatpush1.msra.mxu0 0.0
    %3471 = vmatprep.subr.mxu0 0.0
    %3472 = vmatpush1.msra.mxu0 0.0
    %3473 = vmatprep.subr.mxu0 0.0
    %3474 = vmatpush1.msra.mxu0 0.0
    %3475 = vmatprep.subr.mxu0 0.0
    %3476 = vmatpush1.msra.mxu0 0.0
    %3477 = vmatprep.subr.mxu0 0.0
    %3478 = vmatpush1.msra.mxu0 0.0
    %3479 = vmatprep.subr.mxu0 0.0
    %3480 = vmatpush1.msra.mxu0 %v3447
    %3481 = vmatprep.subr.mxu0 0.0
    %3482 = vmatpush2.msra.mxu0 0.0
    %3483 = vmatprep.subr.mxu0 0.0
    %3484 = vmatpush2.msra.mxu0 0.0
    %3485 = vmatprep.subr.mxu0 0.0
    %3486 = vmatpush2.msra.mxu0 0.0
    %3487 = vmatprep.subr.mxu0 0.0
    %3488 = vmatpush2.msra.mxu0 0.0
    %3489 = vmatprep.subr.mxu0 0.0
    %3490 = vmatpush2.msra.mxu0 0.0
    %3491 = vmatprep.subr.mxu0 0.0
    %3492 = vmatpush2.msra.mxu0 0.0
    %3493 = vmatprep.subr.mxu0 0.0
    %3494 = vmatpush2.msra.mxu0 0.0
    %3495 = vmatprep.subr.mxu0 0.0
    %3496 = vmatpush2.msra.mxu0 0.0
    %3497 = vmatprep.subr.mxu0 0.0
    %3498 = vmatpush2.msra.mxu0 0.0
    %3499 = vmatprep.subr.mxu0 0.0
    %3500 = vmatpush2.msra.mxu0 0.0
    %3501 = vmatprep.subr.mxu0 0.0
    %3502 = vmatpush2.msra.mxu0 0.0
    %3503 = vmatprep.subr.mxu0 0.0
    %3504 = vmatpush2.msra.mxu0 0.0
    %3505 = vmatprep.subr.mxu0 0.0
    %3506 = vmatpush2.msra.mxu0 0.0
    %3507 = vmatprep.subr.mxu0 0.0
    %3508 = vmatpush2.msra.mxu0 0.0
    %3509 = vmatprep.subr.mxu0 0.0
    %3510 = vmatpush2.msra.mxu0 0.0
    %3511 = vmatprep.subr.mxu0 0.0
    %3512 = vmatpush2.msra.mxu0 0.0
    %3513 = vmatprep.mubr.f32.mxu0 0.0
    %3514 = vmatmul.mubr.f32.gmra.mxu0 %v3424
    %v3515 = vpop.f32.mrf.mxu0
    %v3516 = vadd.f32 0.0, %v3515
    %v3517 = vpop.f32.mrf.mxu0
    %3518 = vmatprep.mubr.f32.mxu0 0.0
    %3519 = vmatmul.mubr.f32.gmra.mxu0 %v3427
    %v3520 = vpop.f32.mrf.mxu0
    %v3521 = vadd.f32 0.0, %v3520
    %v3522 = vpop.f32.mrf.mxu0
    %3523 = vmatprep.mubr.f32.mxu0 0.0
    %3524 = vmatmul.mubr.f32.gmra.mxu0 %v3430
    %v3525 = vpop.f32.mrf.mxu0
    %v3526 = vadd.f32 0.0, %v3525
    %v3527 = vpop.f32.mrf.mxu0
    %3528 = vmatprep.mubr.f32.mxu0 0.0
    %3529 = vmatmul.mubr.f32.gmra.mxu0 %v3433
    %v3530 = vpop.f32.mrf.mxu0
    %v3531 = vadd.f32 0.0, %v3530
    %v3532 = vpop.f32.mrf.mxu0
    %3533 = vmatprep.mubr.f32.mxu0 0.0
    %3534 = vmatmul.mubr.f32.gmra.mxu0 %v3436
    %v3535 = vpop.f32.mrf.mxu0
    %v3536 = vadd.f32 0.0, %v3535
    %v3537 = vpop.f32.mrf.mxu0
    %3538 = vmatprep.mubr.f32.mxu0 0.0
    %3539 = vmatmul.mubr.f32.gmra.mxu0 %v3439
    %v3540 = vpop.f32.mrf.mxu0
    %v3541 = vadd.f32 0.0, %v3540
    %v3542 = vpop.f32.mrf.mxu0
    %3543 = vmatprep.mubr.f32.mxu0 0.0
    %3544 = vmatmul.mubr.f32.gmra.mxu0 %v3442
    %v3545 = vpop.f32.mrf.mxu0
    %v3546 = vadd.f32 0.0, %v3545
    %v3547 = vpop.f32.mrf.mxu0
    %3548 = vmatprep.mubr.f32.mxu0 0.0
    %3549 = vmatmul.mubr.f32.gmra.mxu0 %v3445
    %v3550 = vpop.f32.mrf.mxu0
    %v3551 = vadd.f32 0.0, %v3550
    %v3552 = vpop.f32.mrf.mxu0
    %3553 = vdwg.mxu0
    %v3554 = vadd.f32 %v2995, %v3516
    %v3555 = vadd.f32 %v2996, %v3521
    %v3556 = vadd.f32 %v2997, %v3526
    %v3557 = vadd.f32 %v2998, %v3531
    %v3558 = vadd.f32 %v2999, %v3536
    %v3559 = vadd.f32 %v3000, %v3541
    %v3560 = vadd.f32 %v3001, %v3546
    %v3561 = vadd.f32 %v3002, %v3551
    %s3562 = scalar_lea.vmem [#allocation2], 384
    %v3563 = vld [vmem:[%s3562] sm:$0xff]
    %v3564 = vld [vmem:[%s3562 + $0x8] sm:$0xff]
    %v3565 = vld [vmem:[%s3562 + $0x10] sm:$0xff]
    %v3566 = vld [vmem:[%s3562 + $0x18] sm:$0xff]
    %v3567 = vld [vmem:[%s3562 + $0x20] sm:$0xff]
    %v3568 = vld [vmem:[%s3562 + $0x28] sm:$0xff]
    %v3569 = vld [vmem:[%s3562 + $0x30] sm:$0xff]
    %v3570 = vld [vmem:[%s3562 + $0x38] sm:$0xff]
    %3571 = vrot.lane.b32.xlu0 %v186, 104
    %v3572 = vpop.permute.xlu0 %3571
    %3573 = vrot.lane.b32.xlu0 %v187, 104
    %v3574 = vpop.permute.xlu0 %3573
    %3575 = vrot.lane.b32.xlu0 %v188, 104
    %v3576 = vpop.permute.xlu0 %3575
    %3577 = vrot.lane.b32.xlu0 %v189, 104
    %v3578 = vpop.permute.xlu0 %3577
    %3579 = vrot.lane.b32.xlu0 %v190, 104
    %v3580 = vpop.permute.xlu0 %3579
    %3581 = vrot.lane.b32.xlu0 %v191, 104
    %v3582 = vpop.permute.xlu0 %3581
    %3583 = vrot.lane.b32.xlu0 %v192, 104
    %v3584 = vpop.permute.xlu0 %3583
    %3585 = vrot.lane.b32.xlu0 %v193, 104
    %v3586 = vpop.permute.xlu0 %3585
    %3587 = vrot.lane.b32.xlu0 %v148, 72
    %v3588 = vpop.permute.xlu0 %3587
    %3589 = vrot.lane.b32.xlu0 %v153, 72
    %v3590 = vpop.permute.xlu0 %3589
    %3591 = vrot.lane.b32.xlu0 %v158, 72
    %v3592 = vpop.permute.xlu0 %3591
    %3593 = vrot.lane.b32.xlu0 %v163, 72
    %v3594 = vpop.permute.xlu0 %3593
    %3595 = vrot.lane.b32.xlu0 %v168, 72
    %v3596 = vpop.permute.xlu0 %3595
    %3597 = vrot.lane.b32.xlu0 %v173, 72
    %v3598 = vpop.permute.xlu0 %3597
    %3599 = vrot.lane.b32.xlu0 %v178, 72
    %v3600 = vpop.permute.xlu0 %3599
    %3601 = vrot.lane.b32.xlu0 %v183, 72
    %v3602 = vpop.permute.xlu0 %3601
    %v3603 = vsel %vm238, %v3572, 0
    %v3605 = vsel %vm238, %v3574, 0
    %v3607 = vsel %vm238, %v3576, 0
    %v3609 = vsel %vm238, %v3578, 0
    %v3611 = vsel %vm238, %v3580, 0
    %v3613 = vsel %vm238, %v3582, 0
    %v3615 = vsel %vm238, %v3584, 0
    %v3617 = vsel %vm238, %v3586, 0
    %v3619 = vsel %vm238, %v3588, 0
    %v3621 = vsel %vm238, %v3590, 0
    %v3623 = vsel %vm238, %v3592, 0
    %v3625 = vsel %vm238, %v3594, 0
    %v3627 = vsel %vm238, %v3596, 0
    %v3629 = vsel %vm238, %v3598, 0
    %v3631 = vsel %vm238, %v3600, 0
    %v3633 = vsel %vm238, %v3602, 0
    %3635 = vmatprep.subr.mxu0 0.0
    %3636 = vmatpush1.xpose.msra.mxu0 0.0
    %3637 = vmatprep.subr.mxu0 0.0
    %3638 = vmatpush1.xpose.msra.mxu0 0.0
    %3639 = vmatprep.subr.mxu0 0.0
    %3640 = vmatpush1.xpose.msra.mxu0 0.0
    %3641 = vmatprep.subr.mxu0 0.0
    %3642 = vmatpush1.xpose.msra.mxu0 0.0
    %3643 = vmatprep.subr.mxu0 0.0
    %3644 = vmatpush1.xpose.msra.mxu0 0.0
    %3645 = vmatprep.subr.mxu0 0.0
    %3646 = vmatpush1.xpose.msra.mxu0 0.0
    %3647 = vmatprep.subr.mxu0 0.0
    %3648 = vmatpush1.xpose.msra.mxu0 0.0
    %3649 = vmatprep.subr.mxu0 0.0
    %3650 = vmatpush1.xpose.msra.mxu0 0.0
    %3651 = vmatprep.subr.mxu0 0.0
    %3652 = vmatpush1.xpose.msra.mxu0 %v3633
    %3653 = vmatprep.subr.mxu0 0.0
    %3654 = vmatpush1.xpose.msra.mxu0 %v3631
    %3655 = vmatprep.subr.mxu0 0.0
    %3656 = vmatpush1.xpose.msra.mxu0 %v3629
    %3657 = vmatprep.subr.mxu0 0.0
    %3658 = vmatpush1.xpose.msra.mxu0 %v3627
    %3659 = vmatprep.subr.mxu0 0.0
    %3660 = vmatpush1.xpose.msra.mxu0 %v3625
    %3661 = vmatprep.subr.mxu0 0.0
    %3662 = vmatpush1.xpose.msra.mxu0 %v3623
    %3663 = vmatprep.subr.mxu0 0.0
    %3664 = vmatpush1.xpose.msra.mxu0 %v3621
    %3665 = vmatprep.subr.mxu0 0.0
    %3666 = vmatpush1.xpose.msra.mxu0 %v3619
    %3667 = vmatprep.subr.mxu0 0.0
    %3668 = vmatpush2.xpose.msra.mxu0 0.0
    %3669 = vmatprep.subr.mxu0 0.0
    %3670 = vmatpush2.xpose.msra.mxu0 0.0
    %3671 = vmatprep.subr.mxu0 0.0
    %3672 = vmatpush2.xpose.msra.mxu0 0.0
    %3673 = vmatprep.subr.mxu0 0.0
    %3674 = vmatpush2.xpose.msra.mxu0 0.0
    %3675 = vmatprep.subr.mxu0 0.0
    %3676 = vmatpush2.xpose.msra.mxu0 0.0
    %3677 = vmatprep.subr.mxu0 0.0
    %3678 = vmatpush2.xpose.msra.mxu0 0.0
    %3679 = vmatprep.subr.mxu0 0.0
    %3680 = vmatpush2.xpose.msra.mxu0 0.0
    %3681 = vmatprep.subr.mxu0 0.0
    %3682 = vmatpush2.xpose.msra.mxu0 0.0
    %3683 = vmatprep.subr.mxu0 0.0
    %3684 = vmatpush2.xpose.msra.mxu0 0.0
    %3685 = vmatprep.subr.mxu0 0.0
    %3686 = vmatpush2.xpose.msra.mxu0 0.0
    %3687 = vmatprep.subr.mxu0 0.0
    %3688 = vmatpush2.xpose.msra.mxu0 0.0
    %3689 = vmatprep.subr.mxu0 0.0
    %3690 = vmatpush2.xpose.msra.mxu0 0.0
    %3691 = vmatprep.subr.mxu0 0.0
    %3692 = vmatpush2.xpose.msra.mxu0 0.0
    %3693 = vmatprep.subr.mxu0 0.0
    %3694 = vmatpush2.xpose.msra.mxu0 0.0
    %3695 = vmatprep.subr.mxu0 0.0
    %3696 = vmatpush2.xpose.msra.mxu0 0.0
    %3697 = vmatprep.subr.mxu0 0.0
    %3698 = vmatpush2.xpose.msra.mxu0 0.0
    %3699 = vmatprep.mubr.f32.mxu0 0.0
    %3700 = vmatmul.mubr.f32.gmra.mxu0 %v3603
    %v3701 = vpop.f32.mrf.mxu0
    %v3702 = vadd.f32 %v3563, %v3701
    %v3703 = vpop.f32.mrf.mxu0
    %3704 = vmatprep.mubr.f32.mxu0 0.0
    %3705 = vmatmul.mubr.f32.gmra.mxu0 %v3605
    %v3706 = vpop.f32.mrf.mxu0
    %v3707 = vadd.f32 %v3564, %v3706
    %v3708 = vpop.f32.mrf.mxu0
    %3709 = vmatprep.mubr.f32.mxu0 0.0
    %3710 = vmatmul.mubr.f32.gmra.mxu0 %v3607
    %v3711 = vpop.f32.mrf.mxu0
    %v3712 = vadd.f32 %v3565, %v3711
    %v3713 = vpop.f32.mrf.mxu0
    %3714 = vmatprep.mubr.f32.mxu0 0.0
    %3715 = vmatmul.mubr.f32.gmra.mxu0 %v3609
    %v3716 = vpop.f32.mrf.mxu0
    %v3717 = vadd.f32 %v3566, %v3716
    %v3718 = vpop.f32.mrf.mxu0
    %3719 = vmatprep.mubr.f32.mxu0 0.0
    %3720 = vmatmul.mubr.f32.gmra.mxu0 %v3611
    %v3721 = vpop.f32.mrf.mxu0
    %v3722 = vadd.f32 %v3567, %v3721
    %v3723 = vpop.f32.mrf.mxu0
    %3724 = vmatprep.mubr.f32.mxu0 0.0
    %3725 = vmatmul.mubr.f32.gmra.mxu0 %v3613
    %v3726 = vpop.f32.mrf.mxu0
    %v3727 = vadd.f32 %v3568, %v3726
    %v3728 = vpop.f32.mrf.mxu0
    %3729 = vmatprep.mubr.f32.mxu0 0.0
    %3730 = vmatmul.mubr.f32.gmra.mxu0 %v3615
    %v3731 = vpop.f32.mrf.mxu0
    %v3732 = vadd.f32 %v3569, %v3731
    %v3733 = vpop.f32.mrf.mxu0
    %3734 = vmatprep.mubr.f32.mxu0 0.0
    %3735 = vmatmul.mubr.f32.gmra.mxu0 %v3617
    %v3736 = vpop.f32.mrf.mxu0
    %v3737 = vadd.f32 %v3570, %v3736
    %v3738 = vpop.f32.mrf.mxu0
    %3739 = vdwg.mxu0
    %v3740 = vsel %vm384, %v3702, -inf
    %3741 = vmax.xlane.f32.xlu0 %v3740
    %v3742 = vpop.xlane.xlu0 %3741
    %v3743 = vsel %vm384, %v3707, -inf
    %3744 = vmax.xlane.f32.xlu0 %v3743
    %v3745 = vpop.xlane.xlu0 %3744
    %v3746 = vsel %vm384, %v3712, -inf
    %3747 = vmax.xlane.f32.xlu0 %v3746
    %v3748 = vpop.xlane.xlu0 %3747
    %v3749 = vsel %vm384, %v3717, -inf
    %3750 = vmax.xlane.f32.xlu0 %v3749
    %v3751 = vpop.xlane.xlu0 %3750
    %v3752 = vsel %vm384, %v3722, -inf
    %3753 = vmax.xlane.f32.xlu0 %v3752
    %v3754 = vpop.xlane.xlu0 %3753
    %v3755 = vsel %vm384, %v3727, -inf
    %3756 = vmax.xlane.f32.xlu0 %v3755
    %v3757 = vpop.xlane.xlu0 %3756
    %v3758 = vsel %vm384, %v3732, -inf
    %3759 = vmax.xlane.f32.xlu0 %v3758
    %v3760 = vpop.xlane.xlu0 %3759
    %v3761 = vsel %vm384, %v3737, -inf
    %3762 = vmax.xlane.f32.xlu0 %v3761
    %v3763 = vpop.xlane.xlu0 %3762
    %v3764 = vsub.f32 %v3702, %v3742
    %v3765 = vsub.f32 %v3707, %v3745
    %v3766 = vsub.f32 %v3712, %v3748
    %v3767 = vsub.f32 %v3717, %v3751
    %v3768 = vsub.f32 %v3722, %v3754
    %v3769 = vsub.f32 %v3727, %v3757
    %v3770 = vsub.f32 %v3732, %v3760
    %v3771 = vsub.f32 %v3737, %v3763
    %v3772 = vmul.f32 %v3764, 1.442695
    %v3773 = vpow.pop %v3772
    %v3774 = vmul.f32 %v3765, 1.442695
    %v3775 = vpow.pop %v3774
    %v3776 = vmul.f32 %v3766, 1.442695
    %v3777 = vpow.pop %v3776
    %v3778 = vmul.f32 %v3767, 1.442695
    %v3779 = vpow.pop %v3778
    %v3780 = vmul.f32 %v3768, 1.442695
    %v3781 = vpow.pop %v3780
    %v3782 = vmul.f32 %v3769, 1.442695
    %v3783 = vpow.pop %v3782
    %v3784 = vmul.f32 %v3770, 1.442695
    %v3785 = vpow.pop %v3784
    %v3786 = vmul.f32 %v3771, 1.442695
    %v3787 = vpow.pop %v3786
    %v3788 = vsel %vm384, %v3773, 0.0
    %3789 = vadd.xlane.f32.xlu0 %v3788
    %v3790 = vpop.xlane.xlu0 %3789
    %v3791 = vsel %vm384, %v3775, 0.0
    %3792 = vadd.xlane.f32.xlu0 %v3791
    %v3793 = vpop.xlane.xlu0 %3792
    %v3794 = vsel %vm384, %v3777, 0.0
    %3795 = vadd.xlane.f32.xlu0 %v3794
    %v3796 = vpop.xlane.xlu0 %3795
    %v3797 = vsel %vm384, %v3779, 0.0
    %3798 = vadd.xlane.f32.xlu0 %v3797
    %v3799 = vpop.xlane.xlu0 %3798
    %v3800 = vsel %vm384, %v3781, 0.0
    %3801 = vadd.xlane.f32.xlu0 %v3800
    %v3802 = vpop.xlane.xlu0 %3801
    %v3803 = vsel %vm384, %v3783, 0.0
    %3804 = vadd.xlane.f32.xlu0 %v3803
    %v3805 = vpop.xlane.xlu0 %3804
    %v3806 = vsel %vm384, %v3785, 0.0
    %3807 = vadd.xlane.f32.xlu0 %v3806
    %v3808 = vpop.xlane.xlu0 %3807
    %v3809 = vsel %vm384, %v3787, 0.0
    %3810 = vadd.xlane.f32.xlu0 %v3809
    %v3811 = vpop.xlane.xlu0 %3810
    %v3812 = vrcp.pop %v3790
    %v3813 = vrcp.pop %v3793
    %v3814 = vrcp.pop %v3796
    %v3815 = vrcp.pop %v3799
    %v3816 = vrcp.pop %v3802
    %v3817 = vrcp.pop %v3805
    %v3818 = vrcp.pop %v3808
    %v3819 = vrcp.pop %v3811
    %v3820 = vmul.f32 %v3773, %v3812
    %v3821 = vmul.f32 %v3775, %v3813
    %v3822 = vmul.f32 %v3777, %v3814
    %v3823 = vmul.f32 %v3779, %v3815
    %v3824 = vmul.f32 %v3781, %v3816
    %v3825 = vmul.f32 %v3783, %v3817
    %v3826 = vmul.f32 %v3785, %v3818
    %v3827 = vmul.f32 %v3787, %v3819
    %3828 = vrot.lane.b32.xlu0 %v148, 40
    %v3829 = vpop.permute.xlu0 %3828
    %3830 = vrot.lane.b32.xlu0 %v153, 40
    %v3831 = vpop.permute.xlu0 %3830
    %3832 = vrot.lane.b32.xlu0 %v158, 40
    %v3833 = vpop.permute.xlu0 %3832
    %3834 = vrot.lane.b32.xlu0 %v163, 40
    %v3835 = vpop.permute.xlu0 %3834
    %3836 = vrot.lane.b32.xlu0 %v168, 40
    %v3837 = vpop.permute.xlu0 %3836
    %3838 = vrot.lane.b32.xlu0 %v173, 40
    %v3839 = vpop.permute.xlu0 %3838
    %3840 = vrot.lane.b32.xlu0 %v178, 40
    %v3841 = vpop.permute.xlu0 %3840
    %3842 = vrot.lane.b32.xlu0 %v183, 40
    %v3843 = vpop.permute.xlu0 %3842
    %v3853 = vsel %vm384, %v3820, 0
    %v3856 = vsel %vm384, %v3821, 0
    %v3859 = vsel %vm384, %v3822, 0
    %v3862 = vsel %vm384, %v3823, 0
    %v3865 = vsel %vm384, %v3824, 0
    %v3868 = vsel %vm384, %v3825, 0
    %v3871 = vsel %vm384, %v3826, 0
    %v3874 = vsel %vm384, %v3827, 0
    %3876 = vmatprep.subr.mxu0 0.0
    %3877 = vmatpush1.msra.mxu0 0.0
    %3878 = vmatprep.subr.mxu0 0.0
    %3879 = vmatpush1.msra.mxu0 0.0
    %3880 = vmatprep.subr.mxu0 0.0
    %3881 = vmatpush1.msra.mxu0 0.0
    %3882 = vmatprep.subr.mxu0 0.0
    %3883 = vmatpush1.msra.mxu0 0.0
    %3884 = vmatprep.subr.mxu0 0.0
    %3885 = vmatpush1.msra.mxu0 0.0
    %3886 = vmatprep.subr.mxu0 0.0
    %3887 = vmatpush1.msra.mxu0 0.0
    %3888 = vmatprep.subr.mxu0 0.0
    %3889 = vmatpush1.msra.mxu0 0.0
    %3890 = vmatprep.subr.mxu0 0.0
    %3891 = vmatpush1.msra.mxu0 0.0
    %3892 = vmatprep.subr.mxu0 0.0
    %3893 = vmatpush1.msra.mxu0 %v3843
    %3894 = vmatprep.subr.mxu0 0.0
    %3895 = vmatpush1.msra.mxu0 %v3841
    %3896 = vmatprep.subr.mxu0 0.0
    %3897 = vmatpush1.msra.mxu0 %v3839
    %3898 = vmatprep.subr.mxu0 0.0
    %3899 = vmatpush1.msra.mxu0 %v3837
    %3900 = vmatprep.subr.mxu0 0.0
    %3901 = vmatpush1.msra.mxu0 %v3835
    %3902 = vmatprep.subr.mxu0 0.0
    %3903 = vmatpush1.msra.mxu0 %v3833
    %3904 = vmatprep.subr.mxu0 0.0
    %3905 = vmatpush1.msra.mxu0 %v3831
    %3906 = vmatprep.subr.mxu0 0.0
    %3907 = vmatpush1.msra.mxu0 %v3829
    %3908 = vmatprep.subr.mxu0 0.0
    %3909 = vmatpush2.msra.mxu0 0.0
    %3910 = vmatprep.subr.mxu0 0.0
    %3911 = vmatpush2.msra.mxu0 0.0
    %3912 = vmatprep.subr.mxu0 0.0
    %3913 = vmatpush2.msra.mxu0 0.0
    %3914 = vmatprep.subr.mxu0 0.0
    %3915 = vmatpush2.msra.mxu0 0.0
    %3916 = vmatprep.subr.mxu0 0.0
    %3917 = vmatpush2.msra.mxu0 0.0
    %3918 = vmatprep.subr.mxu0 0.0
    %3919 = vmatpush2.msra.mxu0 0.0
    %3920 = vmatprep.subr.mxu0 0.0
    %3921 = vmatpush2.msra.mxu0 0.0
    %3922 = vmatprep.subr.mxu0 0.0
    %3923 = vmatpush2.msra.mxu0 0.0
    %3924 = vmatprep.subr.mxu0 0.0
    %3925 = vmatpush2.msra.mxu0 0.0
    %3926 = vmatprep.subr.mxu0 0.0
    %3927 = vmatpush2.msra.mxu0 0.0
    %3928 = vmatprep.subr.mxu0 0.0
    %3929 = vmatpush2.msra.mxu0 0.0
    %3930 = vmatprep.subr.mxu0 0.0
    %3931 = vmatpush2.msra.mxu0 0.0
    %3932 = vmatprep.subr.mxu0 0.0
    %3933 = vmatpush2.msra.mxu0 0.0
    %3934 = vmatprep.subr.mxu0 0.0
    %3935 = vmatpush2.msra.mxu0 0.0
    %3936 = vmatprep.subr.mxu0 0.0
    %3937 = vmatpush2.msra.mxu0 0.0
    %3938 = vmatprep.subr.mxu0 0.0
    %3939 = vmatpush2.msra.mxu0 0.0
    %3940 = vmatprep.mubr.f32.mxu0 0.0
    %3941 = vmatmul.mubr.f32.gmra.mxu0 %v3853
    %v3942 = vpop.f32.mrf.mxu0
    %v3943 = vadd.f32 0.0, %v3942
    %v3944 = vpop.f32.mrf.mxu0
    %3945 = vmatprep.mubr.f32.mxu0 0.0
    %3946 = vmatmul.mubr.f32.gmra.mxu0 %v3856
    %v3947 = vpop.f32.mrf.mxu0
    %v3948 = vadd.f32 0.0, %v3947
    %v3949 = vpop.f32.mrf.mxu0
    %3950 = vmatprep.mubr.f32.mxu0 0.0
    %3951 = vmatmul.mubr.f32.gmra.mxu0 %v3859
    %v3952 = vpop.f32.mrf.mxu0
    %v3953 = vadd.f32 0.0, %v3952
    %v3954 = vpop.f32.mrf.mxu0
    %3955 = vmatprep.mubr.f32.mxu0 0.0
    %3956 = vmatmul.mubr.f32.gmra.mxu0 %v3862
    %v3957 = vpop.f32.mrf.mxu0
    %v3958 = vadd.f32 0.0, %v3957
    %v3959 = vpop.f32.mrf.mxu0
    %3960 = vmatprep.mubr.f32.mxu0 0.0
    %3961 = vmatmul.mubr.f32.gmra.mxu0 %v3865
    %v3962 = vpop.f32.mrf.mxu0
    %v3963 = vadd.f32 0.0, %v3962
    %v3964 = vpop.f32.mrf.mxu0
    %3965 = vmatprep.mubr.f32.mxu0 0.0
    %3966 = vmatmul.mubr.f32.gmra.mxu0 %v3868
    %v3967 = vpop.f32.mrf.mxu0
    %v3968 = vadd.f32 0.0, %v3967
    %v3969 = vpop.f32.mrf.mxu0
    %3970 = vmatprep.mubr.f32.mxu0 0.0
    %3971 = vmatmul.mubr.f32.gmra.mxu0 %v3871
    %v3972 = vpop.f32.mrf.mxu0
    %v3973 = vadd.f32 0.0, %v3972
    %v3974 = vpop.f32.mrf.mxu0
    %3975 = vmatprep.mubr.f32.mxu0 0.0
    %3976 = vmatmul.mubr.f32.gmra.mxu0 %v3874
    %v3977 = vpop.f32.mrf.mxu0
    %v3978 = vadd.f32 0.0, %v3977
    %v3979 = vpop.f32.mrf.mxu0
    %3980 = vdwg.mxu0
    %v3982 = vsel %vm238, %v3943, 0
    %v3985 = vsel %vm238, %v3948, 0
    %v3988 = vsel %vm238, %v3953, 0
    %v3991 = vsel %vm238, %v3958, 0
    %v3994 = vsel %vm238, %v3963, 0
    %v3997 = vsel %vm238, %v3968, 0
    %v4000 = vsel %vm238, %v3973, 0
    %v4003 = vsel %vm238, %v3978, 0
    %v4006 = vsel %vm650, %v197, 0
    %4008 = vmatprep.subr.mxu0 0.0
    %4009 = vmatpush1.msra.mxu0 0.0
    %4010 = vmatprep.subr.mxu0 0.0
    %4011 = vmatpush1.msra.mxu0 0.0
    %4012 = vmatprep.subr.mxu0 0.0
    %4013 = vmatpush1.msra.mxu0 0.0
    %4014 = vmatprep.subr.mxu0 0.0
    %4015 = vmatpush1.msra.mxu0 0.0
    %4016 = vmatprep.subr.mxu0 0.0
    %4017 = vmatpush1.msra.mxu0 0.0
    %4018 = vmatprep.subr.mxu0 0.0
    %4019 = vmatpush1.msra.mxu0 0.0
    %4020 = vmatprep.subr.mxu0 0.0
    %4021 = vmatpush1.msra.mxu0 0.0
    %4022 = vmatprep.subr.mxu0 0.0
    %4023 = vmatpush1.msra.mxu0 0.0
    %4024 = vmatprep.subr.mxu0 0.0
    %4025 = vmatpush1.msra.mxu0 0.0
    %4026 = vmatprep.subr.mxu0 0.0
    %4027 = vmatpush1.msra.mxu0 0.0
    %4028 = vmatprep.subr.mxu0 0.0
    %4029 = vmatpush1.msra.mxu0 0.0
    %4030 = vmatprep.subr.mxu0 0.0
    %4031 = vmatpush1.msra.mxu0 0.0
    %4032 = vmatprep.subr.mxu0 0.0
    %4033 = vmatpush1.msra.mxu0 0.0
    %4034 = vmatprep.subr.mxu0 0.0
    %4035 = vmatpush1.msra.mxu0 0.0
    %4036 = vmatprep.subr.mxu0 0.0
    %4037 = vmatpush1.msra.mxu0 0.0
    %4038 = vmatprep.subr.mxu0 0.0
    %4039 = vmatpush1.msra.mxu0 %v4006
    %4040 = vmatprep.subr.mxu0 0.0
    %4041 = vmatpush2.msra.mxu0 0.0
    %4042 = vmatprep.subr.mxu0 0.0
    %4043 = vmatpush2.msra.mxu0 0.0
    %4044 = vmatprep.subr.mxu0 0.0
    %4045 = vmatpush2.msra.mxu0 0.0
    %4046 = vmatprep.subr.mxu0 0.0
    %4047 = vmatpush2.msra.mxu0 0.0
    %4048 = vmatprep.subr.mxu0 0.0
    %4049 = vmatpush2.msra.mxu0 0.0
    %4050 = vmatprep.subr.mxu0 0.0
    %4051 = vmatpush2.msra.mxu0 0.0
    %4052 = vmatprep.subr.mxu0 0.0
    %4053 = vmatpush2.msra.mxu0 0.0
    %4054 = vmatprep.subr.mxu0 0.0
    %4055 = vmatpush2.msra.mxu0 0.0
    %4056 = vmatprep.subr.mxu0 0.0
    %4057 = vmatpush2.msra.mxu0 0.0
    %4058 = vmatprep.subr.mxu0 0.0
    %4059 = vmatpush2.msra.mxu0 0.0
    %4060 = vmatprep.subr.mxu0 0.0
    %4061 = vmatpush2.msra.mxu0 0.0
    %4062 = vmatprep.subr.mxu0 0.0
    %4063 = vmatpush2.msra.mxu0 0.0
    %4064 = vmatprep.subr.mxu0 0.0
    %4065 = vmatpush2.msra.mxu0 0.0
    %4066 = vmatprep.subr.mxu0 0.0
    %4067 = vmatpush2.msra.mxu0 0.0
    %4068 = vmatprep.subr.mxu0 0.0
    %4069 = vmatpush2.msra.mxu0 0.0
    %4070 = vmatprep.subr.mxu0 0.0
    %4071 = vmatpush2.msra.mxu0 0.0
    %4072 = vmatprep.mubr.f32.mxu0 0.0
    %4073 = vmatmul.mubr.f32.gmra.mxu0 %v3982
    %v4074 = vpop.f32.mrf.mxu0
    %v4075 = vadd.f32 0.0, %v4074
    %v4076 = vpop.f32.mrf.mxu0
    %4077 = vmatprep.mubr.f32.mxu0 0.0
    %4078 = vmatmul.mubr.f32.gmra.mxu0 %v3985
    %v4079 = vpop.f32.mrf.mxu0
    %v4080 = vadd.f32 0.0, %v4079
    %v4081 = vpop.f32.mrf.mxu0
    %4082 = vmatprep.mubr.f32.mxu0 0.0
    %4083 = vmatmul.mubr.f32.gmra.mxu0 %v3988
    %v4084 = vpop.f32.mrf.mxu0
    %v4085 = vadd.f32 0.0, %v4084
    %v4086 = vpop.f32.mrf.mxu0
    %4087 = vmatprep.mubr.f32.mxu0 0.0
    %4088 = vmatmul.mubr.f32.gmra.mxu0 %v3991
    %v4089 = vpop.f32.mrf.mxu0
    %v4090 = vadd.f32 0.0, %v4089
    %v4091 = vpop.f32.mrf.mxu0
    %4092 = vmatprep.mubr.f32.mxu0 0.0
    %4093 = vmatmul.mubr.f32.gmra.mxu0 %v3994
    %v4094 = vpop.f32.mrf.mxu0
    %v4095 = vadd.f32 0.0, %v4094
    %v4096 = vpop.f32.mrf.mxu0
    %4097 = vmatprep.mubr.f32.mxu0 0.0
    %4098 = vmatmul.mubr.f32.gmra.mxu0 %v3997
    %v4099 = vpop.f32.mrf.mxu0
    %v4100 = vadd.f32 0.0, %v4099
    %v4101 = vpop.f32.mrf.mxu0
    %4102 = vmatprep.mubr.f32.mxu0 0.0
    %4103 = vmatmul.mubr.f32.gmra.mxu0 %v4000
    %v4104 = vpop.f32.mrf.mxu0
    %v4105 = vadd.f32 0.0, %v4104
    %v4106 = vpop.f32.mrf.mxu0
    %4107 = vmatprep.mubr.f32.mxu0 0.0
    %4108 = vmatmul.mubr.f32.gmra.mxu0 %v4003
    %v4109 = vpop.f32.mrf.mxu0
    %v4110 = vadd.f32 0.0, %v4109
    %v4111 = vpop.f32.mrf.mxu0
    %4112 = vdwg.mxu0
    %v4113 = vadd.f32 %v3554, %v4075
    %v4114 = vadd.f32 %v3555, %v4080
    %v4115 = vadd.f32 %v3556, %v4085
    %v4116 = vadd.f32 %v3557, %v4090
    %v4117 = vadd.f32 %v3558, %v4095
    %v4118 = vadd.f32 %v3559, %v4100
    %v4119 = vadd.f32 %v3560, %v4105
    %v4120 = vadd.f32 %v3561, %v4110
    %s4121 = scalar_lea.vmem [#allocation2], 448
    %v4122 = vld [vmem:[%s4121] sm:$0xff]
    %v4123 = vld [vmem:[%s4121 + $0x8] sm:$0xff]
    %v4124 = vld [vmem:[%s4121 + $0x10] sm:$0xff]
    %v4125 = vld [vmem:[%s4121 + $0x18] sm:$0xff]
    %v4126 = vld [vmem:[%s4121 + $0x20] sm:$0xff]
    %v4127 = vld [vmem:[%s4121 + $0x28] sm:$0xff]
    %v4128 = vld [vmem:[%s4121 + $0x30] sm:$0xff]
    %v4129 = vld [vmem:[%s4121 + $0x38] sm:$0xff]
    %4130 = vrot.lane.b32.xlu0 %v186, 100
    %v4131 = vpop.permute.xlu0 %4130
    %4132 = vrot.lane.b32.xlu0 %v187, 100
    %v4133 = vpop.permute.xlu0 %4132
    %4134 = vrot.lane.b32.xlu0 %v188, 100
    %v4135 = vpop.permute.xlu0 %4134
    %4136 = vrot.lane.b32.xlu0 %v189, 100
    %v4137 = vpop.permute.xlu0 %4136
    %4138 = vrot.lane.b32.xlu0 %v190, 100
    %v4139 = vpop.permute.xlu0 %4138
    %4140 = vrot.lane.b32.xlu0 %v191, 100
    %v4141 = vpop.permute.xlu0 %4140
    %4142 = vrot.lane.b32.xlu0 %v192, 100
    %v4143 = vpop.permute.xlu0 %4142
    %4144 = vrot.lane.b32.xlu0 %v193, 100
    %v4145 = vpop.permute.xlu0 %4144
    %4146 = vrot.lane.b32.xlu0 %v148, 68
    %v4147 = vpop.permute.xlu0 %4146
    %4148 = vrot.lane.b32.xlu0 %v153, 68
    %v4149 = vpop.permute.xlu0 %4148
    %4150 = vrot.lane.b32.xlu0 %v158, 68
    %v4151 = vpop.permute.xlu0 %4150
    %4152 = vrot.lane.b32.xlu0 %v163, 68
    %v4153 = vpop.permute.xlu0 %4152
    %4154 = vrot.lane.b32.xlu0 %v168, 68
    %v4155 = vpop.permute.xlu0 %4154
    %4156 = vrot.lane.b32.xlu0 %v173, 68
    %v4157 = vpop.permute.xlu0 %4156
    %4158 = vrot.lane.b32.xlu0 %v178, 68
    %v4159 = vpop.permute.xlu0 %4158
    %4160 = vrot.lane.b32.xlu0 %v183, 68
    %v4161 = vpop.permute.xlu0 %4160
    %v4162 = vsel %vm238, %v4131, 0
    %v4164 = vsel %vm238, %v4133, 0
    %v4166 = vsel %vm238, %v4135, 0
    %v4168 = vsel %vm238, %v4137, 0
    %v4170 = vsel %vm238, %v4139, 0
    %v4172 = vsel %vm238, %v4141, 0
    %v4174 = vsel %vm238, %v4143, 0
    %v4176 = vsel %vm238, %v4145, 0
    %v4178 = vsel %vm238, %v4147, 0
    %v4180 = vsel %vm238, %v4149, 0
    %v4182 = vsel %vm238, %v4151, 0
    %v4184 = vsel %vm238, %v4153, 0
    %v4186 = vsel %vm238, %v4155, 0
    %v4188 = vsel %vm238, %v4157, 0
    %v4190 = vsel %vm238, %v4159, 0
    %v4192 = vsel %vm238, %v4161, 0
    %4194 = vmatprep.subr.mxu0 0.0
    %4195 = vmatpush1.xpose.msra.mxu0 0.0
    %4196 = vmatprep.subr.mxu0 0.0
    %4197 = vmatpush1.xpose.msra.mxu0 0.0
    %4198 = vmatprep.subr.mxu0 0.0
    %4199 = vmatpush1.xpose.msra.mxu0 0.0
    %4200 = vmatprep.subr.mxu0 0.0
    %4201 = vmatpush1.xpose.msra.mxu0 0.0
    %4202 = vmatprep.subr.mxu0 0.0
    %4203 = vmatpush1.xpose.msra.mxu0 0.0
    %4204 = vmatprep.subr.mxu0 0.0
    %4205 = vmatpush1.xpose.msra.mxu0 0.0
    %4206 = vmatprep.subr.mxu0 0.0
    %4207 = vmatpush1.xpose.msra.mxu0 0.0
    %4208 = vmatprep.subr.mxu0 0.0
    %4209 = vmatpush1.xpose.msra.mxu0 0.0
    %4210 = vmatprep.subr.mxu0 0.0
    %4211 = vmatpush1.xpose.msra.mxu0 %v4192
    %4212 = vmatprep.subr.mxu0 0.0
    %4213 = vmatpush1.xpose.msra.mxu0 %v4190
    %4214 = vmatprep.subr.mxu0 0.0
    %4215 = vmatpush1.xpose.msra.mxu0 %v4188
    %4216 = vmatprep.subr.mxu0 0.0
    %4217 = vmatpush1.xpose.msra.mxu0 %v4186
    %4218 = vmatprep.subr.mxu0 0.0
    %4219 = vmatpush1.xpose.msra.mxu0 %v4184
    %4220 = vmatprep.subr.mxu0 0.0
    %4221 = vmatpush1.xpose.msra.mxu0 %v4182
    %4222 = vmatprep.subr.mxu0 0.0
    %4223 = vmatpush1.xpose.msra.mxu0 %v4180
    %4224 = vmatprep.subr.mxu0 0.0
    %4225 = vmatpush1.xpose.msra.mxu0 %v4178
    %4226 = vmatprep.subr.mxu0 0.0
    %4227 = vmatpush2.xpose.msra.mxu0 0.0
    %4228 = vmatprep.subr.mxu0 0.0
    %4229 = vmatpush2.xpose.msra.mxu0 0.0
    %4230 = vmatprep.subr.mxu0 0.0
    %4231 = vmatpush2.xpose.msra.mxu0 0.0
    %4232 = vmatprep.subr.mxu0 0.0
    %4233 = vmatpush2.xpose.msra.mxu0 0.0
    %4234 = vmatprep.subr.mxu0 0.0
    %4235 = vmatpush2.xpose.msra.mxu0 0.0
    %4236 = vmatprep.subr.mxu0 0.0
    %4237 = vmatpush2.xpose.msra.mxu0 0.0
    %4238 = vmatprep.subr.mxu0 0.0
    %4239 = vmatpush2.xpose.msra.mxu0 0.0
    %4240 = vmatprep.subr.mxu0 0.0
    %4241 = vmatpush2.xpose.msra.mxu0 0.0
    %4242 = vmatprep.subr.mxu0 0.0
    %4243 = vmatpush2.xpose.msra.mxu0 0.0
    %4244 = vmatprep.subr.mxu0 0.0
    %4245 = vmatpush2.xpose.msra.mxu0 0.0
    %4246 = vmatprep.subr.mxu0 0.0
    %4247 = vmatpush2.xpose.msra.mxu0 0.0
    %4248 = vmatprep.subr.mxu0 0.0
    %4249 = vmatpush2.xpose.msra.mxu0 0.0
    %4250 = vmatprep.subr.mxu0 0.0
    %4251 = vmatpush2.xpose.msra.mxu0 0.0
    %4252 = vmatprep.subr.mxu0 0.0
    %4253 = vmatpush2.xpose.msra.mxu0 0.0
    %4254 = vmatprep.subr.mxu0 0.0
    %4255 = vmatpush2.xpose.msra.mxu0 0.0
    %4256 = vmatprep.subr.mxu0 0.0
    %4257 = vmatpush2.xpose.msra.mxu0 0.0
    %4258 = vmatprep.mubr.f32.mxu0 0.0
    %4259 = vmatmul.mubr.f32.gmra.mxu0 %v4162
    %v4260 = vpop.f32.mrf.mxu0
    %v4261 = vadd.f32 %v4122, %v4260
    %v4262 = vpop.f32.mrf.mxu0
    %4263 = vmatprep.mubr.f32.mxu0 0.0
    %4264 = vmatmul.mubr.f32.gmra.mxu0 %v4164
    %v4265 = vpop.f32.mrf.mxu0
    %v4266 = vadd.f32 %v4123, %v4265
    %v4267 = vpop.f32.mrf.mxu0
    %4268 = vmatprep.mubr.f32.mxu0 0.0
    %4269 = vmatmul.mubr.f32.gmra.mxu0 %v4166
    %v4270 = vpop.f32.mrf.mxu0
    %v4271 = vadd.f32 %v4124, %v4270
    %v4272 = vpop.f32.mrf.mxu0
    %4273 = vmatprep.mubr.f32.mxu0 0.0
    %4274 = vmatmul.mubr.f32.gmra.mxu0 %v4168
    %v4275 = vpop.f32.mrf.mxu0
    %v4276 = vadd.f32 %v4125, %v4275
    %v4277 = vpop.f32.mrf.mxu0
    %4278 = vmatprep.mubr.f32.mxu0 0.0
    %4279 = vmatmul.mubr.f32.gmra.mxu0 %v4170
    %v4280 = vpop.f32.mrf.mxu0
    %v4281 = vadd.f32 %v4126, %v4280
    %v4282 = vpop.f32.mrf.mxu0
    %4283 = vmatprep.mubr.f32.mxu0 0.0
    %4284 = vmatmul.mubr.f32.gmra.mxu0 %v4172
    %v4285 = vpop.f32.mrf.mxu0
    %v4286 = vadd.f32 %v4127, %v4285
    %v4287 = vpop.f32.mrf.mxu0
    %4288 = vmatprep.mubr.f32.mxu0 0.0
    %4289 = vmatmul.mubr.f32.gmra.mxu0 %v4174
    %v4290 = vpop.f32.mrf.mxu0
    %v4291 = vadd.f32 %v4128, %v4290
    %v4292 = vpop.f32.mrf.mxu0
    %4293 = vmatprep.mubr.f32.mxu0 0.0
    %4294 = vmatmul.mubr.f32.gmra.mxu0 %v4176
    %v4295 = vpop.f32.mrf.mxu0
    %v4296 = vadd.f32 %v4129, %v4295
    %v4297 = vpop.f32.mrf.mxu0
    %4298 = vdwg.mxu0
    %v4299 = vsel %vm384, %v4261, -inf
    %4300 = vmax.xlane.f32.xlu0 %v4299
    %v4301 = vpop.xlane.xlu0 %4300
    %v4302 = vsel %vm384, %v4266, -inf
    %4303 = vmax.xlane.f32.xlu0 %v4302
    %v4304 = vpop.xlane.xlu0 %4303
    %v4305 = vsel %vm384, %v4271, -inf
    %4306 = vmax.xlane.f32.xlu0 %v4305
    %v4307 = vpop.xlane.xlu0 %4306
    %v4308 = vsel %vm384, %v4276, -inf
    %4309 = vmax.xlane.f32.xlu0 %v4308
    %v4310 = vpop.xlane.xlu0 %4309
    %v4311 = vsel %vm384, %v4281, -inf
    %4312 = vmax.xlane.f32.xlu0 %v4311
    %v4313 = vpop.xlane.xlu0 %4312
    %v4314 = vsel %vm384, %v4286, -inf
    %4315 = vmax.xlane.f32.xlu0 %v4314
    %v4316 = vpop.xlane.xlu0 %4315
    %v4317 = vsel %vm384, %v4291, -inf
    %4318 = vmax.xlane.f32.xlu0 %v4317
    %v4319 = vpop.xlane.xlu0 %4318
    %v4320 = vsel %vm384, %v4296, -inf
    %4321 = vmax.xlane.f32.xlu0 %v4320
    %v4322 = vpop.xlane.xlu0 %4321
    %v4323 = vsub.f32 %v4261, %v4301
    %v4324 = vsub.f32 %v4266, %v4304
    %v4325 = vsub.f32 %v4271, %v4307
    %v4326 = vsub.f32 %v4276, %v4310
    %v4327 = vsub.f32 %v4281, %v4313
    %v4328 = vsub.f32 %v4286, %v4316
    %v4329 = vsub.f32 %v4291, %v4319
    %v4330 = vsub.f32 %v4296, %v4322
    %v4331 = vmul.f32 %v4323, 1.442695
    %v4332 = vpow.pop %v4331
    %v4333 = vmul.f32 %v4324, 1.442695
    %v4334 = vpow.pop %v4333
    %v4335 = vmul.f32 %v4325, 1.442695
    %v4336 = vpow.pop %v4335
    %v4337 = vmul.f32 %v4326, 1.442695
    %v4338 = vpow.pop %v4337
    %v4339 = vmul.f32 %v4327, 1.442695
    %v4340 = vpow.pop %v4339
    %v4341 = vmul.f32 %v4328, 1.442695
    %v4342 = vpow.pop %v4341
    %v4343 = vmul.f32 %v4329, 1.442695
    %v4344 = vpow.pop %v4343
    %v4345 = vmul.f32 %v4330, 1.442695
    %v4346 = vpow.pop %v4345
    %v4347 = vsel %vm384, %v4332, 0.0
    %4348 = vadd.xlane.f32.xlu0 %v4347
    %v4349 = vpop.xlane.xlu0 %4348
    %v4350 = vsel %vm384, %v4334, 0.0
    %4351 = vadd.xlane.f32.xlu0 %v4350
    %v4352 = vpop.xlane.xlu0 %4351
    %v4353 = vsel %vm384, %v4336, 0.0
    %4354 = vadd.xlane.f32.xlu0 %v4353
    %v4355 = vpop.xlane.xlu0 %4354
    %v4356 = vsel %vm384, %v4338, 0.0
    %4357 = vadd.xlane.f32.xlu0 %v4356
    %v4358 = vpop.xlane.xlu0 %4357
    %v4359 = vsel %vm384, %v4340, 0.0
    %4360 = vadd.xlane.f32.xlu0 %v4359
    %v4361 = vpop.xlane.xlu0 %4360
    %v4362 = vsel %vm384, %v4342, 0.0
    %4363 = vadd.xlane.f32.xlu0 %v4362
    %v4364 = vpop.xlane.xlu0 %4363
    %v4365 = vsel %vm384, %v4344, 0.0
    %4366 = vadd.xlane.f32.xlu0 %v4365
    %v4367 = vpop.xlane.xlu0 %4366
    %v4368 = vsel %vm384, %v4346, 0.0
    %4369 = vadd.xlane.f32.xlu0 %v4368
    %v4370 = vpop.xlane.xlu0 %4369
    %v4371 = vrcp.pop %v4349
    %v4372 = vrcp.pop %v4352
    %v4373 = vrcp.pop %v4355
    %v4374 = vrcp.pop %v4358
    %v4375 = vrcp.pop %v4361
    %v4376 = vrcp.pop %v4364
    %v4377 = vrcp.pop %v4367
    %v4378 = vrcp.pop %v4370
    %v4379 = vmul.f32 %v4332, %v4371
    %v4380 = vmul.f32 %v4334, %v4372
    %v4381 = vmul.f32 %v4336, %v4373
    %v4382 = vmul.f32 %v4338, %v4374
    %v4383 = vmul.f32 %v4340, %v4375
    %v4384 = vmul.f32 %v4342, %v4376
    %v4385 = vmul.f32 %v4344, %v4377
    %v4386 = vmul.f32 %v4346, %v4378
    %4387 = vrot.lane.b32.xlu0 %v148, 36
    %v4388 = vpop.permute.xlu0 %4387
    %4389 = vrot.lane.b32.xlu0 %v153, 36
    %v4390 = vpop.permute.xlu0 %4389
    %4391 = vrot.lane.b32.xlu0 %v158, 36
    %v4392 = vpop.permute.xlu0 %4391
    %4393 = vrot.lane.b32.xlu0 %v163, 36
    %v4394 = vpop.permute.xlu0 %4393
    %4395 = vrot.lane.b32.xlu0 %v168, 36
    %v4396 = vpop.permute.xlu0 %4395
    %4397 = vrot.lane.b32.xlu0 %v173, 36
    %v4398 = vpop.permute.xlu0 %4397
    %4399 = vrot.lane.b32.xlu0 %v178, 36
    %v4400 = vpop.permute.xlu0 %4399
    %4401 = vrot.lane.b32.xlu0 %v183, 36
    %v4402 = vpop.permute.xlu0 %4401
    %v4412 = vsel %vm384, %v4379, 0
    %v4415 = vsel %vm384, %v4380, 0
    %v4418 = vsel %vm384, %v4381, 0
    %v4421 = vsel %vm384, %v4382, 0
    %v4424 = vsel %vm384, %v4383, 0
    %v4427 = vsel %vm384, %v4384, 0
    %v4430 = vsel %vm384, %v4385, 0
    %v4433 = vsel %vm384, %v4386, 0
    %4435 = vmatprep.subr.mxu0 0.0
    %4436 = vmatpush1.msra.mxu0 0.0
    %4437 = vmatprep.subr.mxu0 0.0
    %4438 = vmatpush1.msra.mxu0 0.0
    %4439 = vmatprep.subr.mxu0 0.0
    %4440 = vmatpush1.msra.mxu0 0.0
    %4441 = vmatprep.subr.mxu0 0.0
    %4442 = vmatpush1.msra.mxu0 0.0
    %4443 = vmatprep.subr.mxu0 0.0
    %4444 = vmatpush1.msra.mxu0 0.0
    %4445 = vmatprep.subr.mxu0 0.0
    %4446 = vmatpush1.msra.mxu0 0.0
    %4447 = vmatprep.subr.mxu0 0.0
    %4448 = vmatpush1.msra.mxu0 0.0
    %4449 = vmatprep.subr.mxu0 0.0
    %4450 = vmatpush1.msra.mxu0 0.0
    %4451 = vmatprep.subr.mxu0 0.0
    %4452 = vmatpush1.msra.mxu0 %v4402
    %4453 = vmatprep.subr.mxu0 0.0
    %4454 = vmatpush1.msra.mxu0 %v4400
    %4455 = vmatprep.subr.mxu0 0.0
    %4456 = vmatpush1.msra.mxu0 %v4398
    %4457 = vmatprep.subr.mxu0 0.0
    %4458 = vmatpush1.msra.mxu0 %v4396
    %4459 = vmatprep.subr.mxu0 0.0
    %4460 = vmatpush1.msra.mxu0 %v4394
    %4461 = vmatprep.subr.mxu0 0.0
    %4462 = vmatpush1.msra.mxu0 %v4392
    %4463 = vmatprep.subr.mxu0 0.0
    %4464 = vmatpush1.msra.mxu0 %v4390
    %4465 = vmatprep.subr.mxu0 0.0
    %4466 = vmatpush1.msra.mxu0 %v4388
    %4467 = vmatprep.subr.mxu0 0.0
    %4468 = vmatpush2.msra.mxu0 0.0
    %4469 = vmatprep.subr.mxu0 0.0
    %4470 = vmatpush2.msra.mxu0 0.0
    %4471 = vmatprep.subr.mxu0 0.0
    %4472 = vmatpush2.msra.mxu0 0.0
    %4473 = vmatprep.subr.mxu0 0.0
    %4474 = vmatpush2.msra.mxu0 0.0
    %4475 = vmatprep.subr.mxu0 0.0
    %4476 = vmatpush2.msra.mxu0 0.0
    %4477 = vmatprep.subr.mxu0 0.0
    %4478 = vmatpush2.msra.mxu0 0.0
    %4479 = vmatprep.subr.mxu0 0.0
    %4480 = vmatpush2.msra.mxu0 0.0
    %4481 = vmatprep.subr.mxu0 0.0
    %4482 = vmatpush2.msra.mxu0 0.0
    %4483 = vmatprep.subr.mxu0 0.0
    %4484 = vmatpush2.msra.mxu0 0.0
    %4485 = vmatprep.subr.mxu0 0.0
    %4486 = vmatpush2.msra.mxu0 0.0
    %4487 = vmatprep.subr.mxu0 0.0
    %4488 = vmatpush2.msra.mxu0 0.0
    %4489 = vmatprep.subr.mxu0 0.0
    %4490 = vmatpush2.msra.mxu0 0.0
    %4491 = vmatprep.subr.mxu0 0.0
    %4492 = vmatpush2.msra.mxu0 0.0
    %4493 = vmatprep.subr.mxu0 0.0
    %4494 = vmatpush2.msra.mxu0 0.0
    %4495 = vmatprep.subr.mxu0 0.0
    %4496 = vmatpush2.msra.mxu0 0.0
    %4497 = vmatprep.subr.mxu0 0.0
    %4498 = vmatpush2.msra.mxu0 0.0
    %4499 = vmatprep.mubr.f32.mxu0 0.0
    %4500 = vmatmul.mubr.f32.gmra.mxu0 %v4412
    %v4501 = vpop.f32.mrf.mxu0
    %v4502 = vadd.f32 0.0, %v4501
    %v4503 = vpop.f32.mrf.mxu0
    %4504 = vmatprep.mubr.f32.mxu0 0.0
    %4505 = vmatmul.mubr.f32.gmra.mxu0 %v4415
    %v4506 = vpop.f32.mrf.mxu0
    %v4507 = vadd.f32 0.0, %v4506
    %v4508 = vpop.f32.mrf.mxu0
    %4509 = vmatprep.mubr.f32.mxu0 0.0
    %4510 = vmatmul.mubr.f32.gmra.mxu0 %v4418
    %v4511 = vpop.f32.mrf.mxu0
    %v4512 = vadd.f32 0.0, %v4511
    %v4513 = vpop.f32.mrf.mxu0
    %4514 = vmatprep.mubr.f32.mxu0 0.0
    %4515 = vmatmul.mubr.f32.gmra.mxu0 %v4421
    %v4516 = vpop.f32.mrf.mxu0
    %v4517 = vadd.f32 0.0, %v4516
    %v4518 = vpop.f32.mrf.mxu0
    %4519 = vmatprep.mubr.f32.mxu0 0.0
    %4520 = vmatmul.mubr.f32.gmra.mxu0 %v4424
    %v4521 = vpop.f32.mrf.mxu0
    %v4522 = vadd.f32 0.0, %v4521
    %v4523 = vpop.f32.mrf.mxu0
    %4524 = vmatprep.mubr.f32.mxu0 0.0
    %4525 = vmatmul.mubr.f32.gmra.mxu0 %v4427
    %v4526 = vpop.f32.mrf.mxu0
    %v4527 = vadd.f32 0.0, %v4526
    %v4528 = vpop.f32.mrf.mxu0
    %4529 = vmatprep.mubr.f32.mxu0 0.0
    %4530 = vmatmul.mubr.f32.gmra.mxu0 %v4430
    %v4531 = vpop.f32.mrf.mxu0
    %v4532 = vadd.f32 0.0, %v4531
    %v4533 = vpop.f32.mrf.mxu0
    %4534 = vmatprep.mubr.f32.mxu0 0.0
    %4535 = vmatmul.mubr.f32.gmra.mxu0 %v4433
    %v4536 = vpop.f32.mrf.mxu0
    %v4537 = vadd.f32 0.0, %v4536
    %v4538 = vpop.f32.mrf.mxu0
    %4539 = vdwg.mxu0
    %v4540 = vrot.slane %v197, 4
    %v4542 = vsel %vm238, %v4502, 0
    %v4545 = vsel %vm238, %v4507, 0
    %v4548 = vsel %vm238, %v4512, 0
    %v4551 = vsel %vm238, %v4517, 0
    %v4554 = vsel %vm238, %v4522, 0
    %v4557 = vsel %vm238, %v4527, 0
    %v4560 = vsel %vm238, %v4532, 0
    %v4563 = vsel %vm238, %v4537, 0
    %v4565 = vsel %vm650, %v4540, 0
    %4567 = vmatprep.subr.mxu0 0.0
    %4568 = vmatpush1.msra.mxu0 0.0
    %4569 = vmatprep.subr.mxu0 0.0
    %4570 = vmatpush1.msra.mxu0 0.0
    %4571 = vmatprep.subr.mxu0 0.0
    %4572 = vmatpush1.msra.mxu0 0.0
    %4573 = vmatprep.subr.mxu0 0.0
    %4574 = vmatpush1.msra.mxu0 0.0
    %4575 = vmatprep.subr.mxu0 0.0
    %4576 = vmatpush1.msra.mxu0 0.0
    %4577 = vmatprep.subr.mxu0 0.0
    %4578 = vmatpush1.msra.mxu0 0.0
    %4579 = vmatprep.subr.mxu0 0.0
    %4580 = vmatpush1.msra.mxu0 0.0
    %4581 = vmatprep.subr.mxu0 0.0
    %4582 = vmatpush1.msra.mxu0 0.0
    %4583 = vmatprep.subr.mxu0 0.0
    %4584 = vmatpush1.msra.mxu0 0.0
    %4585 = vmatprep.subr.mxu0 0.0
    %4586 = vmatpush1.msra.mxu0 0.0
    %4587 = vmatprep.subr.mxu0 0.0
    %4588 = vmatpush1.msra.mxu0 0.0
    %4589 = vmatprep.subr.mxu0 0.0
    %4590 = vmatpush1.msra.mxu0 0.0
    %4591 = vmatprep.subr.mxu0 0.0
    %4592 = vmatpush1.msra.mxu0 0.0
    %4593 = vmatprep.subr.mxu0 0.0
    %4594 = vmatpush1.msra.mxu0 0.0
    %4595 = vmatprep.subr.mxu0 0.0
    %4596 = vmatpush1.msra.mxu0 0.0
    %4597 = vmatprep.subr.mxu0 0.0
    %4598 = vmatpush1.msra.mxu0 %v4565
    %4599 = vmatprep.subr.mxu0 0.0
    %4600 = vmatpush2.msra.mxu0 0.0
    %4601 = vmatprep.subr.mxu0 0.0
    %4602 = vmatpush2.msra.mxu0 0.0
    %4603 = vmatprep.subr.mxu0 0.0
    %4604 = vmatpush2.msra.mxu0 0.0
    %4605 = vmatprep.subr.mxu0 0.0
    %4606 = vmatpush2.msra.mxu0 0.0
    %4607 = vmatprep.subr.mxu0 0.0
    %4608 = vmatpush2.msra.mxu0 0.0
    %4609 = vmatprep.subr.mxu0 0.0
    %4610 = vmatpush2.msra.mxu0 0.0
    %4611 = vmatprep.subr.mxu0 0.0
    %4612 = vmatpush2.msra.mxu0 0.0
    %4613 = vmatprep.subr.mxu0 0.0
    %4614 = vmatpush2.msra.mxu0 0.0
    %4615 = vmatprep.subr.mxu0 0.0
    %4616 = vmatpush2.msra.mxu0 0.0
    %4617 = vmatprep.subr.mxu0 0.0
    %4618 = vmatpush2.msra.mxu0 0.0
    %4619 = vmatprep.subr.mxu0 0.0
    %4620 = vmatpush2.msra.mxu0 0.0
    %4621 = vmatprep.subr.mxu0 0.0
    %4622 = vmatpush2.msra.mxu0 0.0
    %4623 = vmatprep.subr.mxu0 0.0
    %4624 = vmatpush2.msra.mxu0 0.0
    %4625 = vmatprep.subr.mxu0 0.0
    %4626 = vmatpush2.msra.mxu0 0.0
    %4627 = vmatprep.subr.mxu0 0.0
    %4628 = vmatpush2.msra.mxu0 0.0
    %4629 = vmatprep.subr.mxu0 0.0
    %4630 = vmatpush2.msra.mxu0 0.0
    %4631 = vmatprep.mubr.f32.mxu0 0.0
    %4632 = vmatmul.mubr.f32.gmra.mxu0 %v4542
    %v4633 = vpop.f32.mrf.mxu0
    %v4634 = vadd.f32 0.0, %v4633
    %v4635 = vpop.f32.mrf.mxu0
    %4636 = vmatprep.mubr.f32.mxu0 0.0
    %4637 = vmatmul.mubr.f32.gmra.mxu0 %v4545
    %v4638 = vpop.f32.mrf.mxu0
    %v4639 = vadd.f32 0.0, %v4638
    %v4640 = vpop.f32.mrf.mxu0
    %4641 = vmatprep.mubr.f32.mxu0 0.0
    %4642 = vmatmul.mubr.f32.gmra.mxu0 %v4548
    %v4643 = vpop.f32.mrf.mxu0
    %v4644 = vadd.f32 0.0, %v4643
    %v4645 = vpop.f32.mrf.mxu0
    %4646 = vmatprep.mubr.f32.mxu0 0.0
    %4647 = vmatmul.mubr.f32.gmra.mxu0 %v4551
    %v4648 = vpop.f32.mrf.mxu0
    %v4649 = vadd.f32 0.0, %v4648
    %v4650 = vpop.f32.mrf.mxu0
    %4651 = vmatprep.mubr.f32.mxu0 0.0
    %4652 = vmatmul.mubr.f32.gmra.mxu0 %v4554
    %v4653 = vpop.f32.mrf.mxu0
    %v4654 = vadd.f32 0.0, %v4653
    %v4655 = vpop.f32.mrf.mxu0
    %4656 = vmatprep.mubr.f32.mxu0 0.0
    %4657 = vmatmul.mubr.f32.gmra.mxu0 %v4557
    %v4658 = vpop.f32.mrf.mxu0
    %v4659 = vadd.f32 0.0, %v4658
    %v4660 = vpop.f32.mrf.mxu0
    %4661 = vmatprep.mubr.f32.mxu0 0.0
    %4662 = vmatmul.mubr.f32.gmra.mxu0 %v4560
    %v4663 = vpop.f32.mrf.mxu0
    %v4664 = vadd.f32 0.0, %v4663
    %v4665 = vpop.f32.mrf.mxu0
    %4666 = vmatprep.mubr.f32.mxu0 0.0
    %4667 = vmatmul.mubr.f32.gmra.mxu0 %v4563
    %v4668 = vpop.f32.mrf.mxu0
    %v4669 = vadd.f32 0.0, %v4668
    %v4670 = vpop.f32.mrf.mxu0
    %4671 = vdwg.mxu0
    %v4672 = vadd.f32 %v4113, %v4634
    %v4673 = vadd.f32 %v4114, %v4639
    %v4674 = vadd.f32 %v4115, %v4644
    %v4675 = vadd.f32 %v4116, %v4649
    %v4676 = vadd.f32 %v4117, %v4654
    %v4677 = vadd.f32 %v4118, %v4659
    %v4678 = vadd.f32 %v4119, %v4664
    %v4679 = vadd.f32 %v4120, %v4669
    %4680 = vst.msk [vmem:[%s6] sm:$0xff] %vm56, %v4672
    %4681 = vst.msk [vmem:[%s6 + $0x8] sm:$0xff] %vm56, %v4673
    %4682 = vst.msk [vmem:[%s6 + $0x10] sm:$0xff] %vm56, %v4674
    %4683 = vst.msk [vmem:[%s6 + $0x18] sm:$0xff] %vm56, %v4675
    %4684 = vst.msk [vmem:[%s6 + $0x20] sm:$0xff] %vm56, %v4676
    %4685 = vst.msk [vmem:[%s6 + $0x28] sm:$0xff] %vm56, %v4677
    %4686 = vst.msk [vmem:[%s6 + $0x30] sm:$0xff] %vm56, %v4678
    %4687 = vst.msk [vmem:[%s6 + $0x38] sm:$0xff] %vm56, %v4679
    // Predicated region
    $region30: #{tpu_custom_call.1} parent=1 // pred_check
      _
    $region31: #{tpu_custom_call.1} parent=1 // pred_check_branch
      %4689 = sbr.rel (0) target = $region33
    $region32: #{tpu_custom_call.1} parent=1 // pred_region
      _
    $region33: #{tpu_custom_call.1} parent=1 // pred_fallthru
      _
    // Predicated region
    $region34: #{tpu_custom_call.1} parent=1 // pred_check
      _
    $region35: #{tpu_custom_call.1} parent=1 // pred_check_branch
      %4691 = sbr.rel (0) target = $region37
    $region36: #{tpu_custom_call.1} parent=1 // pred_region
      _
    $region37: #{tpu_custom_call.1} parent=1 // pred_fallthru
      _
    %4692 = vsyncpa [#allocation3], 1

</llo_original>
